<compile_context>
chip_gen: v6e
topology: v6e:2x2x1
jax: 0.10.0
libtpu: 0.0.40
codegen_flags: <defaults>
</compile_context>

<pallas_src>
import functools

import jax
import jax.numpy as jnp
from jax.experimental import pallas as pl
from jax.experimental.pallas import tpu as pltpu


# ----------------------------------------------------------------------------
# Pallas kernel: recurrences + attention + fc (everything hidden-dependent).
# ----------------------------------------------------------------------------
def _toy_embed_rnn_kernel(
    # precomputed activations
    sfa_ref,      # (T, Bp, Lp)  sf@W_attn_x + b_attn  (-1e30 in padded L cols)
    sfc_ref,      # (T, Bp, Hp)  sf@W_comb_x + b_comb
    lf_xg_ref,    # (L, Bp, 3Hp) lf@W_ih_lf + fused input biases
    lf_mask_ref,  # (L, Bp, 1)   1.0 where t < lf_len[b]
    # weights (pre-transposed / fused / zero-padded in the wrapper)
    lf_whh_ref,   # (Hp, 3Hp)
    lf_bhn_ref,   # (1, Hp)
    sf_wih_ref,   # (Hp, 3Hp)
    sf_bi_ref,    # (1, 3Hp)
    sf_whh_ref,   # (Hp, 3Hp)
    sf_bhn_ref,   # (1, Hp)
    wattn_h_ref,  # (Hp, Lp)
    wcomb_a_ref,  # (Hp, Hp)
    wfc_ref,      # (Hp, Op)
    bfc_ref,      # (1, Op)      (-1e30 in padded O cols)
    # outputs
    prob_ref,     # (Bp, Op)     log_softmax
    attnw_ref,    # (T, Bp, Lp)
    # scratch
    lf_scr,       # VMEM (L, Bp, Hp): masked lf-GRU outputs
):
    f32 = jnp.float32
    T, Bp, Lp = sfa_ref.shape
    Hp = sfc_ref.shape[2]
    L = lf_xg_ref.shape[0]

    # ---- hoisted weight loads / bias broadcasts (outside the unrolled loops)
    lf_whh = lf_whh_ref[...]
    sf_wih = sf_wih_ref[...]
    sf_whh = sf_whh_ref[...]
    wattn_h = wattn_h_ref[...]
    wcomb_a = wcomb_a_ref[...]
    lf_bhn = jnp.broadcast_to(lf_bhn_ref[...], (Bp, Hp))
    sf_bhn = jnp.broadcast_to(sf_bhn_ref[...], (Bp, Hp))
    sf_bi = jnp.broadcast_to(sf_bi_ref[...], (Bp, 3 * Hp))

    def gru_update(xg, hg, h, bhn):
        # xg already holds W_ih x + (b_ir+b_hr | b_iz+b_hz | b_in); hg = W_hh h.
        #   r = sig(xg_r + hg_r); z = sig(xg_z + hg_z)
        #   n = tanh(xg_n + r*(hg_n + b_hn)); h' = (1-z)*n + z*h
        r = jax.nn.sigmoid(xg[:, :Hp] + hg[:, :Hp])
        z = jax.nn.sigmoid(xg[:, Hp:2 * Hp] + hg[:, Hp:2 * Hp])
        n = jnp.tanh(xg[:, 2 * Hp:] + r * (hg[:, 2 * Hp:] + bhn))
        return (1.0 - z) * n + z * h

    # ---- rnn_lf over the padded LF sequence (mask == pack/pad_packed) ------
    h_lf = jnp.zeros((Bp, Hp), f32)
    for t in range(L):
        hg = jnp.dot(h_lf, lf_whh, preferred_element_type=f32)
        h_lf = gru_update(lf_xg_ref[t], hg, h_lf, lf_bhn)
        lf_scr[t] = h_lf * lf_mask_ref[t]        # zero past lf_len (padding)

    # Project every lf output through W_comb_a once:
    #   attn_applied @ W_comb_a == sum_l attn_w[:, l] * (lf_out[l] @ W_comb_a)
    lf_all = lf_scr[...]                                         # (L, Bp, Hp)
    lfp = jnp.dot(lf_all.reshape(L * Bp, Hp), wcomb_a,
                  preferred_element_type=f32).reshape(L, Bp, Hp)

    # ---- attention + rnn_sf over SF timesteps -------------------------------
    hidden = jnp.zeros((Bp, Hp), f32)
    for t in range(T):
        # attn(cat([sf, hidden])): sf-part precomputed, only hidden@W in-loop.
        logits = sfa_ref[t] + jnp.dot(hidden, wattn_h,
                                      preferred_element_type=f32)  # (Bp, Lp)
        m = jnp.max(logits, axis=1, keepdims=True)
        e = jnp.exp(logits - m)
        # Exact divide: attn weights are a user-visible output (padded L cols
        # have logit -1e30, hence exactly zero attention mass).
        attn_w = e / jnp.sum(e, axis=1, keepdims=True)
        attnw_ref[t] = attn_w                                     # lane-dense

        # bmm(attn_w[B,1,L], lf_output[B,L,H]) @ W_comb_a as one broadcast
        # multiply + reduction over the leading L axis (no per-lane extracts).
        awt = jnp.transpose(attn_w[:, :L])                        # (L, Bp)
        ap = jnp.sum(awt[:, :, None] * lfp, axis=0)               # (Bp, Hp)

        # attn_combine(cat([sf, attn_applied])) + relu (sf-part precomputed)
        comb = jnp.maximum(sfc_ref[t] + ap, 0.0)

        # one rnn_sf GRU step with fused gates: 2 matmuls per step
        xg = jnp.dot(comb, sf_wih, preferred_element_type=f32) + sf_bi
        hg = jnp.dot(hidden, sf_whh, preferred_element_type=f32)
        hidden = gru_update(xg, hg, hidden, sf_bhn)

    # fc + log_softmax on the last rnn_sf output (== final hidden)
    fl = jnp.dot(hidden, wfc_ref[...], preferred_element_type=f32) + bfc_ref[...]
    m2 = jnp.max(fl, axis=1, keepdims=True)
    lse = jnp.log(jnp.sum(jnp.exp(fl - m2), axis=1, keepdims=True)) + m2
    prob_ref[...] = fl - lse


# ----------------------------------------------------------------------------
# Parameter init (deterministic, PyTorch-shaped) and plain-JAX glue.
# ----------------------------------------------------------------------------
def init_params(key, input_size, hidden_size, output_size, max_length):
    H = hidden_size
    k = 1.0 / jnp.sqrt(jnp.float32(H))
    keys = jax.random.split(key, 16)

    def uni(kk, shape):
        return jax.random.uniform(kk, shape, jnp.float32, -k, k)

    return dict(
        embed=jax.random.normal(keys[0], (input_size, H), jnp.float32),
        lf_w_ih=uni(keys[1], (3 * H, H)), lf_w_hh=uni(keys[2], (3 * H, H)),
        lf_b_ih=uni(keys[3], (3 * H,)),   lf_b_hh=uni(keys[4], (3 * H,)),
        sf_w_ih=uni(keys[5], (3 * H, H)), sf_w_hh=uni(keys[6], (3 * H, H)),
        sf_b_ih=uni(keys[7], (3 * H,)),   sf_b_hh=uni(keys[8], (3 * H,)),
        attn_w=uni(keys[9], (max_length, 2 * H)), attn_b=uni(keys[10], (max_length,)),
        comb_w=uni(keys[11], (H, 2 * H)),         comb_b=uni(keys[12], (H,)),
        fc_w=uni(keys[13], (output_size, H)),     fc_b=uni(keys[14], (output_size,)),
    )


def _round_up(n, m):
    return ((n + m - 1) // m) * m


def _pad_to(x, shape, fill=0.0):
    pads = [(0, t - s) for s, t in zip(x.shape, shape)]
    return jnp.pad(x, pads, constant_values=fill)


def _fuse_gates(w, H, Hp):
    """(3H, H) PyTorch gate-stacked weight -> (Hp, 3*Hp) [Wr.T | Wz.T | Wn.T]."""
    out = jnp.zeros((Hp, 3 * Hp), jnp.float32)
    for g in range(3):
        out = out.at[:H, g * Hp:g * Hp + H].set(w[g * H:(g + 1) * H, :].T)
    return out


def _fuse_input_bias(b_ih, b_hh, H, Hp):
    """Fused x-side bias: (b_ir+b_hr | b_iz+b_hz | b_in), zero-padded, (1,3Hp)."""
    out = jnp.zeros((1, 3 * Hp), jnp.float32)
    out = out.at[0, 0 * Hp:0 * Hp + H].set(b_ih[:H] + b_hh[:H])
    out = out.at[0, 1 * Hp:1 * Hp + H].set(b_ih[H:2 * H] + b_hh[H:2 * H])
    out = out.at[0, 2 * Hp:2 * Hp + H].set(b_ih[2 * H:])
    return out


@functools.partial(jax.jit, static_argnames=("max_length",))
def toy_embed_rnn_sequence(params, sfs, lfs, sf_lens, lf_lens, max_length):
    """sfs: (T_sf, B) int32, lfs: (max_length, B) int32, lf_lens: (B,) int32."""
    del sf_lens  # unused in the PyTorch forward as well
    H = params["embed"].shape[1]
    O = params["fc_w"].shape[0]
    T, B = sfs.shape
    L = max_length

    # TPU tile padding: batch -> 8 sublanes, lane dims -> 128 lanes.
    Bp = _round_up(B, 8)
    Hp = _round_up(H, 128)
    Lp = _round_up(L, 128)
    Op = _round_up(O, 128)
    NEG = -1e30

    # --- glue: embedding lookup + padding ------------------------------------
    emb = params["embed"].astype(jnp.float32)
    sf_emb = _pad_to(jnp.take(emb, sfs, axis=0), (T, Bp, Hp))    # (T,Bp,Hp)
    lf_emb = _pad_to(jnp.take(emb, lfs, axis=0), (L, Bp, Hp))    # (L,Bp,Hp)

    lf_mask = (jnp.arange(L)[:, None] < lf_lens[None, :]).astype(jnp.float32)
    lf_mask = _pad_to(lf_mask, (L, Bp))[:, :, None]              # (L,Bp,1)

    # --- weight re-packing (fused gates, transposed, tile-padded) ------------
    lf_wih = _fuse_gates(params["lf_w_ih"], H, Hp)               # (Hp,3Hp)
    lf_whh = _fuse_gates(params["lf_w_hh"], H, Hp)
    sf_wih = _fuse_gates(params["sf_w_ih"], H, Hp)
    sf_whh = _fuse_gates(params["sf_w_hh"], H, Hp)
    lf_bi = _fuse_input_bias(params["lf_b_ih"], params["lf_b_hh"], H, Hp)
    sf_bi = _fuse_input_bias(params["sf_b_ih"], params["sf_b_hh"], H, Hp)
    lf_bhn = _pad_to(params["lf_b_hh"][2 * H:].reshape(1, H), (1, Hp))
    sf_bhn = _pad_to(params["sf_b_hh"][2 * H:].reshape(1, H), (1, Hp))

    attn_w = params["attn_w"]                                    # (L, 2H)
    wattn_x = _pad_to(attn_w[:, :H].T, (Hp, Lp))
    wattn_h = _pad_to(attn_w[:, H:].T, (Hp, Lp))
    battn = jnp.full((1, Lp), NEG, jnp.float32).at[0, :L].set(params["attn_b"])

    comb_w = params["comb_w"]                                    # (H, 2H)
    wcomb_x = _pad_to(comb_w[:, :H].T, (Hp, Hp))
    wcomb_a = _pad_to(comb_w[:, H:].T, (Hp, Hp))
    bcomb = _pad_to(params["comb_b"].reshape(1, H), (1, Hp))

    wfc = _pad_to(params["fc_w"].T, (Hp, Op))
    bfc = jnp.full((1, Op), NEG, jnp.float32).at[0, :O].set(params["fc_b"])

    # --- hoist all input-side (hidden-independent) projections to XLA --------
    sf2d = sf_emb.reshape(T * Bp, Hp)
    sfa = (sf2d @ wattn_x + battn).reshape(T, Bp, Lp)            # attn x-part
    sfc = (sf2d @ wcomb_x + bcomb).reshape(T, Bp, Hp)            # combine x-part
    lf2d = lf_emb.reshape(L * Bp, Hp)
    lf_xg = (lf2d @ lf_wih + lf_bi).reshape(L, Bp, 3 * Hp)       # lf GRU x-gates

    args = [sfa, sfc, lf_xg, lf_mask,
            lf_whh, lf_bhn, sf_wih, sf_bi, sf_whh, sf_bhn,
            wattn_h, wcomb_a, wfc, bfc]

    vmem = pl.BlockSpec(memory_space=pltpu.MemorySpace.VMEM)
    prob_p, attnw_p = pl.pallas_call(
        _toy_embed_rnn_kernel,
        out_shape=(jax.ShapeDtypeStruct((Bp, Op), jnp.float32),
                   jax.ShapeDtypeStruct((T, Bp, Lp), jnp.float32)),
        in_specs=[vmem] * len(args),
        out_specs=(vmem, vmem),
        scratch_shapes=[pltpu.VMEM((L, Bp, Hp), jnp.float32)],
    )(*args)

    # slice padding back off
    return prob_p[:B, :O], attnw_p[:, :B, :L]


# ----------------------------------------------------------------------------
if __name__ == "__main__":
    input_size = 50     # vocab size
    hidden_size = 32
    output_size = 5
    max_length = 8
    T_sf, B = 6, 2

    key = jax.random.PRNGKey(0)
    params = init_params(key, input_size, hidden_size, output_size, max_length)

    kd = jax.random.fold_in(key, 123)
    k1, k2 = jax.random.split(kd)
    sfs = jax.random.randint(k1, (T_sf, B), 0, input_size, dtype=jnp.int32)
    lfs = jax.random.randint(k2, (max_length, B), 0, input_size, dtype=jnp.int32)
    sf_lens = jnp.array([T_sf, T_sf - 2], dtype=jnp.int32)   # unused (as in PyTorch)
    lf_lens = jnp.array([max_length, 5], dtype=jnp.int32)

    prob, attn_w = toy_embed_rnn_sequence(params, sfs, lfs, sf_lens, lf_lens,
                                          max_length)
    jax.block_until_ready((prob, attn_w))

    assert prob.shape == (B, output_size)
    assert attn_w.shape == (T_sf, B, max_length)
    # log_softmax rows must sum to ~1 in prob-space; attn rows must sum to ~1.
    assert jnp.allclose(jnp.sum(jnp.exp(prob), axis=1), 1.0, atol=1e-4)
    assert jnp.allclose(jnp.sum(attn_w, axis=-1), 1.0, atol=1e-4)
    print("KERNEL_OK")
</pallas_src>

<mosaic_0001>
module attributes {stable_mosaic.version = 11 : i64} {
  func.func @_toy_embed_rnn_kernel(%arg0: memref<6x8x128xf32, #tpu.memory_space<vmem>>, %arg1: memref<6x8x128xf32, #tpu.memory_space<vmem>>, %arg2: memref<8x8x384xf32, #tpu.memory_space<vmem>>, %arg3: memref<8x8x1xf32, #tpu.memory_space<vmem>>, %arg4: memref<128x384xf32, #tpu.memory_space<vmem>>, %arg5: memref<1x128xf32, #tpu.memory_space<vmem>>, %arg6: memref<128x384xf32, #tpu.memory_space<vmem>>, %arg7: memref<1x384xf32, #tpu.memory_space<vmem>>, %arg8: memref<128x384xf32, #tpu.memory_space<vmem>>, %arg9: memref<1x128xf32, #tpu.memory_space<vmem>>, %arg10: memref<128x128xf32, #tpu.memory_space<vmem>>, %arg11: memref<128x128xf32, #tpu.memory_space<vmem>>, %arg12: memref<128x128xf32, #tpu.memory_space<vmem>>, %arg13: memref<1x128xf32, #tpu.memory_space<vmem>>, %arg14: memref<8x128xf32, #tpu.memory_space<vmem>>, %arg15: memref<6x8x128xf32, #tpu.memory_space<vmem>>, %arg16: memref<8x8x128xf32, #tpu.memory_space<vmem>>) attributes {dimension_semantics = [], scalar_prefetch = 0 : i64, scratch_operands = 1 : i64, tpu.core_type = #tpu.core_type<tc>} {
    %c0 = arith.constant 0 : index
    %c0_0 = arith.constant 0 : index
    %0 = vector.load %arg4[%c0, %c0_0] : memref<128x384xf32, #tpu.memory_space<vmem>>, vector<128x384xf32>
    %c0_1 = arith.constant 0 : index
    %c0_2 = arith.constant 0 : index
    %1 = vector.load %arg6[%c0_1, %c0_2] : memref<128x384xf32, #tpu.memory_space<vmem>>, vector<128x384xf32>
    %c0_3 = arith.constant 0 : index
    %c0_4 = arith.constant 0 : index
    %2 = vector.load %arg8[%c0_3, %c0_4] : memref<128x384xf32, #tpu.memory_space<vmem>>, vector<128x384xf32>
    %c0_5 = arith.constant 0 : index
    %c0_6 = arith.constant 0 : index
    %3 = vector.load %arg10[%c0_5, %c0_6] : memref<128x128xf32, #tpu.memory_space<vmem>>, vector<128x128xf32>
    %c0_7 = arith.constant 0 : index
    %c0_8 = arith.constant 0 : index
    %4 = vector.load %arg11[%c0_7, %c0_8] : memref<128x128xf32, #tpu.memory_space<vmem>>, vector<128x128xf32>
    %c0_9 = arith.constant 0 : index
    %c0_10 = arith.constant 0 : index
    %5 = vector.load %arg5[%c0_9, %c0_10] : memref<1x128xf32, #tpu.memory_space<vmem>>, vector<1x128xf32>
    %6 = vector.shape_cast %5 : vector<1x128xf32> to vector<1x128xf32>
    %7 = vector.broadcast %6 : vector<1x128xf32> to vector<8x128xf32>
    %c0_11 = arith.constant 0 : index
    %c0_12 = arith.constant 0 : index
    %8 = vector.load %arg9[%c0_11, %c0_12] : memref<1x128xf32, #tpu.memory_space<vmem>>, vector<1x128xf32>
    %9 = vector.shape_cast %8 : vector<1x128xf32> to vector<1x128xf32>
    %10 = vector.broadcast %9 : vector<1x128xf32> to vector<8x128xf32>
    %c0_13 = arith.constant 0 : index
    %c0_14 = arith.constant 0 : index
    %11 = vector.load %arg7[%c0_13, %c0_14] : memref<1x384xf32, #tpu.memory_space<vmem>>, vector<1x384xf32>
    %12 = vector.shape_cast %11 : vector<1x384xf32> to vector<1x384xf32>
    %13 = vector.broadcast %12 : vector<1x384xf32> to vector<8x384xf32>
    %cst = arith.constant 0.000000e+00 : f32
    %14 = vector.broadcast %cst : f32 to vector<8x128xf32>
    %cst_15 = arith.constant dense<0.000000e+00> : vector<8x384xf32>
    %15 = tpu.matmul %14, %0, %cst_15 {dimension_numbers = #tpu.dot_dimension_numbers<[1], [0], [0], [1], [0, 0, 1, 1], [], []>} : vector<8x128xf32>, vector<128x384xf32>, vector<8x384xf32> -> vector<8x384xf32>
    %c0_16 = arith.constant 0 : index
    %c0_17 = arith.constant 0 : index
    %c0_18 = arith.constant 0 : index
    %16 = vector.load %arg2[%c0_16, %c0_17, %c0_18] : memref<8x8x384xf32, #tpu.memory_space<vmem>>, vector<1x8x384xf32>
    %17 = vector.shape_cast %16 : vector<1x8x384xf32> to vector<8x384xf32>
    %18 = vector.extract_strided_slice %17 {offsets = [0, 0], sizes = [8, 128], strides = [1, 1]} : vector<8x384xf32> to vector<8x128xf32>
    %19 = vector.extract_strided_slice %15 {offsets = [0, 0], sizes = [8, 128], strides = [1, 1]} : vector<8x384xf32> to vector<8x128xf32>
    %20 = arith.addf %18, %19 : vector<8x128xf32>
    %21 = arith.negf %20 : vector<8x128xf32>
    %22 = math.exp %21 : vector<8x128xf32>
    %cst_19 = arith.constant 1.000000e+00 : f32
    %23 = vector.broadcast %cst_19 : f32 to vector<8x128xf32>
    %24 = arith.addf %23, %22 : vector<8x128xf32>
    %25 = arith.divf %23, %24 : vector<8x128xf32>
    %26 = vector.extract_strided_slice %17 {offsets = [0, 128], sizes = [8, 128], strides = [1, 1]} : vector<8x384xf32> to vector<8x128xf32>
    %27 = vector.extract_strided_slice %15 {offsets = [0, 128], sizes = [8, 128], strides = [1, 1]} : vector<8x384xf32> to vector<8x128xf32>
    %28 = arith.addf %26, %27 : vector<8x128xf32>
    %29 = arith.negf %28 : vector<8x128xf32>
    %30 = math.exp %29 : vector<8x128xf32>
    %cst_20 = arith.constant 1.000000e+00 : f32
    %31 = vector.broadcast %cst_20 : f32 to vector<8x128xf32>
    %32 = arith.addf %31, %30 : vector<8x128xf32>
    %33 = arith.divf %31, %32 : vector<8x128xf32>
    %34 = vector.extract_strided_slice %17 {offsets = [0, 256], sizes = [8, 128], strides = [1, 1]} : vector<8x384xf32> to vector<8x128xf32>
    %35 = vector.extract_strided_slice %15 {offsets = [0, 256], sizes = [8, 128], strides = [1, 1]} : vector<8x384xf32> to vector<8x128xf32>
    %36 = arith.addf %35, %7 : vector<8x128xf32>
    %37 = arith.mulf %25, %36 : vector<8x128xf32>
    %38 = arith.addf %34, %37 : vector<8x128xf32>
    %39 = math.tanh %38 : vector<8x128xf32>
    %cst_21 = arith.constant 1.000000e+00 : f32
    %40 = vector.broadcast %cst_21 : f32 to vector<8x128xf32>
    %41 = arith.subf %40, %33 : vector<8x128xf32>
    %42 = arith.mulf %41, %39 : vector<8x128xf32>
    %43 = arith.mulf %33, %14 : vector<8x128xf32>
    %44 = arith.addf %42, %43 : vector<8x128xf32>
    %c0_22 = arith.constant 0 : index
    %c0_23 = arith.constant 0 : index
    %c0_24 = arith.constant 0 : index
    %45 = vector.load %arg3[%c0_22, %c0_23, %c0_24] : memref<8x8x1xf32, #tpu.memory_space<vmem>>, vector<1x8x1xf32>
    %46 = vector.shape_cast %45 : vector<1x8x1xf32> to vector<8x1xf32>
    %47 = vector.broadcast %46 : vector<8x1xf32> to vector<8x128xf32>
    %48 = arith.mulf %44, %47 : vector<8x128xf32>
    %c0_25 = arith.constant 0 : index
    %c0_26 = arith.constant 0 : index
    %c0_27 = arith.constant 0 : index
    %49 = vector.load %arg16[%c0_25, %c0_26, %c0_27] : memref<8x8x128xf32, #tpu.memory_space<vmem>>, vector<1x8x128xf32>
    %50 = vector.shape_cast %49 : vector<1x8x128xf32> to vector<8x128xf32>
    %51 = vector.shape_cast %48 : vector<8x128xf32> to vector<1x8x128xf32>
    tpu.vector_store %arg16[%c0_25, %c0_26, %c0_27], %51 {strides = array<i32>} : memref<8x8x128xf32, #tpu.memory_space<vmem>>, vector<1x8x128xf32>,
    %cst_28 = arith.constant dense<0.000000e+00> : vector<8x384xf32>
    %52 = tpu.matmul %44, %0, %cst_28 {dimension_numbers = #tpu.dot_dimension_numbers<[1], [0], [0], [1], [0, 0, 1, 1], [], []>} : vector<8x128xf32>, vector<128x384xf32>, vector<8x384xf32> -> vector<8x384xf32>
    %c1 = arith.constant 1 : index
    %c0_29 = arith.constant 0 : index
    %c0_30 = arith.constant 0 : index
    %53 = vector.load %arg2[%c1, %c0_29, %c0_30] : memref<8x8x384xf32, #tpu.memory_space<vmem>>, vector<1x8x384xf32>
    %54 = vector.shape_cast %53 : vector<1x8x384xf32> to vector<8x384xf32>
    %55 = vector.extract_strided_slice %54 {offsets = [0, 0], sizes = [8, 128], strides = [1, 1]} : vector<8x384xf32> to vector<8x128xf32>
    %56 = vector.extract_strided_slice %52 {offsets = [0, 0], sizes = [8, 128], strides = [1, 1]} : vector<8x384xf32> to vector<8x128xf32>
    %57 = arith.addf %55, %56 : vector<8x128xf32>
    %58 = arith.negf %57 : vector<8x128xf32>
    %59 = math.exp %58 : vector<8x128xf32>
    %cst_31 = arith.constant 1.000000e+00 : f32
    %60 = vector.broadcast %cst_31 : f32 to vector<8x128xf32>
    %61 = arith.addf %60, %59 : vector<8x128xf32>
    %62 = arith.divf %60, %61 : vector<8x128xf32>
    %63 = vector.extract_strided_slice %54 {offsets = [0, 128], sizes = [8, 128], strides = [1, 1]} : vector<8x384xf32> to vector<8x128xf32>
    %64 = vector.extract_strided_slice %52 {offsets = [0, 128], sizes = [8, 128], strides = [1, 1]} : vector<8x384xf32> to vector<8x128xf32>
    %65 = arith.addf %63, %64 : vector<8x128xf32>
    %66 = arith.negf %65 : vector<8x128xf32>
    %67 = math.exp %66 : vector<8x128xf32>
    %cst_32 = arith.constant 1.000000e+00 : f32
    %68 = vector.broadcast %cst_32 : f32 to vector<8x128xf32>
    %69 = arith.addf %68, %67 : vector<8x128xf32>
    %70 = arith.divf %68, %69 : vector<8x128xf32>
    %71 = vector.extract_strided_slice %54 {offsets = [0, 256], sizes = [8, 128], strides = [1, 1]} : vector<8x384xf32> to vector<8x128xf32>
    %72 = vector.extract_strided_slice %52 {offsets = [0, 256], sizes = [8, 128], strides = [1, 1]} : vector<8x384xf32> to vector<8x128xf32>
    %73 = arith.addf %72, %7 : vector<8x128xf32>
    %74 = arith.mulf %62, %73 : vector<8x128xf32>
    %75 = arith.addf %71, %74 : vector<8x128xf32>
    %76 = math.tanh %75 : vector<8x128xf32>
    %cst_33 = arith.constant 1.000000e+00 : f32
    %77 = vector.broadcast %cst_33 : f32 to vector<8x128xf32>
    %78 = arith.subf %77, %70 : vector<8x128xf32>
    %79 = arith.mulf %78, %76 : vector<8x128xf32>
    %80 = arith.mulf %70, %44 : vector<8x128xf32>
    %81 = arith.addf %79, %80 : vector<8x128xf32>
    %c1_34 = arith.constant 1 : index
    %c0_35 = arith.constant 0 : index
    %c0_36 = arith.constant 0 : index
    %82 = vector.load %arg3[%c1_34, %c0_35, %c0_36] : memref<8x8x1xf32, #tpu.memory_space<vmem>>, vector<1x8x1xf32>
    %83 = vector.shape_cast %82 : vector<1x8x1xf32> to vector<8x1xf32>
    %84 = vector.broadcast %83 : vector<8x1xf32> to vector<8x128xf32>
    %85 = arith.mulf %81, %84 : vector<8x128xf32>
    %c1_37 = arith.constant 1 : index
    %c0_38 = arith.constant 0 : index
    %c0_39 = arith.constant 0 : index
    %86 = vector.load %arg16[%c1_37, %c0_38, %c0_39] : memref<8x8x128xf32, #tpu.memory_space<vmem>>, vector<1x8x128xf32>
    %87 = vector.shape_cast %86 : vector<1x8x128xf32> to vector<8x128xf32>
    %88 = vector.shape_cast %85 : vector<8x128xf32> to vector<1x8x128xf32>
    tpu.vector_store %arg16[%c1_37, %c0_38, %c0_39], %88 {strides = array<i32>} : memref<8x8x128xf32, #tpu.memory_space<vmem>>, vector<1x8x128xf32>,
    %cst_40 = arith.constant dense<0.000000e+00> : vector<8x384xf32>
    %89 = tpu.matmul %81, %0, %cst_40 {dimension_numbers = #tpu.dot_dimension_numbers<[1], [0], [0], [1], [0, 0, 1, 1], [], []>} : vector<8x128xf32>, vector<128x384xf32>, vector<8x384xf32> -> vector<8x384xf32>
    %c2 = arith.constant 2 : index
    %c0_41 = arith.constant 0 : index
    %c0_42 = arith.constant 0 : index
    %90 = vector.load %arg2[%c2, %c0_41, %c0_42] : memref<8x8x384xf32, #tpu.memory_space<vmem>>, vector<1x8x384xf32>
    %91 = vector.shape_cast %90 : vector<1x8x384xf32> to vector<8x384xf32>
    %92 = vector.extract_strided_slice %91 {offsets = [0, 0], sizes = [8, 128], strides = [1, 1]} : vector<8x384xf32> to vector<8x128xf32>
    %93 = vector.extract_strided_slice %89 {offsets = [0, 0], sizes = [8, 128], strides = [1, 1]} : vector<8x384xf32> to vector<8x128xf32>
    %94 = arith.addf %92, %93 : vector<8x128xf32>
    %95 = arith.negf %94 : vector<8x128xf32>
    %96 = math.exp %95 : vector<8x128xf32>
    %cst_43 = arith.constant 1.000000e+00 : f32
    %97 = vector.broadcast %cst_43 : f32 to vector<8x128xf32>
    %98 = arith.addf %97, %96 : vector<8x128xf32>
    %99 = arith.divf %97, %98 : vector<8x128xf32>
    %100 = vector.extract_strided_slice %91 {offsets = [0, 128], sizes = [8, 128], strides = [1, 1]} : vector<8x384xf32> to vector<8x128xf32>
    %101 = vector.extract_strided_slice %89 {offsets = [0, 128], sizes = [8, 128], strides = [1, 1]} : vector<8x384xf32> to vector<8x128xf32>
    %102 = arith.addf %100, %101 : vector<8x128xf32>
    %103 = arith.negf %102 : vector<8x128xf32>
    %104 = math.exp %103 : vector<8x128xf32>
    %cst_44 = arith.constant 1.000000e+00 : f32
    %105 = vector.broadcast %cst_44 : f32 to vector<8x128xf32>
    %106 = arith.addf %105, %104 : vector<8x128xf32>
    %107 = arith.divf %105, %106 : vector<8x128xf32>
    %108 = vector.extract_strided_slice %91 {offsets = [0, 256], sizes = [8, 128], strides = [1, 1]} : vector<8x384xf32> to vector<8x128xf32>
    %109 = vector.extract_strided_slice %89 {offsets = [0, 256], sizes = [8, 128], strides = [1, 1]} : vector<8x384xf32> to vector<8x128xf32>
    %110 = arith.addf %109, %7 : vector<8x128xf32>
    %111 = arith.mulf %99, %110 : vector<8x128xf32>
    %112 = arith.addf %108, %111 : vector<8x128xf32>
    %113 = math.tanh %112 : vector<8x128xf32>
    %cst_45 = arith.constant 1.000000e+00 : f32
    %114 = vector.broadcast %cst_45 : f32 to vector<8x128xf32>
    %115 = arith.subf %114, %107 : vector<8x128xf32>
    %116 = arith.mulf %115, %113 : vector<8x128xf32>
    %117 = arith.mulf %107, %81 : vector<8x128xf32>
    %118 = arith.addf %116, %117 : vector<8x128xf32>
    %c2_46 = arith.constant 2 : index
    %c0_47 = arith.constant 0 : index
    %c0_48 = arith.constant 0 : index
    %119 = vector.load %arg3[%c2_46, %c0_47, %c0_48] : memref<8x8x1xf32, #tpu.memory_space<vmem>>, vector<1x8x1xf32>
    %120 = vector.shape_cast %119 : vector<1x8x1xf32> to vector<8x1xf32>
    %121 = vector.broadcast %120 : vector<8x1xf32> to vector<8x128xf32>
    %122 = arith.mulf %118, %121 : vector<8x128xf32>
    %c2_49 = arith.constant 2 : index
    %c0_50 = arith.constant 0 : index
    %c0_51 = arith.constant 0 : index
    %123 = vector.load %arg16[%c2_49, %c0_50, %c0_51] : memref<8x8x128xf32, #tpu.memory_space<vmem>>, vector<1x8x128xf32>
    %124 = vector.shape_cast %123 : vector<1x8x128xf32> to vector<8x128xf32>
    %125 = vector.shape_cast %122 : vector<8x128xf32> to vector<1x8x128xf32>
    tpu.vector_store %arg16[%c2_49, %c0_50, %c0_51], %125 {strides = array<i32>} : memref<8x8x128xf32, #tpu.memory_space<vmem>>, vector<1x8x128xf32>,
    %cst_52 = arith.constant dense<0.000000e+00> : vector<8x384xf32>
    %126 = tpu.matmul %118, %0, %cst_52 {dimension_numbers = #tpu.dot_dimension_numbers<[1], [0], [0], [1], [0, 0, 1, 1], [], []>} : vector<8x128xf32>, vector<128x384xf32>, vector<8x384xf32> -> vector<8x384xf32>
    %c3 = arith.constant 3 : index
    %c0_53 = arith.constant 0 : index
    %c0_54 = arith.constant 0 : index
    %127 = vector.load %arg2[%c3, %c0_53, %c0_54] : memref<8x8x384xf32, #tpu.memory_space<vmem>>, vector<1x8x384xf32>
    %128 = vector.shape_cast %127 : vector<1x8x384xf32> to vector<8x384xf32>
    %129 = vector.extract_strided_slice %128 {offsets = [0, 0], sizes = [8, 128], strides = [1, 1]} : vector<8x384xf32> to vector<8x128xf32>
    %130 = vector.extract_strided_slice %126 {offsets = [0, 0], sizes = [8, 128], strides = [1, 1]} : vector<8x384xf32> to vector<8x128xf32>
    %131 = arith.addf %129, %130 : vector<8x128xf32>
    %132 = arith.negf %131 : vector<8x128xf32>
    %133 = math.exp %132 : vector<8x128xf32>
    %cst_55 = arith.constant 1.000000e+00 : f32
    %134 = vector.broadcast %cst_55 : f32 to vector<8x128xf32>
    %135 = arith.addf %134, %133 : vector<8x128xf32>
    %136 = arith.divf %134, %135 : vector<8x128xf32>
    %137 = vector.extract_strided_slice %128 {offsets = [0, 128], sizes = [8, 128], strides = [1, 1]} : vector<8x384xf32> to vector<8x128xf32>
    %138 = vector.extract_strided_slice %126 {offsets = [0, 128], sizes = [8, 128], strides = [1, 1]} : vector<8x384xf32> to vector<8x128xf32>
    %139 = arith.addf %137, %138 : vector<8x128xf32>
    %140 = arith.negf %139 : vector<8x128xf32>
    %141 = math.exp %140 : vector<8x128xf32>
    %cst_56 = arith.constant 1.000000e+00 : f32
    %142 = vector.broadcast %cst_56 : f32 to vector<8x128xf32>
    %143 = arith.addf %142, %141 : vector<8x128xf32>
    %144 = arith.divf %142, %143 : vector<8x128xf32>
    %145 = vector.extract_strided_slice %128 {offsets = [0, 256], sizes = [8, 128], strides = [1, 1]} : vector<8x384xf32> to vector<8x128xf32>
    %146 = vector.extract_strided_slice %126 {offsets = [0, 256], sizes = [8, 128], strides = [1, 1]} : vector<8x384xf32> to vector<8x128xf32>
    %147 = arith.addf %146, %7 : vector<8x128xf32>
    %148 = arith.mulf %136, %147 : vector<8x128xf32>
    %149 = arith.addf %145, %148 : vector<8x128xf32>
    %150 = math.tanh %149 : vector<8x128xf32>
    %cst_57 = arith.constant 1.000000e+00 : f32
    %151 = vector.broadcast %cst_57 : f32 to vector<8x128xf32>
    %152 = arith.subf %151, %144 : vector<8x128xf32>
    %153 = arith.mulf %152, %150 : vector<8x128xf32>
    %154 = arith.mulf %144, %118 : vector<8x128xf32>
    %155 = arith.addf %153, %154 : vector<8x128xf32>
    %c3_58 = arith.constant 3 : index
    %c0_59 = arith.constant 0 : index
    %c0_60 = arith.constant 0 : index
    %156 = vector.load %arg3[%c3_58, %c0_59, %c0_60] : memref<8x8x1xf32, #tpu.memory_space<vmem>>, vector<1x8x1xf32>
    %157 = vector.shape_cast %156 : vector<1x8x1xf32> to vector<8x1xf32>
    %158 = vector.broadcast %157 : vector<8x1xf32> to vector<8x128xf32>
    %159 = arith.mulf %155, %158 : vector<8x128xf32>
    %c3_61 = arith.constant 3 : index
    %c0_62 = arith.constant 0 : index
    %c0_63 = arith.constant 0 : index
    %160 = vector.load %arg16[%c3_61, %c0_62, %c0_63] : memref<8x8x128xf32, #tpu.memory_space<vmem>>, vector<1x8x128xf32>
    %161 = vector.shape_cast %160 : vector<1x8x128xf32> to vector<8x128xf32>
    %162 = vector.shape_cast %159 : vector<8x128xf32> to vector<1x8x128xf32>
    tpu.vector_store %arg16[%c3_61, %c0_62, %c0_63], %162 {strides = array<i32>} : memref<8x8x128xf32, #tpu.memory_space<vmem>>, vector<1x8x128xf32>,
    %cst_64 = arith.constant dense<0.000000e+00> : vector<8x384xf32>
    %163 = tpu.matmul %155, %0, %cst_64 {dimension_numbers = #tpu.dot_dimension_numbers<[1], [0], [0], [1], [0, 0, 1, 1], [], []>} : vector<8x128xf32>, vector<128x384xf32>, vector<8x384xf32> -> vector<8x384xf32>
    %c4 = arith.constant 4 : index
    %c0_65 = arith.constant 0 : index
    %c0_66 = arith.constant 0 : index
    %164 = vector.load %arg2[%c4, %c0_65, %c0_66] : memref<8x8x384xf32, #tpu.memory_space<vmem>>, vector<1x8x384xf32>
    %165 = vector.shape_cast %164 : vector<1x8x384xf32> to vector<8x384xf32>
    %166 = vector.extract_strided_slice %165 {offsets = [0, 0], sizes = [8, 128], strides = [1, 1]} : vector<8x384xf32> to vector<8x128xf32>
    %167 = vector.extract_strided_slice %163 {offsets = [0, 0], sizes = [8, 128], strides = [1, 1]} : vector<8x384xf32> to vector<8x128xf32>
    %168 = arith.addf %166, %167 : vector<8x128xf32>
    %169 = arith.negf %168 : vector<8x128xf32>
    %170 = math.exp %169 : vector<8x128xf32>
    %cst_67 = arith.constant 1.000000e+00 : f32
    %171 = vector.broadcast %cst_67 : f32 to vector<8x128xf32>
    %172 = arith.addf %171, %170 : vector<8x128xf32>
    %173 = arith.divf %171, %172 : vector<8x128xf32>
    %174 = vector.extract_strided_slice %165 {offsets = [0, 128], sizes = [8, 128], strides = [1, 1]} : vector<8x384xf32> to vector<8x128xf32>
    %175 = vector.extract_strided_slice %163 {offsets = [0, 128], sizes = [8, 128], strides = [1, 1]} : vector<8x384xf32> to vector<8x128xf32>
    %176 = arith.addf %174, %175 : vector<8x128xf32>
    %177 = arith.negf %176 : vector<8x128xf32>
    %178 = math.exp %177 : vector<8x128xf32>
    %cst_68 = arith.constant 1.000000e+00 : f32
    %179 = vector.broadcast %cst_68 : f32 to vector<8x128xf32>
    %180 = arith.addf %179, %178 : vector<8x128xf32>
    %181 = arith.divf %179, %180 : vector<8x128xf32>
    %182 = vector.extract_strided_slice %165 {offsets = [0, 256], sizes = [8, 128], strides = [1, 1]} : vector<8x384xf32> to vector<8x128xf32>
    %183 = vector.extract_strided_slice %163 {offsets = [0, 256], sizes = [8, 128], strides = [1, 1]} : vector<8x384xf32> to vector<8x128xf32>
    %184 = arith.addf %183, %7 : vector<8x128xf32>
    %185 = arith.mulf %173, %184 : vector<8x128xf32>
    %186 = arith.addf %182, %185 : vector<8x128xf32>
    %187 = math.tanh %186 : vector<8x128xf32>
    %cst_69 = arith.constant 1.000000e+00 : f32
    %188 = vector.broadcast %cst_69 : f32 to vector<8x128xf32>
    %189 = arith.subf %188, %181 : vector<8x128xf32>
    %190 = arith.mulf %189, %187 : vector<8x128xf32>
    %191 = arith.mulf %181, %155 : vector<8x128xf32>
    %192 = arith.addf %190, %191 : vector<8x128xf32>
    %c4_70 = arith.constant 4 : index
    %c0_71 = arith.constant 0 : index
    %c0_72 = arith.constant 0 : index
    %193 = vector.load %arg3[%c4_70, %c0_71, %c0_72] : memref<8x8x1xf32, #tpu.memory_space<vmem>>, vector<1x8x1xf32>
    %194 = vector.shape_cast %193 : vector<1x8x1xf32> to vector<8x1xf32>
    %195 = vector.broadcast %194 : vector<8x1xf32> to vector<8x128xf32>
    %196 = arith.mulf %192, %195 : vector<8x128xf32>
    %c4_73 = arith.constant 4 : index
    %c0_74 = arith.constant 0 : index
    %c0_75 = arith.constant 0 : index
    %197 = vector.load %arg16[%c4_73, %c0_74, %c0_75] : memref<8x8x128xf32, #tpu.memory_space<vmem>>, vector<1x8x128xf32>
    %198 = vector.shape_cast %197 : vector<1x8x128xf32> to vector<8x128xf32>
    %199 = vector.shape_cast %196 : vector<8x128xf32> to vector<1x8x128xf32>
    tpu.vector_store %arg16[%c4_73, %c0_74, %c0_75], %199 {strides = array<i32>} : memref<8x8x128xf32, #tpu.memory_space<vmem>>, vector<1x8x128xf32>,
    %cst_76 = arith.constant dense<0.000000e+00> : vector<8x384xf32>
    %200 = tpu.matmul %192, %0, %cst_76 {dimension_numbers = #tpu.dot_dimension_numbers<[1], [0], [0], [1], [0, 0, 1, 1], [], []>} : vector<8x128xf32>, vector<128x384xf32>, vector<8x384xf32> -> vector<8x384xf32>
    %c5 = arith.constant 5 : index
    %c0_77 = arith.constant 0 : index
    %c0_78 = arith.constant 0 : index
    %201 = vector.load %arg2[%c5, %c0_77, %c0_78] : memref<8x8x384xf32, #tpu.memory_space<vmem>>, vector<1x8x384xf32>
    %202 = vector.shape_cast %201 : vector<1x8x384xf32> to vector<8x384xf32>
    %203 = vector.extract_strided_slice %202 {offsets = [0, 0], sizes = [8, 128], strides = [1, 1]} : vector<8x384xf32> to vector<8x128xf32>
    %204 = vector.extract_strided_slice %200 {offsets = [0, 0], sizes = [8, 128], strides = [1, 1]} : vector<8x384xf32> to vector<8x128xf32>
    %205 = arith.addf %203, %204 : vector<8x128xf32>
    %206 = arith.negf %205 : vector<8x128xf32>
    %207 = math.exp %206 : vector<8x128xf32>
    %cst_79 = arith.constant 1.000000e+00 : f32
    %208 = vector.broadcast %cst_79 : f32 to vector<8x128xf32>
    %209 = arith.addf %208, %207 : vector<8x128xf32>
    %210 = arith.divf %208, %209 : vector<8x128xf32>
    %211 = vector.extract_strided_slice %202 {offsets = [0, 128], sizes = [8, 128], strides = [1, 1]} : vector<8x384xf32> to vector<8x128xf32>
    %212 = vector.extract_strided_slice %200 {offsets = [0, 128], sizes = [8, 128], strides = [1, 1]} : vector<8x384xf32> to vector<8x128xf32>
    %213 = arith.addf %211, %212 : vector<8x128xf32>
    %214 = arith.negf %213 : vector<8x128xf32>
    %215 = math.exp %214 : vector<8x128xf32>
    %cst_80 = arith.constant 1.000000e+00 : f32
    %216 = vector.broadcast %cst_80 : f32 to vector<8x128xf32>
    %217 = arith.addf %216, %215 : vector<8x128xf32>
    %218 = arith.divf %216, %217 : vector<8x128xf32>
    %219 = vector.extract_strided_slice %202 {offsets = [0, 256], sizes = [8, 128], strides = [1, 1]} : vector<8x384xf32> to vector<8x128xf32>
    %220 = vector.extract_strided_slice %200 {offsets = [0, 256], sizes = [8, 128], strides = [1, 1]} : vector<8x384xf32> to vector<8x128xf32>
    %221 = arith.addf %220, %7 : vector<8x128xf32>
    %222 = arith.mulf %210, %221 : vector<8x128xf32>
    %223 = arith.addf %219, %222 : vector<8x128xf32>
    %224 = math.tanh %223 : vector<8x128xf32>
    %cst_81 = arith.constant 1.000000e+00 : f32
    %225 = vector.broadcast %cst_81 : f32 to vector<8x128xf32>
    %226 = arith.subf %225, %218 : vector<8x128xf32>
    %227 = arith.mulf %226, %224 : vector<8x128xf32>
    %228 = arith.mulf %218, %192 : vector<8x128xf32>
    %229 = arith.addf %227, %228 : vector<8x128xf32>
    %c5_82 = arith.constant 5 : index
    %c0_83 = arith.constant 0 : index
    %c0_84 = arith.constant 0 : index
    %230 = vector.load %arg3[%c5_82, %c0_83, %c0_84] : memref<8x8x1xf32, #tpu.memory_space<vmem>>, vector<1x8x1xf32>
    %231 = vector.shape_cast %230 : vector<1x8x1xf32> to vector<8x1xf32>
    %232 = vector.broadcast %231 : vector<8x1xf32> to vector<8x128xf32>
    %233 = arith.mulf %229, %232 : vector<8x128xf32>
    %c5_85 = arith.constant 5 : index
    %c0_86 = arith.constant 0 : index
    %c0_87 = arith.constant 0 : index
    %234 = vector.load %arg16[%c5_85, %c0_86, %c0_87] : memref<8x8x128xf32, #tpu.memory_space<vmem>>, vector<1x8x128xf32>
    %235 = vector.shape_cast %234 : vector<1x8x128xf32> to vector<8x128xf32>
    %236 = vector.shape_cast %233 : vector<8x128xf32> to vector<1x8x128xf32>
    tpu.vector_store %arg16[%c5_85, %c0_86, %c0_87], %236 {strides = array<i32>} : memref<8x8x128xf32, #tpu.memory_space<vmem>>, vector<1x8x128xf32>,
    %cst_88 = arith.constant dense<0.000000e+00> : vector<8x384xf32>
    %237 = tpu.matmul %229, %0, %cst_88 {dimension_numbers = #tpu.dot_dimension_numbers<[1], [0], [0], [1], [0, 0, 1, 1], [], []>} : vector<8x128xf32>, vector<128x384xf32>, vector<8x384xf32> -> vector<8x384xf32>
    %c6 = arith.constant 6 : index
    %c0_89 = arith.constant 0 : index
    %c0_90 = arith.constant 0 : index
    %238 = vector.load %arg2[%c6, %c0_89, %c0_90] : memref<8x8x384xf32, #tpu.memory_space<vmem>>, vector<1x8x384xf32>
    %239 = vector.shape_cast %238 : vector<1x8x384xf32> to vector<8x384xf32>
    %240 = vector.extract_strided_slice %239 {offsets = [0, 0], sizes = [8, 128], strides = [1, 1]} : vector<8x384xf32> to vector<8x128xf32>
    %241 = vector.extract_strided_slice %237 {offsets = [0, 0], sizes = [8, 128], strides = [1, 1]} : vector<8x384xf32> to vector<8x128xf32>
    %242 = arith.addf %240, %241 : vector<8x128xf32>
    %243 = arith.negf %242 : vector<8x128xf32>
    %244 = math.exp %243 : vector<8x128xf32>
    %cst_91 = arith.constant 1.000000e+00 : f32
    %245 = vector.broadcast %cst_91 : f32 to vector<8x128xf32>
    %246 = arith.addf %245, %244 : vector<8x128xf32>
    %247 = arith.divf %245, %246 : vector<8x128xf32>
    %248 = vector.extract_strided_slice %239 {offsets = [0, 128], sizes = [8, 128], strides = [1, 1]} : vector<8x384xf32> to vector<8x128xf32>
    %249 = vector.extract_strided_slice %237 {offsets = [0, 128], sizes = [8, 128], strides = [1, 1]} : vector<8x384xf32> to vector<8x128xf32>
    %250 = arith.addf %248, %249 : vector<8x128xf32>
    %251 = arith.negf %250 : vector<8x128xf32>
    %252 = math.exp %251 : vector<8x128xf32>
    %cst_92 = arith.constant 1.000000e+00 : f32
    %253 = vector.broadcast %cst_92 : f32 to vector<8x128xf32>
    %254 = arith.addf %253, %252 : vector<8x128xf32>
    %255 = arith.divf %253, %254 : vector<8x128xf32>
    %256 = vector.extract_strided_slice %239 {offsets = [0, 256], sizes = [8, 128], strides = [1, 1]} : vector<8x384xf32> to vector<8x128xf32>
    %257 = vector.extract_strided_slice %237 {offsets = [0, 256], sizes = [8, 128], strides = [1, 1]} : vector<8x384xf32> to vector<8x128xf32>
    %258 = arith.addf %257, %7 : vector<8x128xf32>
    %259 = arith.mulf %247, %258 : vector<8x128xf32>
    %260 = arith.addf %256, %259 : vector<8x128xf32>
    %261 = math.tanh %260 : vector<8x128xf32>
    %cst_93 = arith.constant 1.000000e+00 : f32
    %262 = vector.broadcast %cst_93 : f32 to vector<8x128xf32>
    %263 = arith.subf %262, %255 : vector<8x128xf32>
    %264 = arith.mulf %263, %261 : vector<8x128xf32>
    %265 = arith.mulf %255, %229 : vector<8x128xf32>
    %266 = arith.addf %264, %265 : vector<8x128xf32>
    %c6_94 = arith.constant 6 : index
    %c0_95 = arith.constant 0 : index
    %c0_96 = arith.constant 0 : index
    %267 = vector.load %arg3[%c6_94, %c0_95, %c0_96] : memref<8x8x1xf32, #tpu.memory_space<vmem>>, vector<1x8x1xf32>
    %268 = vector.shape_cast %267 : vector<1x8x1xf32> to vector<8x1xf32>
    %269 = vector.broadcast %268 : vector<8x1xf32> to vector<8x128xf32>
    %270 = arith.mulf %266, %269 : vector<8x128xf32>
    %c6_97 = arith.constant 6 : index
    %c0_98 = arith.constant 0 : index
    %c0_99 = arith.constant 0 : index
    %271 = vector.load %arg16[%c6_97, %c0_98, %c0_99] : memref<8x8x128xf32, #tpu.memory_space<vmem>>, vector<1x8x128xf32>
    %272 = vector.shape_cast %271 : vector<1x8x128xf32> to vector<8x128xf32>
    %273 = vector.shape_cast %270 : vector<8x128xf32> to vector<1x8x128xf32>
    tpu.vector_store %arg16[%c6_97, %c0_98, %c0_99], %273 {strides = array<i32>} : memref<8x8x128xf32, #tpu.memory_space<vmem>>, vector<1x8x128xf32>,
    %cst_100 = arith.constant dense<0.000000e+00> : vector<8x384xf32>
    %274 = tpu.matmul %266, %0, %cst_100 {dimension_numbers = #tpu.dot_dimension_numbers<[1], [0], [0], [1], [0, 0, 1, 1], [], []>} : vector<8x128xf32>, vector<128x384xf32>, vector<8x384xf32> -> vector<8x384xf32>
    %c7 = arith.constant 7 : index
    %c0_101 = arith.constant 0 : index
    %c0_102 = arith.constant 0 : index
    %275 = vector.load %arg2[%c7, %c0_101, %c0_102] : memref<8x8x384xf32, #tpu.memory_space<vmem>>, vector<1x8x384xf32>
    %276 = vector.shape_cast %275 : vector<1x8x384xf32> to vector<8x384xf32>
    %277 = vector.extract_strided_slice %276 {offsets = [0, 0], sizes = [8, 128], strides = [1, 1]} : vector<8x384xf32> to vector<8x128xf32>
    %278 = vector.extract_strided_slice %274 {offsets = [0, 0], sizes = [8, 128], strides = [1, 1]} : vector<8x384xf32> to vector<8x128xf32>
    %279 = arith.addf %277, %278 : vector<8x128xf32>
    %280 = arith.negf %279 : vector<8x128xf32>
    %281 = math.exp %280 : vector<8x128xf32>
    %cst_103 = arith.constant 1.000000e+00 : f32
    %282 = vector.broadcast %cst_103 : f32 to vector<8x128xf32>
    %283 = arith.addf %282, %281 : vector<8x128xf32>
    %284 = arith.divf %282, %283 : vector<8x128xf32>
    %285 = vector.extract_strided_slice %276 {offsets = [0, 128], sizes = [8, 128], strides = [1, 1]} : vector<8x384xf32> to vector<8x128xf32>
    %286 = vector.extract_strided_slice %274 {offsets = [0, 128], sizes = [8, 128], strides = [1, 1]} : vector<8x384xf32> to vector<8x128xf32>
    %287 = arith.addf %285, %286 : vector<8x128xf32>
    %288 = arith.negf %287 : vector<8x128xf32>
    %289 = math.exp %288 : vector<8x128xf32>
    %cst_104 = arith.constant 1.000000e+00 : f32
    %290 = vector.broadcast %cst_104 : f32 to vector<8x128xf32>
    %291 = arith.addf %290, %289 : vector<8x128xf32>
    %292 = arith.divf %290, %291 : vector<8x128xf32>
    %293 = vector.extract_strided_slice %276 {offsets = [0, 256], sizes = [8, 128], strides = [1, 1]} : vector<8x384xf32> to vector<8x128xf32>
    %294 = vector.extract_strided_slice %274 {offsets = [0, 256], sizes = [8, 128], strides = [1, 1]} : vector<8x384xf32> to vector<8x128xf32>
    %295 = arith.addf %294, %7 : vector<8x128xf32>
    %296 = arith.mulf %284, %295 : vector<8x128xf32>
    %297 = arith.addf %293, %296 : vector<8x128xf32>
    %298 = math.tanh %297 : vector<8x128xf32>
    %cst_105 = arith.constant 1.000000e+00 : f32
    %299 = vector.broadcast %cst_105 : f32 to vector<8x128xf32>
    %300 = arith.subf %299, %292 : vector<8x128xf32>
    %301 = arith.mulf %300, %298 : vector<8x128xf32>
    %302 = arith.mulf %292, %266 : vector<8x128xf32>
    %303 = arith.addf %301, %302 : vector<8x128xf32>
    %c7_106 = arith.constant 7 : index
    %c0_107 = arith.constant 0 : index
    %c0_108 = arith.constant 0 : index
    %304 = vector.load %arg3[%c7_106, %c0_107, %c0_108] : memref<8x8x1xf32, #tpu.memory_space<vmem>>, vector<1x8x1xf32>
    %305 = vector.shape_cast %304 : vector<1x8x1xf32> to vector<8x1xf32>
    %306 = vector.broadcast %305 : vector<8x1xf32> to vector<8x128xf32>
    %307 = arith.mulf %303, %306 : vector<8x128xf32>
    %c7_109 = arith.constant 7 : index
    %c0_110 = arith.constant 0 : index
    %c0_111 = arith.constant 0 : index
    %308 = vector.load %arg16[%c7_109, %c0_110, %c0_111] : memref<8x8x128xf32, #tpu.memory_space<vmem>>, vector<1x8x128xf32>
    %309 = vector.shape_cast %308 : vector<1x8x128xf32> to vector<8x128xf32>
    %310 = vector.shape_cast %307 : vector<8x128xf32> to vector<1x8x128xf32>
    tpu.vector_store %arg16[%c7_109, %c0_110, %c0_111], %310 {strides = array<i32>} : memref<8x8x128xf32, #tpu.memory_space<vmem>>, vector<1x8x128xf32>,
    %c0_112 = arith.constant 0 : index
    %c0_113 = arith.constant 0 : index
    %c0_114 = arith.constant 0 : index
    %311 = vector.load %arg16[%c0_112, %c0_113, %c0_114] : memref<8x8x128xf32, #tpu.memory_space<vmem>>, vector<8x8x128xf32>
    %312 = vector.shape_cast %311 : vector<8x8x128xf32> to vector<64x128xf32>
    %cst_115 = arith.constant dense<0.000000e+00> : vector<64x128xf32>
    %313 = tpu.matmul %312, %4, %cst_115 {dimension_numbers = #tpu.dot_dimension_numbers<[1], [0], [0], [1], [0, 0, 1, 1], [], []>} : vector<64x128xf32>, vector<128x128xf32>, vector<64x128xf32> -> vector<64x128xf32>
    %314 = vector.shape_cast %313 : vector<64x128xf32> to vector<8x8x128xf32>
    %cst_116 = arith.constant 0.000000e+00 : f32
    %315 = vector.broadcast %cst_116 : f32 to vector<8x128xf32>
    %c0_117 = arith.constant 0 : index
    %c0_118 = arith.constant 0 : index
    %c0_119 = arith.constant 0 : index
    %316 = vector.load %arg0[%c0_117, %c0_118, %c0_119] : memref<6x8x128xf32, #tpu.memory_space<vmem>>, vector<1x8x128xf32>
    %317 = vector.shape_cast %316 : vector<1x8x128xf32> to vector<8x128xf32>
    %cst_120 = arith.constant dense<0.000000e+00> : vector<8x128xf32>
    %318 = tpu.matmul %315, %3, %cst_120 {dimension_numbers = #tpu.dot_dimension_numbers<[1], [0], [0], [1], [0, 0, 1, 1], [], []>} : vector<8x128xf32>, vector<128x128xf32>, vector<8x128xf32> -> vector<8x128xf32>
    %319 = arith.addf %317, %318 : vector<8x128xf32>
    %cst_121 = arith.constant dense<0xFF800000> : vector<8xf32>
    %320 = vector.multi_reduction <maximumf>, %319, %cst_121 [1] : vector<8x128xf32> to vector<8xf32>
    %321 = vector.shape_cast %320 : vector<8xf32> to vector<8x1xf32>
    %322 = vector.broadcast %321 : vector<8x1xf32> to vector<8x128xf32>
    %323 = arith.subf %319, %322 : vector<8x128xf32>
    %324 = math.exp %323 : vector<8x128xf32>
    %cst_122 = arith.constant dense<0.000000e+00> : vector<8xf32>
    %325 = vector.multi_reduction <add>, %324, %cst_122 [1] : vector<8x128xf32> to vector<8xf32>
    %326 = vector.shape_cast %325 : vector<8xf32> to vector<8x1xf32>
    %327 = vector.broadcast %326 : vector<8x1xf32> to vector<8x128xf32>
    %328 = arith.divf %324, %327 : vector<8x128xf32>
    %c0_123 = arith.constant 0 : index
    %c0_124 = arith.constant 0 : index
    %c0_125 = arith.constant 0 : index
    %329 = vector.load %arg15[%c0_123, %c0_124, %c0_125] : memref<6x8x128xf32, #tpu.memory_space<vmem>>, vector<1x8x128xf32>
    %330 = vector.shape_cast %329 : vector<1x8x128xf32> to vector<8x128xf32>
    %331 = vector.shape_cast %328 : vector<8x128xf32> to vector<1x8x128xf32>
    tpu.vector_store %arg15[%c0_123, %c0_124, %c0_125], %331 {strides = array<i32>} : memref<6x8x128xf32, #tpu.memory_space<vmem>>, vector<1x8x128xf32>,
    %332 = vector.extract_strided_slice %328 {offsets = [0, 0], sizes = [8, 8], strides = [1, 1]} : vector<8x128xf32> to vector<8x8xf32>
    %333 = tpu.transpose %332, [1, 0] : vector<8x8xf32> -> vector<8x8xf32>
    %334 = vector.shape_cast %333 : vector<8x8xf32> to vector<8x8x1xf32>
    %335 = vector.broadcast %334 : vector<8x8x1xf32> to vector<8x8x128xf32>
    %336 = arith.mulf %335, %314 : vector<8x8x128xf32>
    %cst_126 = arith.constant dense<0.000000e+00> : vector<8x128xf32>
    %337 = vector.multi_reduction <add>, %336, %cst_126 [0] : vector<8x8x128xf32> to vector<8x128xf32>
    %c0_127 = arith.constant 0 : index
    %c0_128 = arith.constant 0 : index
    %c0_129 = arith.constant 0 : index
    %338 = vector.load %arg1[%c0_127, %c0_128, %c0_129] : memref<6x8x128xf32, #tpu.memory_space<vmem>>, vector<1x8x128xf32>
    %339 = vector.shape_cast %338 : vector<1x8x128xf32> to vector<8x128xf32>
    %340 = arith.addf %339, %337 : vector<8x128xf32>
    %cst_130 = arith.constant 0.000000e+00 : f32
    %341 = vector.broadcast %cst_130 : f32 to vector<8x128xf32>
    %342 = arith.maximumf %340, %341 : vector<8x128xf32>
    %cst_131 = arith.constant dense<0.000000e+00> : vector<8x384xf32>
    %343 = tpu.matmul %342, %1, %cst_131 {dimension_numbers = #tpu.dot_dimension_numbers<[1], [0], [0], [1], [0, 0, 1, 1], [], []>} : vector<8x128xf32>, vector<128x384xf32>, vector<8x384xf32> -> vector<8x384xf32>
    %344 = arith.addf %343, %13 : vector<8x384xf32>
    %cst_132 = arith.constant dense<0.000000e+00> : vector<8x384xf32>
    %345 = tpu.matmul %315, %2, %cst_132 {dimension_numbers = #tpu.dot_dimension_numbers<[1], [0], [0], [1], [0, 0, 1, 1], [], []>} : vector<8x128xf32>, vector<128x384xf32>, vector<8x384xf32> -> vector<8x384xf32>
    %346 = vector.extract_strided_slice %344 {offsets = [0, 0], sizes = [8, 128], strides = [1, 1]} : vector<8x384xf32> to vector<8x128xf32>
    %347 = vector.extract_strided_slice %345 {offsets = [0, 0], sizes = [8, 128], strides = [1, 1]} : vector<8x384xf32> to vector<8x128xf32>
    %348 = arith.addf %346, %347 : vector<8x128xf32>
    %349 = arith.negf %348 : vector<8x128xf32>
    %350 = math.exp %349 : vector<8x128xf32>
    %cst_133 = arith.constant 1.000000e+00 : f32
    %351 = vector.broadcast %cst_133 : f32 to vector<8x128xf32>
    %352 = arith.addf %351, %350 : vector<8x128xf32>
    %353 = arith.divf %351, %352 : vector<8x128xf32>
    %354 = vector.extract_strided_slice %344 {offsets = [0, 128], sizes = [8, 128], strides = [1, 1]} : vector<8x384xf32> to vector<8x128xf32>
    %355 = vector.extract_strided_slice %345 {offsets = [0, 128], sizes = [8, 128], strides = [1, 1]} : vector<8x384xf32> to vector<8x128xf32>
    %356 = arith.addf %354, %355 : vector<8x128xf32>
    %357 = arith.negf %356 : vector<8x128xf32>
    %358 = math.exp %357 : vector<8x128xf32>
    %cst_134 = arith.constant 1.000000e+00 : f32
    %359 = vector.broadcast %cst_134 : f32 to vector<8x128xf32>
    %360 = arith.addf %359, %358 : vector<8x128xf32>
    %361 = arith.divf %359, %360 : vector<8x128xf32>
    %362 = vector.extract_strided_slice %344 {offsets = [0, 256], sizes = [8, 128], strides = [1, 1]} : vector<8x384xf32> to vector<8x128xf32>
    %363 = vector.extract_strided_slice %345 {offsets = [0, 256], sizes = [8, 128], strides = [1, 1]} : vector<8x384xf32> to vector<8x128xf32>
    %364 = arith.addf %363, %10 : vector<8x128xf32>
    %365 = arith.mulf %353, %364 : vector<8x128xf32>
    %366 = arith.addf %362, %365 : vector<8x128xf32>
    %367 = math.tanh %366 : vector<8x128xf32>
    %cst_135 = arith.constant 1.000000e+00 : f32
    %368 = vector.broadcast %cst_135 : f32 to vector<8x128xf32>
    %369 = arith.subf %368, %361 : vector<8x128xf32>
    %370 = arith.mulf %369, %367 : vector<8x128xf32>
    %371 = arith.mulf %361, %315 : vector<8x128xf32>
    %372 = arith.addf %370, %371 : vector<8x128xf32>
    %c1_136 = arith.constant 1 : index
    %c0_137 = arith.constant 0 : index
    %c0_138 = arith.constant 0 : index
    %373 = vector.load %arg0[%c1_136, %c0_137, %c0_138] : memref<6x8x128xf32, #tpu.memory_space<vmem>>, vector<1x8x128xf32>
    %374 = vector.shape_cast %373 : vector<1x8x128xf32> to vector<8x128xf32>
    %cst_139 = arith.constant dense<0.000000e+00> : vector<8x128xf32>
    %375 = tpu.matmul %372, %3, %cst_139 {dimension_numbers = #tpu.dot_dimension_numbers<[1], [0], [0], [1], [0, 0, 1, 1], [], []>} : vector<8x128xf32>, vector<128x128xf32>, vector<8x128xf32> -> vector<8x128xf32>
    %376 = arith.addf %374, %375 : vector<8x128xf32>
    %cst_140 = arith.constant dense<0xFF800000> : vector<8xf32>
    %377 = vector.multi_reduction <maximumf>, %376, %cst_140 [1] : vector<8x128xf32> to vector<8xf32>
    %378 = vector.shape_cast %377 : vector<8xf32> to vector<8x1xf32>
    %379 = vector.broadcast %378 : vector<8x1xf32> to vector<8x128xf32>
    %380 = arith.subf %376, %379 : vector<8x128xf32>
    %381 = math.exp %380 : vector<8x128xf32>
    %cst_141 = arith.constant dense<0.000000e+00> : vector<8xf32>
    %382 = vector.multi_reduction <add>, %381, %cst_141 [1] : vector<8x128xf32> to vector<8xf32>
    %383 = vector.shape_cast %382 : vector<8xf32> to vector<8x1xf32>
    %384 = vector.broadcast %383 : vector<8x1xf32> to vector<8x128xf32>
    %385 = arith.divf %381, %384 : vector<8x128xf32>
    %c1_142 = arith.constant 1 : index
    %c0_143 = arith.constant 0 : index
    %c0_144 = arith.constant 0 : index
    %386 = vector.load %arg15[%c1_142, %c0_143, %c0_144] : memref<6x8x128xf32, #tpu.memory_space<vmem>>, vector<1x8x128xf32>
    %387 = vector.shape_cast %386 : vector<1x8x128xf32> to vector<8x128xf32>
    %388 = vector.shape_cast %385 : vector<8x128xf32> to vector<1x8x128xf32>
    tpu.vector_store %arg15[%c1_142, %c0_143, %c0_144], %388 {strides = array<i32>} : memref<6x8x128xf32, #tpu.memory_space<vmem>>, vector<1x8x128xf32>,
    %389 = vector.extract_strided_slice %385 {offsets = [0, 0], sizes = [8, 8], strides = [1, 1]} : vector<8x128xf32> to vector<8x8xf32>
    %390 = tpu.transpose %389, [1, 0] : vector<8x8xf32> -> vector<8x8xf32>
    %391 = vector.shape_cast %390 : vector<8x8xf32> to vector<8x8x1xf32>
    %392 = vector.broadcast %391 : vector<8x8x1xf32> to vector<8x8x128xf32>
    %393 = arith.mulf %392, %314 : vector<8x8x128xf32>
    %cst_145 = arith.constant dense<0.000000e+00> : vector<8x128xf32>
    %394 = vector.multi_reduction <add>, %393, %cst_145 [0] : vector<8x8x128xf32> to vector<8x128xf32>
    %c1_146 = arith.constant 1 : index
    %c0_147 = arith.constant 0 : index
    %c0_148 = arith.constant 0 : index
    %395 = vector.load %arg1[%c1_146, %c0_147, %c0_148] : memref<6x8x128xf32, #tpu.memory_space<vmem>>, vector<1x8x128xf32>
    %396 = vector.shape_cast %395 : vector<1x8x128xf32> to vector<8x128xf32>
    %397 = arith.addf %396, %394 : vector<8x128xf32>
    %cst_149 = arith.constant 0.000000e+00 : f32
    %398 = vector.broadcast %cst_149 : f32 to vector<8x128xf32>
    %399 = arith.maximumf %397, %398 : vector<8x128xf32>
    %cst_150 = arith.constant dense<0.000000e+00> : vector<8x384xf32>
    %400 = tpu.matmul %399, %1, %cst_150 {dimension_numbers = #tpu.dot_dimension_numbers<[1], [0], [0], [1], [0, 0, 1, 1], [], []>} : vector<8x128xf32>, vector<128x384xf32>, vector<8x384xf32> -> vector<8x384xf32>
    %401 = arith.addf %400, %13 : vector<8x384xf32>
    %cst_151 = arith.constant dense<0.000000e+00> : vector<8x384xf32>
    %402 = tpu.matmul %372, %2, %cst_151 {dimension_numbers = #tpu.dot_dimension_numbers<[1], [0], [0], [1], [0, 0, 1, 1], [], []>} : vector<8x128xf32>, vector<128x384xf32>, vector<8x384xf32> -> vector<8x384xf32>
    %403 = vector.extract_strided_slice %401 {offsets = [0, 0], sizes = [8, 128], strides = [1, 1]} : vector<8x384xf32> to vector<8x128xf32>
    %404 = vector.extract_strided_slice %402 {offsets = [0, 0], sizes = [8, 128], strides = [1, 1]} : vector<8x384xf32> to vector<8x128xf32>
    %405 = arith.addf %403, %404 : vector<8x128xf32>
    %406 = arith.negf %405 : vector<8x128xf32>
    %407 = math.exp %406 : vector<8x128xf32>
    %cst_152 = arith.constant 1.000000e+00 : f32
    %408 = vector.broadcast %cst_152 : f32 to vector<8x128xf32>
    %409 = arith.addf %408, %407 : vector<8x128xf32>
    %410 = arith.divf %408, %409 : vector<8x128xf32>
    %411 = vector.extract_strided_slice %401 {offsets = [0, 128], sizes = [8, 128], strides = [1, 1]} : vector<8x384xf32> to vector<8x128xf32>
    %412 = vector.extract_strided_slice %402 {offsets = [0, 128], sizes = [8, 128], strides = [1, 1]} : vector<8x384xf32> to vector<8x128xf32>
    %413 = arith.addf %411, %412 : vector<8x128xf32>
    %414 = arith.negf %413 : vector<8x128xf32>
    %415 = math.exp %414 : vector<8x128xf32>
    %cst_153 = arith.constant 1.000000e+00 : f32
    %416 = vector.broadcast %cst_153 : f32 to vector<8x128xf32>
    %417 = arith.addf %416, %415 : vector<8x128xf32>
    %418 = arith.divf %416, %417 : vector<8x128xf32>
    %419 = vector.extract_strided_slice %401 {offsets = [0, 256], sizes = [8, 128], strides = [1, 1]} : vector<8x384xf32> to vector<8x128xf32>
    %420 = vector.extract_strided_slice %402 {offsets = [0, 256], sizes = [8, 128], strides = [1, 1]} : vector<8x384xf32> to vector<8x128xf32>
    %421 = arith.addf %420, %10 : vector<8x128xf32>
    %422 = arith.mulf %410, %421 : vector<8x128xf32>
    %423 = arith.addf %419, %422 : vector<8x128xf32>
    %424 = math.tanh %423 : vector<8x128xf32>
    %cst_154 = arith.constant 1.000000e+00 : f32
    %425 = vector.broadcast %cst_154 : f32 to vector<8x128xf32>
    %426 = arith.subf %425, %418 : vector<8x128xf32>
    %427 = arith.mulf %426, %424 : vector<8x128xf32>
    %428 = arith.mulf %418, %372 : vector<8x128xf32>
    %429 = arith.addf %427, %428 : vector<8x128xf32>
    %c2_155 = arith.constant 2 : index
    %c0_156 = arith.constant 0 : index
    %c0_157 = arith.constant 0 : index
    %430 = vector.load %arg0[%c2_155, %c0_156, %c0_157] : memref<6x8x128xf32, #tpu.memory_space<vmem>>, vector<1x8x128xf32>
    %431 = vector.shape_cast %430 : vector<1x8x128xf32> to vector<8x128xf32>
    %cst_158 = arith.constant dense<0.000000e+00> : vector<8x128xf32>
    %432 = tpu.matmul %429, %3, %cst_158 {dimension_numbers = #tpu.dot_dimension_numbers<[1], [0], [0], [1], [0, 0, 1, 1], [], []>} : vector<8x128xf32>, vector<128x128xf32>, vector<8x128xf32> -> vector<8x128xf32>
    %433 = arith.addf %431, %432 : vector<8x128xf32>
    %cst_159 = arith.constant dense<0xFF800000> : vector<8xf32>
    %434 = vector.multi_reduction <maximumf>, %433, %cst_159 [1] : vector<8x128xf32> to vector<8xf32>
    %435 = vector.shape_cast %434 : vector<8xf32> to vector<8x1xf32>
    %436 = vector.broadcast %435 : vector<8x1xf32> to vector<8x128xf32>
    %437 = arith.subf %433, %436 : vector<8x128xf32>
    %438 = math.exp %437 : vector<8x128xf32>
    %cst_160 = arith.constant dense<0.000000e+00> : vector<8xf32>
    %439 = vector.multi_reduction <add>, %438, %cst_160 [1] : vector<8x128xf32> to vector<8xf32>
    %440 = vector.shape_cast %439 : vector<8xf32> to vector<8x1xf32>
    %441 = vector.broadcast %440 : vector<8x1xf32> to vector<8x128xf32>
    %442 = arith.divf %438, %441 : vector<8x128xf32>
    %c2_161 = arith.constant 2 : index
    %c0_162 = arith.constant 0 : index
    %c0_163 = arith.constant 0 : index
    %443 = vector.load %arg15[%c2_161, %c0_162, %c0_163] : memref<6x8x128xf32, #tpu.memory_space<vmem>>, vector<1x8x128xf32>
    %444 = vector.shape_cast %443 : vector<1x8x128xf32> to vector<8x128xf32>
    %445 = vector.shape_cast %442 : vector<8x128xf32> to vector<1x8x128xf32>
    tpu.vector_store %arg15[%c2_161, %c0_162, %c0_163], %445 {strides = array<i32>} : memref<6x8x128xf32, #tpu.memory_space<vmem>>, vector<1x8x128xf32>,
    %446 = vector.extract_strided_slice %442 {offsets = [0, 0], sizes = [8, 8], strides = [1, 1]} : vector<8x128xf32> to vector<8x8xf32>
    %447 = tpu.transpose %446, [1, 0] : vector<8x8xf32> -> vector<8x8xf32>
    %448 = vector.shape_cast %447 : vector<8x8xf32> to vector<8x8x1xf32>
    %449 = vector.broadcast %448 : vector<8x8x1xf32> to vector<8x8x128xf32>
    %450 = arith.mulf %449, %314 : vector<8x8x128xf32>
    %cst_164 = arith.constant dense<0.000000e+00> : vector<8x128xf32>
    %451 = vector.multi_reduction <add>, %450, %cst_164 [0] : vector<8x8x128xf32> to vector<8x128xf32>
    %c2_165 = arith.constant 2 : index
    %c0_166 = arith.constant 0 : index
    %c0_167 = arith.constant 0 : index
    %452 = vector.load %arg1[%c2_165, %c0_166, %c0_167] : memref<6x8x128xf32, #tpu.memory_space<vmem>>, vector<1x8x128xf32>
    %453 = vector.shape_cast %452 : vector<1x8x128xf32> to vector<8x128xf32>
    %454 = arith.addf %453, %451 : vector<8x128xf32>
    %cst_168 = arith.constant 0.000000e+00 : f32
    %455 = vector.broadcast %cst_168 : f32 to vector<8x128xf32>
    %456 = arith.maximumf %454, %455 : vector<8x128xf32>
    %cst_169 = arith.constant dense<0.000000e+00> : vector<8x384xf32>
    %457 = tpu.matmul %456, %1, %cst_169 {dimension_numbers = #tpu.dot_dimension_numbers<[1], [0], [0], [1], [0, 0, 1, 1], [], []>} : vector<8x128xf32>, vector<128x384xf32>, vector<8x384xf32> -> vector<8x384xf32>
    %458 = arith.addf %457, %13 : vector<8x384xf32>
    %cst_170 = arith.constant dense<0.000000e+00> : vector<8x384xf32>
    %459 = tpu.matmul %429, %2, %cst_170 {dimension_numbers = #tpu.dot_dimension_numbers<[1], [0], [0], [1], [0, 0, 1, 1], [], []>} : vector<8x128xf32>, vector<128x384xf32>, vector<8x384xf32> -> vector<8x384xf32>
    %460 = vector.extract_strided_slice %458 {offsets = [0, 0], sizes = [8, 128], strides = [1, 1]} : vector<8x384xf32> to vector<8x128xf32>
    %461 = vector.extract_strided_slice %459 {offsets = [0, 0], sizes = [8, 128], strides = [1, 1]} : vector<8x384xf32> to vector<8x128xf32>
    %462 = arith.addf %460, %461 : vector<8x128xf32>
    %463 = arith.negf %462 : vector<8x128xf32>
    %464 = math.exp %463 : vector<8x128xf32>
    %cst_171 = arith.constant 1.000000e+00 : f32
    %465 = vector.broadcast %cst_171 : f32 to vector<8x128xf32>
    %466 = arith.addf %465, %464 : vector<8x128xf32>
    %467 = arith.divf %465, %466 : vector<8x128xf32>
    %468 = vector.extract_strided_slice %458 {offsets = [0, 128], sizes = [8, 128], strides = [1, 1]} : vector<8x384xf32> to vector<8x128xf32>
    %469 = vector.extract_strided_slice %459 {offsets = [0, 128], sizes = [8, 128], strides = [1, 1]} : vector<8x384xf32> to vector<8x128xf32>
    %470 = arith.addf %468, %469 : vector<8x128xf32>
    %471 = arith.negf %470 : vector<8x128xf32>
    %472 = math.exp %471 : vector<8x128xf32>
    %cst_172 = arith.constant 1.000000e+00 : f32
    %473 = vector.broadcast %cst_172 : f32 to vector<8x128xf32>
    %474 = arith.addf %473, %472 : vector<8x128xf32>
    %475 = arith.divf %473, %474 : vector<8x128xf32>
    %476 = vector.extract_strided_slice %458 {offsets = [0, 256], sizes = [8, 128], strides = [1, 1]} : vector<8x384xf32> to vector<8x128xf32>
    %477 = vector.extract_strided_slice %459 {offsets = [0, 256], sizes = [8, 128], strides = [1, 1]} : vector<8x384xf32> to vector<8x128xf32>
    %478 = arith.addf %477, %10 : vector<8x128xf32>
    %479 = arith.mulf %467, %478 : vector<8x128xf32>
    %480 = arith.addf %476, %479 : vector<8x128xf32>
    %481 = math.tanh %480 : vector<8x128xf32>
    %cst_173 = arith.constant 1.000000e+00 : f32
    %482 = vector.broadcast %cst_173 : f32 to vector<8x128xf32>
    %483 = arith.subf %482, %475 : vector<8x128xf32>
    %484 = arith.mulf %483, %481 : vector<8x128xf32>
    %485 = arith.mulf %475, %429 : vector<8x128xf32>
    %486 = arith.addf %484, %485 : vector<8x128xf32>
    %c3_174 = arith.constant 3 : index
    %c0_175 = arith.constant 0 : index
    %c0_176 = arith.constant 0 : index
    %487 = vector.load %arg0[%c3_174, %c0_175, %c0_176] : memref<6x8x128xf32, #tpu.memory_space<vmem>>, vector<1x8x128xf32>
    %488 = vector.shape_cast %487 : vector<1x8x128xf32> to vector<8x128xf32>
    %cst_177 = arith.constant dense<0.000000e+00> : vector<8x128xf32>
    %489 = tpu.matmul %486, %3, %cst_177 {dimension_numbers = #tpu.dot_dimension_numbers<[1], [0], [0], [1], [0, 0, 1, 1], [], []>} : vector<8x128xf32>, vector<128x128xf32>, vector<8x128xf32> -> vector<8x128xf32>
    %490 = arith.addf %488, %489 : vector<8x128xf32>
    %cst_178 = arith.constant dense<0xFF800000> : vector<8xf32>
    %491 = vector.multi_reduction <maximumf>, %490, %cst_178 [1] : vector<8x128xf32> to vector<8xf32>
    %492 = vector.shape_cast %491 : vector<8xf32> to vector<8x1xf32>
    %493 = vector.broadcast %492 : vector<8x1xf32> to vector<8x128xf32>
    %494 = arith.subf %490, %493 : vector<8x128xf32>
    %495 = math.exp %494 : vector<8x128xf32>
    %cst_179 = arith.constant dense<0.000000e+00> : vector<8xf32>
    %496 = vector.multi_reduction <add>, %495, %cst_179 [1] : vector<8x128xf32> to vector<8xf32>
    %497 = vector.shape_cast %496 : vector<8xf32> to vector<8x1xf32>
    %498 = vector.broadcast %497 : vector<8x1xf32> to vector<8x128xf32>
    %499 = arith.divf %495, %498 : vector<8x128xf32>
    %c3_180 = arith.constant 3 : index
    %c0_181 = arith.constant 0 : index
    %c0_182 = arith.constant 0 : index
    %500 = vector.load %arg15[%c3_180, %c0_181, %c0_182] : memref<6x8x128xf32, #tpu.memory_space<vmem>>, vector<1x8x128xf32>
    %501 = vector.shape_cast %500 : vector<1x8x128xf32> to vector<8x128xf32>
    %502 = vector.shape_cast %499 : vector<8x128xf32> to vector<1x8x128xf32>
    tpu.vector_store %arg15[%c3_180, %c0_181, %c0_182], %502 {strides = array<i32>} : memref<6x8x128xf32, #tpu.memory_space<vmem>>, vector<1x8x128xf32>,
    %503 = vector.extract_strided_slice %499 {offsets = [0, 0], sizes = [8, 8], strides = [1, 1]} : vector<8x128xf32> to vector<8x8xf32>
    %504 = tpu.transpose %503, [1, 0] : vector<8x8xf32> -> vector<8x8xf32>
    %505 = vector.shape_cast %504 : vector<8x8xf32> to vector<8x8x1xf32>
    %506 = vector.broadcast %505 : vector<8x8x1xf32> to vector<8x8x128xf32>
    %507 = arith.mulf %506, %314 : vector<8x8x128xf32>
    %cst_183 = arith.constant dense<0.000000e+00> : vector<8x128xf32>
    %508 = vector.multi_reduction <add>, %507, %cst_183 [0] : vector<8x8x128xf32> to vector<8x128xf32>
    %c3_184 = arith.constant 3 : index
    %c0_185 = arith.constant 0 : index
    %c0_186 = arith.constant 0 : index
    %509 = vector.load %arg1[%c3_184, %c0_185, %c0_186] : memref<6x8x128xf32, #tpu.memory_space<vmem>>, vector<1x8x128xf32>
    %510 = vector.shape_cast %509 : vector<1x8x128xf32> to vector<8x128xf32>
    %511 = arith.addf %510, %508 : vector<8x128xf32>
    %cst_187 = arith.constant 0.000000e+00 : f32
    %512 = vector.broadcast %cst_187 : f32 to vector<8x128xf32>
    %513 = arith.maximumf %511, %512 : vector<8x128xf32>
    %cst_188 = arith.constant dense<0.000000e+00> : vector<8x384xf32>
    %514 = tpu.matmul %513, %1, %cst_188 {dimension_numbers = #tpu.dot_dimension_numbers<[1], [0], [0], [1], [0, 0, 1, 1], [], []>} : vector<8x128xf32>, vector<128x384xf32>, vector<8x384xf32> -> vector<8x384xf32>
    %515 = arith.addf %514, %13 : vector<8x384xf32>
    %cst_189 = arith.constant dense<0.000000e+00> : vector<8x384xf32>
    %516 = tpu.matmul %486, %2, %cst_189 {dimension_numbers = #tpu.dot_dimension_numbers<[1], [0], [0], [1], [0, 0, 1, 1], [], []>} : vector<8x128xf32>, vector<128x384xf32>, vector<8x384xf32> -> vector<8x384xf32>
    %517 = vector.extract_strided_slice %515 {offsets = [0, 0], sizes = [8, 128], strides = [1, 1]} : vector<8x384xf32> to vector<8x128xf32>
    %518 = vector.extract_strided_slice %516 {offsets = [0, 0], sizes = [8, 128], strides = [1, 1]} : vector<8x384xf32> to vector<8x128xf32>
    %519 = arith.addf %517, %518 : vector<8x128xf32>
    %520 = arith.negf %519 : vector<8x128xf32>
    %521 = math.exp %520 : vector<8x128xf32>
    %cst_190 = arith.constant 1.000000e+00 : f32
    %522 = vector.broadcast %cst_190 : f32 to vector<8x128xf32>
    %523 = arith.addf %522, %521 : vector<8x128xf32>
    %524 = arith.divf %522, %523 : vector<8x128xf32>
    %525 = vector.extract_strided_slice %515 {offsets = [0, 128], sizes = [8, 128], strides = [1, 1]} : vector<8x384xf32> to vector<8x128xf32>
    %526 = vector.extract_strided_slice %516 {offsets = [0, 128], sizes = [8, 128], strides = [1, 1]} : vector<8x384xf32> to vector<8x128xf32>
    %527 = arith.addf %525, %526 : vector<8x128xf32>
    %528 = arith.negf %527 : vector<8x128xf32>
    %529 = math.exp %528 : vector<8x128xf32>
    %cst_191 = arith.constant 1.000000e+00 : f32
    %530 = vector.broadcast %cst_191 : f32 to vector<8x128xf32>
    %531 = arith.addf %530, %529 : vector<8x128xf32>
    %532 = arith.divf %530, %531 : vector<8x128xf32>
    %533 = vector.extract_strided_slice %515 {offsets = [0, 256], sizes = [8, 128], strides = [1, 1]} : vector<8x384xf32> to vector<8x128xf32>
    %534 = vector.extract_strided_slice %516 {offsets = [0, 256], sizes = [8, 128], strides = [1, 1]} : vector<8x384xf32> to vector<8x128xf32>
    %535 = arith.addf %534, %10 : vector<8x128xf32>
    %536 = arith.mulf %524, %535 : vector<8x128xf32>
    %537 = arith.addf %533, %536 : vector<8x128xf32>
    %538 = math.tanh %537 : vector<8x128xf32>
    %cst_192 = arith.constant 1.000000e+00 : f32
    %539 = vector.broadcast %cst_192 : f32 to vector<8x128xf32>
    %540 = arith.subf %539, %532 : vector<8x128xf32>
    %541 = arith.mulf %540, %538 : vector<8x128xf32>
    %542 = arith.mulf %532, %486 : vector<8x128xf32>
    %543 = arith.addf %541, %542 : vector<8x128xf32>
    %c4_193 = arith.constant 4 : index
    %c0_194 = arith.constant 0 : index
    %c0_195 = arith.constant 0 : index
    %544 = vector.load %arg0[%c4_193, %c0_194, %c0_195] : memref<6x8x128xf32, #tpu.memory_space<vmem>>, vector<1x8x128xf32>
    %545 = vector.shape_cast %544 : vector<1x8x128xf32> to vector<8x128xf32>
    %cst_196 = arith.constant dense<0.000000e+00> : vector<8x128xf32>
    %546 = tpu.matmul %543, %3, %cst_196 {dimension_numbers = #tpu.dot_dimension_numbers<[1], [0], [0], [1], [0, 0, 1, 1], [], []>} : vector<8x128xf32>, vector<128x128xf32>, vector<8x128xf32> -> vector<8x128xf32>
    %547 = arith.addf %545, %546 : vector<8x128xf32>
    %cst_197 = arith.constant dense<0xFF800000> : vector<8xf32>
    %548 = vector.multi_reduction <maximumf>, %547, %cst_197 [1] : vector<8x128xf32> to vector<8xf32>
    %549 = vector.shape_cast %548 : vector<8xf32> to vector<8x1xf32>
    %550 = vector.broadcast %549 : vector<8x1xf32> to vector<8x128xf32>
    %551 = arith.subf %547, %550 : vector<8x128xf32>
    %552 = math.exp %551 : vector<8x128xf32>
    %cst_198 = arith.constant dense<0.000000e+00> : vector<8xf32>
    %553 = vector.multi_reduction <add>, %552, %cst_198 [1] : vector<8x128xf32> to vector<8xf32>
    %554 = vector.shape_cast %553 : vector<8xf32> to vector<8x1xf32>
    %555 = vector.broadcast %554 : vector<8x1xf32> to vector<8x128xf32>
    %556 = arith.divf %552, %555 : vector<8x128xf32>
    %c4_199 = arith.constant 4 : index
    %c0_200 = arith.constant 0 : index
    %c0_201 = arith.constant 0 : index
    %557 = vector.load %arg15[%c4_199, %c0_200, %c0_201] : memref<6x8x128xf32, #tpu.memory_space<vmem>>, vector<1x8x128xf32>
    %558 = vector.shape_cast %557 : vector<1x8x128xf32> to vector<8x128xf32>
    %559 = vector.shape_cast %556 : vector<8x128xf32> to vector<1x8x128xf32>
    tpu.vector_store %arg15[%c4_199, %c0_200, %c0_201], %559 {strides = array<i32>} : memref<6x8x128xf32, #tpu.memory_space<vmem>>, vector<1x8x128xf32>,
    %560 = vector.extract_strided_slice %556 {offsets = [0, 0], sizes = [8, 8], strides = [1, 1]} : vector<8x128xf32> to vector<8x8xf32>
    %561 = tpu.transpose %560, [1, 0] : vector<8x8xf32> -> vector<8x8xf32>
    %562 = vector.shape_cast %561 : vector<8x8xf32> to vector<8x8x1xf32>
    %563 = vector.broadcast %562 : vector<8x8x1xf32> to vector<8x8x128xf32>
    %564 = arith.mulf %563, %314 : vector<8x8x128xf32>
    %cst_202 = arith.constant dense<0.000000e+00> : vector<8x128xf32>
    %565 = vector.multi_reduction <add>, %564, %cst_202 [0] : vector<8x8x128xf32> to vector<8x128xf32>
    %c4_203 = arith.constant 4 : index
    %c0_204 = arith.constant 0 : index
    %c0_205 = arith.constant 0 : index
    %566 = vector.load %arg1[%c4_203, %c0_204, %c0_205] : memref<6x8x128xf32, #tpu.memory_space<vmem>>, vector<1x8x128xf32>
    %567 = vector.shape_cast %566 : vector<1x8x128xf32> to vector<8x128xf32>
    %568 = arith.addf %567, %565 : vector<8x128xf32>
    %cst_206 = arith.constant 0.000000e+00 : f32
    %569 = vector.broadcast %cst_206 : f32 to vector<8x128xf32>
    %570 = arith.maximumf %568, %569 : vector<8x128xf32>
    %cst_207 = arith.constant dense<0.000000e+00> : vector<8x384xf32>
    %571 = tpu.matmul %570, %1, %cst_207 {dimension_numbers = #tpu.dot_dimension_numbers<[1], [0], [0], [1], [0, 0, 1, 1], [], []>} : vector<8x128xf32>, vector<128x384xf32>, vector<8x384xf32> -> vector<8x384xf32>
    %572 = arith.addf %571, %13 : vector<8x384xf32>
    %cst_208 = arith.constant dense<0.000000e+00> : vector<8x384xf32>
    %573 = tpu.matmul %543, %2, %cst_208 {dimension_numbers = #tpu.dot_dimension_numbers<[1], [0], [0], [1], [0, 0, 1, 1], [], []>} : vector<8x128xf32>, vector<128x384xf32>, vector<8x384xf32> -> vector<8x384xf32>
    %574 = vector.extract_strided_slice %572 {offsets = [0, 0], sizes = [8, 128], strides = [1, 1]} : vector<8x384xf32> to vector<8x128xf32>
    %575 = vector.extract_strided_slice %573 {offsets = [0, 0], sizes = [8, 128], strides = [1, 1]} : vector<8x384xf32> to vector<8x128xf32>
    %576 = arith.addf %574, %575 : vector<8x128xf32>
    %577 = arith.negf %576 : vector<8x128xf32>
    %578 = math.exp %577 : vector<8x128xf32>
    %cst_209 = arith.constant 1.000000e+00 : f32
    %579 = vector.broadcast %cst_209 : f32 to vector<8x128xf32>
    %580 = arith.addf %579, %578 : vector<8x128xf32>
    %581 = arith.divf %579, %580 : vector<8x128xf32>
    %582 = vector.extract_strided_slice %572 {offsets = [0, 128], sizes = [8, 128], strides = [1, 1]} : vector<8x384xf32> to vector<8x128xf32>
    %583 = vector.extract_strided_slice %573 {offsets = [0, 128], sizes = [8, 128], strides = [1, 1]} : vector<8x384xf32> to vector<8x128xf32>
    %584 = arith.addf %582, %583 : vector<8x128xf32>
    %585 = arith.negf %584 : vector<8x128xf32>
    %586 = math.exp %585 : vector<8x128xf32>
    %cst_210 = arith.constant 1.000000e+00 : f32
    %587 = vector.broadcast %cst_210 : f32 to vector<8x128xf32>
    %588 = arith.addf %587, %586 : vector<8x128xf32>
    %589 = arith.divf %587, %588 : vector<8x128xf32>
    %590 = vector.extract_strided_slice %572 {offsets = [0, 256], sizes = [8, 128], strides = [1, 1]} : vector<8x384xf32> to vector<8x128xf32>
    %591 = vector.extract_strided_slice %573 {offsets = [0, 256], sizes = [8, 128], strides = [1, 1]} : vector<8x384xf32> to vector<8x128xf32>
    %592 = arith.addf %591, %10 : vector<8x128xf32>
    %593 = arith.mulf %581, %592 : vector<8x128xf32>
    %594 = arith.addf %590, %593 : vector<8x128xf32>
    %595 = math.tanh %594 : vector<8x128xf32>
    %cst_211 = arith.constant 1.000000e+00 : f32
    %596 = vector.broadcast %cst_211 : f32 to vector<8x128xf32>
    %597 = arith.subf %596, %589 : vector<8x128xf32>
    %598 = arith.mulf %597, %595 : vector<8x128xf32>
    %599 = arith.mulf %589, %543 : vector<8x128xf32>
    %600 = arith.addf %598, %599 : vector<8x128xf32>
    %c5_212 = arith.constant 5 : index
    %c0_213 = arith.constant 0 : index
    %c0_214 = arith.constant 0 : index
    %601 = vector.load %arg0[%c5_212, %c0_213, %c0_214] : memref<6x8x128xf32, #tpu.memory_space<vmem>>, vector<1x8x128xf32>
    %602 = vector.shape_cast %601 : vector<1x8x128xf32> to vector<8x128xf32>
    %cst_215 = arith.constant dense<0.000000e+00> : vector<8x128xf32>
    %603 = tpu.matmul %600, %3, %cst_215 {dimension_numbers = #tpu.dot_dimension_numbers<[1], [0], [0], [1], [0, 0, 1, 1], [], []>} : vector<8x128xf32>, vector<128x128xf32>, vector<8x128xf32> -> vector<8x128xf32>
    %604 = arith.addf %602, %603 : vector<8x128xf32>
    %cst_216 = arith.constant dense<0xFF800000> : vector<8xf32>
    %605 = vector.multi_reduction <maximumf>, %604, %cst_216 [1] : vector<8x128xf32> to vector<8xf32>
    %606 = vector.shape_cast %605 : vector<8xf32> to vector<8x1xf32>
    %607 = vector.broadcast %606 : vector<8x1xf32> to vector<8x128xf32>
    %608 = arith.subf %604, %607 : vector<8x128xf32>
    %609 = math.exp %608 : vector<8x128xf32>
    %cst_217 = arith.constant dense<0.000000e+00> : vector<8xf32>
    %610 = vector.multi_reduction <add>, %609, %cst_217 [1] : vector<8x128xf32> to vector<8xf32>
    %611 = vector.shape_cast %610 : vector<8xf32> to vector<8x1xf32>
    %612 = vector.broadcast %611 : vector<8x1xf32> to vector<8x128xf32>
    %613 = arith.divf %609, %612 : vector<8x128xf32>
    %c5_218 = arith.constant 5 : index
    %c0_219 = arith.constant 0 : index
    %c0_220 = arith.constant 0 : index
    %614 = vector.load %arg15[%c5_218, %c0_219, %c0_220] : memref<6x8x128xf32, #tpu.memory_space<vmem>>, vector<1x8x128xf32>
    %615 = vector.shape_cast %614 : vector<1x8x128xf32> to vector<8x128xf32>
    %616 = vector.shape_cast %613 : vector<8x128xf32> to vector<1x8x128xf32>
    tpu.vector_store %arg15[%c5_218, %c0_219, %c0_220], %616 {strides = array<i32>} : memref<6x8x128xf32, #tpu.memory_space<vmem>>, vector<1x8x128xf32>,
    %617 = vector.extract_strided_slice %613 {offsets = [0, 0], sizes = [8, 8], strides = [1, 1]} : vector<8x128xf32> to vector<8x8xf32>
    %618 = tpu.transpose %617, [1, 0] : vector<8x8xf32> -> vector<8x8xf32>
    %619 = vector.shape_cast %618 : vector<8x8xf32> to vector<8x8x1xf32>
    %620 = vector.broadcast %619 : vector<8x8x1xf32> to vector<8x8x128xf32>
    %621 = arith.mulf %620, %314 : vector<8x8x128xf32>
    %cst_221 = arith.constant dense<0.000000e+00> : vector<8x128xf32>
    %622 = vector.multi_reduction <add>, %621, %cst_221 [0] : vector<8x8x128xf32> to vector<8x128xf32>
    %c5_222 = arith.constant 5 : index
    %c0_223 = arith.constant 0 : index
    %c0_224 = arith.constant 0 : index
    %623 = vector.load %arg1[%c5_222, %c0_223, %c0_224] : memref<6x8x128xf32, #tpu.memory_space<vmem>>, vector<1x8x128xf32>
    %624 = vector.shape_cast %623 : vector<1x8x128xf32> to vector<8x128xf32>
    %625 = arith.addf %624, %622 : vector<8x128xf32>
    %cst_225 = arith.constant 0.000000e+00 : f32
    %626 = vector.broadcast %cst_225 : f32 to vector<8x128xf32>
    %627 = arith.maximumf %625, %626 : vector<8x128xf32>
    %cst_226 = arith.constant dense<0.000000e+00> : vector<8x384xf32>
    %628 = tpu.matmul %627, %1, %cst_226 {dimension_numbers = #tpu.dot_dimension_numbers<[1], [0], [0], [1], [0, 0, 1, 1], [], []>} : vector<8x128xf32>, vector<128x384xf32>, vector<8x384xf32> -> vector<8x384xf32>
    %629 = arith.addf %628, %13 : vector<8x384xf32>
    %cst_227 = arith.constant dense<0.000000e+00> : vector<8x384xf32>
    %630 = tpu.matmul %600, %2, %cst_227 {dimension_numbers = #tpu.dot_dimension_numbers<[1], [0], [0], [1], [0, 0, 1, 1], [], []>} : vector<8x128xf32>, vector<128x384xf32>, vector<8x384xf32> -> vector<8x384xf32>
    %631 = vector.extract_strided_slice %629 {offsets = [0, 0], sizes = [8, 128], strides = [1, 1]} : vector<8x384xf32> to vector<8x128xf32>
    %632 = vector.extract_strided_slice %630 {offsets = [0, 0], sizes = [8, 128], strides = [1, 1]} : vector<8x384xf32> to vector<8x128xf32>
    %633 = arith.addf %631, %632 : vector<8x128xf32>
    %634 = arith.negf %633 : vector<8x128xf32>
    %635 = math.exp %634 : vector<8x128xf32>
    %cst_228 = arith.constant 1.000000e+00 : f32
    %636 = vector.broadcast %cst_228 : f32 to vector<8x128xf32>
    %637 = arith.addf %636, %635 : vector<8x128xf32>
    %638 = arith.divf %636, %637 : vector<8x128xf32>
    %639 = vector.extract_strided_slice %629 {offsets = [0, 128], sizes = [8, 128], strides = [1, 1]} : vector<8x384xf32> to vector<8x128xf32>
    %640 = vector.extract_strided_slice %630 {offsets = [0, 128], sizes = [8, 128], strides = [1, 1]} : vector<8x384xf32> to vector<8x128xf32>
    %641 = arith.addf %639, %640 : vector<8x128xf32>
    %642 = arith.negf %641 : vector<8x128xf32>
    %643 = math.exp %642 : vector<8x128xf32>
    %cst_229 = arith.constant 1.000000e+00 : f32
    %644 = vector.broadcast %cst_229 : f32 to vector<8x128xf32>
    %645 = arith.addf %644, %643 : vector<8x128xf32>
    %646 = arith.divf %644, %645 : vector<8x128xf32>
    %647 = vector.extract_strided_slice %629 {offsets = [0, 256], sizes = [8, 128], strides = [1, 1]} : vector<8x384xf32> to vector<8x128xf32>
    %648 = vector.extract_strided_slice %630 {offsets = [0, 256], sizes = [8, 128], strides = [1, 1]} : vector<8x384xf32> to vector<8x128xf32>
    %649 = arith.addf %648, %10 : vector<8x128xf32>
    %650 = arith.mulf %638, %649 : vector<8x128xf32>
    %651 = arith.addf %647, %650 : vector<8x128xf32>
    %652 = math.tanh %651 : vector<8x128xf32>
    %cst_230 = arith.constant 1.000000e+00 : f32
    %653 = vector.broadcast %cst_230 : f32 to vector<8x128xf32>
    %654 = arith.subf %653, %646 : vector<8x128xf32>
    %655 = arith.mulf %654, %652 : vector<8x128xf32>
    %656 = arith.mulf %646, %600 : vector<8x128xf32>
    %657 = arith.addf %655, %656 : vector<8x128xf32>
    %c0_231 = arith.constant 0 : index
    %c0_232 = arith.constant 0 : index
    %658 = vector.load %arg12[%c0_231, %c0_232] : memref<128x128xf32, #tpu.memory_space<vmem>>, vector<128x128xf32>
    %cst_233 = arith.constant dense<0.000000e+00> : vector<8x128xf32>
    %659 = tpu.matmul %657, %658, %cst_233 {dimension_numbers = #tpu.dot_dimension_numbers<[1], [0], [0], [1], [0, 0, 1, 1], [], []>} : vector<8x128xf32>, vector<128x128xf32>, vector<8x128xf32> -> vector<8x128xf32>
    %c0_234 = arith.constant 0 : index
    %c0_235 = arith.constant 0 : index
    %660 = vector.load %arg13[%c0_234, %c0_235] : memref<1x128xf32, #tpu.memory_space<vmem>>, vector<1x128xf32>
    %661 = vector.broadcast %660 : vector<1x128xf32> to vector<8x128xf32>
    %662 = arith.addf %659, %661 : vector<8x128xf32>
    %cst_236 = arith.constant dense<0xFF800000> : vector<8xf32>
    %663 = vector.multi_reduction <maximumf>, %662, %cst_236 [1] : vector<8x128xf32> to vector<8xf32>
    %664 = vector.shape_cast %663 : vector<8xf32> to vector<8x1xf32>
    %665 = vector.broadcast %664 : vector<8x1xf32> to vector<8x128xf32>
    %666 = arith.subf %662, %665 : vector<8x128xf32>
    %667 = math.exp %666 : vector<8x128xf32>
    %cst_237 = arith.constant dense<0.000000e+00> : vector<8xf32>
    %668 = vector.multi_reduction <add>, %667, %cst_237 [1] : vector<8x128xf32> to vector<8xf32>
    %669 = vector.shape_cast %668 : vector<8xf32> to vector<8x1xf32>
    %670 = math.log %669 : vector<8x1xf32>
    %671 = arith.addf %670, %664 : vector<8x1xf32>
    %672 = vector.broadcast %671 : vector<8x1xf32> to vector<8x128xf32>
    %673 = arith.subf %662, %672 : vector<8x128xf32>
    %c0_238 = arith.constant 0 : index
    %c0_239 = arith.constant 0 : index
    %674 = vector.load %arg14[%c0_238, %c0_239] : memref<8x128xf32, #tpu.memory_space<vmem>>, vector<8x128xf32>
    tpu.vector_store %arg14[%c0_238, %c0_239], %673 {strides = array<i32>} : memref<8x128xf32, #tpu.memory_space<vmem>>, vector<8x128xf32>,
    return
  }
}

</mosaic_0001>

<llo_original>
// kernel: toy_embed_rnn_sequence.1
$region0: #{toy_embed_rnn_sequence.1}
  #allocation0 [shape = 'u32[]', space=smem, size = 0x4, offset = 0x4, fixed_abs, tag = 'smem constant byte address 0x4 - core index']
  #allocation1 [shape = 'u32[144,128]{1,0:T(1,128)}', space=vmem, size = 0x12000, scoped, tag = 'internal scratch']
  #allocation2 [shape = 'f32[8,8,128]{2,1,0:T(8,128)}', space=vmem, size = 0x8000, scoped, tag = 'scratch operand']
  %s0 = inlined_call_operand.vmem [shape: f32[6,8,128], index: 0, kind: input, shape index: {}]
  %s1 = inlined_call_operand.vmem [shape: f32[6,8,128], index: 1, kind: input, shape index: {}]
  %s2 = inlined_call_operand.vmem [shape: f32[8,8,384], index: 2, kind: input, shape index: {}]
  %s3 = inlined_call_operand.vmem [shape: f32[8,8,1], index: 3, kind: input, shape index: {}]
  %s4 = inlined_call_operand.vmem [shape: f32[128,384], index: 4, kind: input, shape index: {}]
  %s5 = inlined_call_operand.vmem [shape: f32[1,128], index: 5, kind: input, shape index: {}]
  %s6 = inlined_call_operand.vmem [shape: f32[128,384], index: 6, kind: input, shape index: {}]
  %s7 = inlined_call_operand.vmem [shape: f32[1,384], index: 7, kind: input, shape index: {}]
  %s8 = inlined_call_operand.vmem [shape: f32[128,384], index: 8, kind: input, shape index: {}]
  %s9 = inlined_call_operand.vmem [shape: f32[1,128], index: 9, kind: input, shape index: {}]
  %s10 = inlined_call_operand.vmem [shape: f32[128,128], index: 10, kind: input, shape index: {}]
  %s11 = inlined_call_operand.vmem [shape: f32[128,128], index: 11, kind: input, shape index: {}]
  %s12 = inlined_call_operand.vmem [shape: f32[128,128], index: 12, kind: input, shape index: {}]
  %s13 = inlined_call_operand.vmem [shape: f32[1,128], index: 13, kind: input, shape index: {}]
  %s14 = inlined_call_operand.vmem [shape: f32[8,128], index: 14, kind: output, shape index: {0}]
  %s15 = inlined_call_operand.vmem [shape: f32[6,8,128], index: 15, kind: output, shape index: {1}]
  %16 = xla_tuple %s14, %s15
  %s17 = sld [smem:[#allocation0]]
  $region74: #{toy_embed_rnn_sequence.1} parent=0
    _
  %s19 = ssub.s32 1, %s17
  %s20 = scalar_select 0, %s19, %s17
  // Predicated region
  $region2: #{toy_embed_rnn_sequence.1} parent=0 // pred_check
    _
  $region3: #{toy_embed_rnn_sequence.1} parent=0 // pred_check_branch
    %22 = sbr.rel (0) target = $region5
  $region4: #{toy_embed_rnn_sequence.1} parent=0 // pred_region
    _
  $region5: #{toy_embed_rnn_sequence.1} parent=0 // pred_fallthru
    _
  // Predicated region
  $region6: #{toy_embed_rnn_sequence.1} parent=0 // pred_check
    _
  $region7: #{toy_embed_rnn_sequence.1} parent=0 // pred_check_branch
    %24 = sbr.rel (0) target = $region9
  $region8: #{toy_embed_rnn_sequence.1} parent=0 // pred_region
    _
  $region9: #{toy_embed_rnn_sequence.1} parent=0 // pred_fallthru
    _
  // Predicated region
  $region10: #{toy_embed_rnn_sequence.1} parent=0 // pred_check
    _
  $region11: #{toy_embed_rnn_sequence.1} parent=0 // pred_check_branch
    %26 = sbr.rel (0) target = $region13
  $region12: #{toy_embed_rnn_sequence.1} parent=0 // pred_region
    _
  $region13: #{toy_embed_rnn_sequence.1} parent=0 // pred_fallthru
    _
  // Predicated region
  $region14: #{toy_embed_rnn_sequence.1} parent=0 // pred_check
    _
  $region15: #{toy_embed_rnn_sequence.1} parent=0 // pred_check_branch
    %28 = sbr.rel (0) target = $region17
  $region16: #{toy_embed_rnn_sequence.1} parent=0 // pred_region
    _
  $region17: #{toy_embed_rnn_sequence.1} parent=0 // pred_fallthru
    _
  // Predicated region
  $region18: #{toy_embed_rnn_sequence.1} parent=0 // pred_check
    _
  $region19: #{toy_embed_rnn_sequence.1} parent=0 // pred_check_branch
    %30 = sbr.rel (0) target = $region21
  $region20: #{toy_embed_rnn_sequence.1} parent=0 // pred_region
    _
  $region21: #{toy_embed_rnn_sequence.1} parent=0 // pred_fallthru
    _
  // Predicated region
  $region22: #{toy_embed_rnn_sequence.1} parent=0 // pred_check
    _
  $region23: #{toy_embed_rnn_sequence.1} parent=0 // pred_check_branch
    %32 = sbr.rel (0) target = $region25
  $region24: #{toy_embed_rnn_sequence.1} parent=0 // pred_region
    _
  $region25: #{toy_embed_rnn_sequence.1} parent=0 // pred_fallthru
    _
  // Predicated region
  $region26: #{toy_embed_rnn_sequence.1} parent=0 // pred_check
    _
  $region27: #{toy_embed_rnn_sequence.1} parent=0 // pred_check_branch
    %34 = sbr.rel (0) target = $region29
  $region28: #{toy_embed_rnn_sequence.1} parent=0 // pred_region
    _
  $region29: #{toy_embed_rnn_sequence.1} parent=0 // pred_fallthru
    _
  // Predicated region
  $region30: #{toy_embed_rnn_sequence.1} parent=0 // pred_check
    _
  $region31: #{toy_embed_rnn_sequence.1} parent=0 // pred_check_branch
    %36 = sbr.rel (0) target = $region33
  $region32: #{toy_embed_rnn_sequence.1} parent=0 // pred_region
    _
  $region33: #{toy_embed_rnn_sequence.1} parent=0 // pred_fallthru
    _
  // Predicated region
  $region34: #{toy_embed_rnn_sequence.1} parent=0 // pred_check
    _
  $region35: #{toy_embed_rnn_sequence.1} parent=0 // pred_check_branch
    %38 = sbr.rel (0) target = $region37
  $region36: #{toy_embed_rnn_sequence.1} parent=0 // pred_region
    _
  $region37: #{toy_embed_rnn_sequence.1} parent=0 // pred_fallthru
    _
  // Predicated region
  $region38: #{toy_embed_rnn_sequence.1} parent=0 // pred_check
    _
  $region39: #{toy_embed_rnn_sequence.1} parent=0 // pred_check_branch
    %40 = sbr.rel (0) target = $region41
  $region40: #{toy_embed_rnn_sequence.1} parent=0 // pred_region
    _
  $region41: #{toy_embed_rnn_sequence.1} parent=0 // pred_fallthru
    _
  // Predicated region
  $region42: #{toy_embed_rnn_sequence.1} parent=0 // pred_check
    _
  $region43: #{toy_embed_rnn_sequence.1} parent=0 // pred_check_branch
    %42 = sbr.rel (0) target = $region45
  $region44: #{toy_embed_rnn_sequence.1} parent=0 // pred_region
    _
  $region45: #{toy_embed_rnn_sequence.1} parent=0 // pred_fallthru
    _
  // Predicated region
  $region46: #{toy_embed_rnn_sequence.1} parent=0 // pred_check
    _
  $region47: #{toy_embed_rnn_sequence.1} parent=0 // pred_check_branch
    %44 = sbr.rel (0) target = $region49
  $region48: #{toy_embed_rnn_sequence.1} parent=0 // pred_region
    _
  $region49: #{toy_embed_rnn_sequence.1} parent=0 // pred_fallthru
    _
  // Predicated region
  $region50: #{toy_embed_rnn_sequence.1} parent=0 // pred_check
    _
  $region51: #{toy_embed_rnn_sequence.1} parent=0 // pred_check_branch
    %46 = sbr.rel (0) target = $region53
  $region52: #{toy_embed_rnn_sequence.1} parent=0 // pred_region
    _
  $region53: #{toy_embed_rnn_sequence.1} parent=0 // pred_fallthru
    _
  // Predicated region
  $region54: #{toy_embed_rnn_sequence.1} parent=0 // pred_check
    _
  $region55: #{toy_embed_rnn_sequence.1} parent=0 // pred_check_branch
    %48 = sbr.rel (0) target = $region57
  $region56: #{toy_embed_rnn_sequence.1} parent=0 // pred_region
    _
  $region57: #{toy_embed_rnn_sequence.1} parent=0 // pred_fallthru
    _
  %v49 = vld [vmem:[%s4] sm:$0xff]
  %v50 = vld [vmem:[%s4 + $0x8] sm:$0xff]
  %v51 = vld [vmem:[%s4 + $0x10] sm:$0xff]
  %v52 = vld [vmem:[%s4 + $0x18] sm:$0xff]
  %v53 = vld [vmem:[%s4 + $0x20] sm:$0xff]
  %v54 = vld [vmem:[%s4 + $0x28] sm:$0xff]
  %v55 = vld [vmem:[%s4 + $0x30] sm:$0xff]
  %v56 = vld [vmem:[%s4 + $0x38] sm:$0xff]
  %v57 = vld [vmem:[%s4 + $0x40] sm:$0xff]
  %v58 = vld [vmem:[%s4 + $0x48] sm:$0xff]
  %v59 = vld [vmem:[%s4 + $0x50] sm:$0xff]
  %v60 = vld [vmem:[%s4 + $0x58] sm:$0xff]
  %v61 = vld [vmem:[%s4 + $0x60] sm:$0xff]
  %v62 = vld [vmem:[%s4 + $0x68] sm:$0xff]
  %v63 = vld [vmem:[%s4 + $0x70] sm:$0xff]
  %v64 = vld [vmem:[%s4 + $0x78] sm:$0xff]
  %v65 = vld [vmem:[%s4 + $0x80] sm:$0xff]
  %v66 = vld [vmem:[%s4 + $0x88] sm:$0xff]
  %v67 = vld [vmem:[%s4 + $0x90] sm:$0xff]
  %v68 = vld [vmem:[%s4 + $0x98] sm:$0xff]
  %v69 = vld [vmem:[%s4 + $0xa0] sm:$0xff]
  %v70 = vld [vmem:[%s4 + $0xa8] sm:$0xff]
  %v71 = vld [vmem:[%s4 + $0xb0] sm:$0xff]
  %v72 = vld [vmem:[%s4 + $0xb8] sm:$0xff]
  %v73 = vld [vmem:[%s4 + $0xc0] sm:$0xff]
  %v74 = vld [vmem:[%s4 + $0xc8] sm:$0xff]
  %v75 = vld [vmem:[%s4 + $0xd0] sm:$0xff]
  %v76 = vld [vmem:[%s4 + $0xd8] sm:$0xff]
  %v77 = vld [vmem:[%s4 + $0xe0] sm:$0xff]
  %v78 = vld [vmem:[%s4 + $0xe8] sm:$0xff]
  %v79 = vld [vmem:[%s4 + $0xf0] sm:$0xff]
  %v80 = vld [vmem:[%s4 + $0xf8] sm:$0xff]
  %v81 = vld [vmem:[%s4 + $0x100] sm:$0xff]
  %v82 = vld [vmem:[%s4 + $0x108] sm:$0xff]
  %v83 = vld [vmem:[%s4 + $0x110] sm:$0xff]
  %v84 = vld [vmem:[%s4 + $0x118] sm:$0xff]
  %v85 = vld [vmem:[%s4 + $0x120] sm:$0xff]
  %v86 = vld [vmem:[%s4 + $0x128] sm:$0xff]
  %v87 = vld [vmem:[%s4 + $0x130] sm:$0xff]
  %v88 = vld [vmem:[%s4 + $0x138] sm:$0xff]
  %v89 = vld [vmem:[%s4 + $0x140] sm:$0xff]
  %v90 = vld [vmem:[%s4 + $0x148] sm:$0xff]
  %v91 = vld [vmem:[%s4 + $0x150] sm:$0xff]
  %v92 = vld [vmem:[%s4 + $0x158] sm:$0xff]
  %v93 = vld [vmem:[%s4 + $0x160] sm:$0xff]
  %v94 = vld [vmem:[%s4 + $0x168] sm:$0xff]
  %v95 = vld [vmem:[%s4 + $0x170] sm:$0xff]
  %v96 = vld [vmem:[%s4 + $0x178] sm:$0xff]
  %v97 = vld [vmem:[%s6] sm:$0xff]
  %v98 = vld [vmem:[%s6 + $0x8] sm:$0xff]
  %v99 = vld [vmem:[%s6 + $0x10] sm:$0xff]
  %v100 = vld [vmem:[%s6 + $0x18] sm:$0xff]
  %v101 = vld [vmem:[%s6 + $0x20] sm:$0xff]
  %v102 = vld [vmem:[%s6 + $0x28] sm:$0xff]
  %v103 = vld [vmem:[%s6 + $0x30] sm:$0xff]
  %v104 = vld [vmem:[%s6 + $0x38] sm:$0xff]
  %v105 = vld [vmem:[%s6 + $0x40] sm:$0xff]
  %v106 = vld [vmem:[%s6 + $0x48] sm:$0xff]
  %v107 = vld [vmem:[%s6 + $0x50] sm:$0xff]
  %v108 = vld [vmem:[%s6 + $0x58] sm:$0xff]
  %v109 = vld [vmem:[%s6 + $0x60] sm:$0xff]
  %v110 = vld [vmem:[%s6 + $0x68] sm:$0xff]
  %v111 = vld [vmem:[%s6 + $0x70] sm:$0xff]
  %v112 = vld [vmem:[%s6 + $0x78] sm:$0xff]
  %v113 = vld [vmem:[%s6 + $0x80] sm:$0xff]
  %v114 = vld [vmem:[%s6 + $0x88] sm:$0xff]
  %v115 = vld [vmem:[%s6 + $0x90] sm:$0xff]
  %v116 = vld [vmem:[%s6 + $0x98] sm:$0xff]
  %v117 = vld [vmem:[%s6 + $0xa0] sm:$0xff]
  %v118 = vld [vmem:[%s6 + $0xa8] sm:$0xff]
  %v119 = vld [vmem:[%s6 + $0xb0] sm:$0xff]
  %v120 = vld [vmem:[%s6 + $0xb8] sm:$0xff]
  %v121 = vld [vmem:[%s6 + $0xc0] sm:$0xff]
  %v122 = vld [vmem:[%s6 + $0xc8] sm:$0xff]
  %v123 = vld [vmem:[%s6 + $0xd0] sm:$0xff]
  %v124 = vld [vmem:[%s6 + $0xd8] sm:$0xff]
  %v125 = vld [vmem:[%s6 + $0xe0] sm:$0xff]
  %v126 = vld [vmem:[%s6 + $0xe8] sm:$0xff]
  %v127 = vld [vmem:[%s6 + $0xf0] sm:$0xff]
  %v128 = vld [vmem:[%s6 + $0xf8] sm:$0xff]
  %v129 = vld [vmem:[%s6 + $0x100] sm:$0xff]
  %v130 = vld [vmem:[%s6 + $0x108] sm:$0xff]
  %v131 = vld [vmem:[%s6 + $0x110] sm:$0xff]
  %v132 = vld [vmem:[%s6 + $0x118] sm:$0xff]
  %v133 = vld [vmem:[%s6 + $0x120] sm:$0xff]
  %v134 = vld [vmem:[%s6 + $0x128] sm:$0xff]
  %v135 = vld [vmem:[%s6 + $0x130] sm:$0xff]
  %v136 = vld [vmem:[%s6 + $0x138] sm:$0xff]
  %v137 = vld [vmem:[%s6 + $0x140] sm:$0xff]
  %v138 = vld [vmem:[%s6 + $0x148] sm:$0xff]
  %v139 = vld [vmem:[%s6 + $0x150] sm:$0xff]
  %v140 = vld [vmem:[%s6 + $0x158] sm:$0xff]
  %v141 = vld [vmem:[%s6 + $0x160] sm:$0xff]
  %v142 = vld [vmem:[%s6 + $0x168] sm:$0xff]
  %v143 = vld [vmem:[%s6 + $0x170] sm:$0xff]
  %v144 = vld [vmem:[%s6 + $0x178] sm:$0xff]
  %v145 = vld [vmem:[%s8] sm:$0xff]
  %v146 = vld [vmem:[%s8 + $0x8] sm:$0xff]
  %v147 = vld [vmem:[%s8 + $0x10] sm:$0xff]
  %v148 = vld [vmem:[%s8 + $0x18] sm:$0xff]
  %v149 = vld [vmem:[%s8 + $0x20] sm:$0xff]
  %v150 = vld [vmem:[%s8 + $0x28] sm:$0xff]
  %v151 = vld [vmem:[%s8 + $0x30] sm:$0xff]
  %v152 = vld [vmem:[%s8 + $0x38] sm:$0xff]
  %v153 = vld [vmem:[%s8 + $0x40] sm:$0xff]
  %v154 = vld [vmem:[%s8 + $0x48] sm:$0xff]
  %v155 = vld [vmem:[%s8 + $0x50] sm:$0xff]
  %v156 = vld [vmem:[%s8 + $0x58] sm:$0xff]
  %v157 = vld [vmem:[%s8 + $0x60] sm:$0xff]
  %v158 = vld [vmem:[%s8 + $0x68] sm:$0xff]
  %v159 = vld [vmem:[%s8 + $0x70] sm:$0xff]
  %v160 = vld [vmem:[%s8 + $0x78] sm:$0xff]
  %v161 = vld [vmem:[%s8 + $0x80] sm:$0xff]
  %v162 = vld [vmem:[%s8 + $0x88] sm:$0xff]
  %v163 = vld [vmem:[%s8 + $0x90] sm:$0xff]
  %v164 = vld [vmem:[%s8 + $0x98] sm:$0xff]
  %v165 = vld [vmem:[%s8 + $0xa0] sm:$0xff]
  %v166 = vld [vmem:[%s8 + $0xa8] sm:$0xff]
  %v167 = vld [vmem:[%s8 + $0xb0] sm:$0xff]
  %v168 = vld [vmem:[%s8 + $0xb8] sm:$0xff]
  %v169 = vld [vmem:[%s8 + $0xc0] sm:$0xff]
  %v170 = vld [vmem:[%s8 + $0xc8] sm:$0xff]
  %v171 = vld [vmem:[%s8 + $0xd0] sm:$0xff]
  %v172 = vld [vmem:[%s8 + $0xd8] sm:$0xff]
  %v173 = vld [vmem:[%s8 + $0xe0] sm:$0xff]
  %v174 = vld [vmem:[%s8 + $0xe8] sm:$0xff]
  %v175 = vld [vmem:[%s8 + $0xf0] sm:$0xff]
  %v176 = vld [vmem:[%s8 + $0xf8] sm:$0xff]
  %v177 = vld [vmem:[%s8 + $0x100] sm:$0xff]
  %v178 = vld [vmem:[%s8 + $0x108] sm:$0xff]
  %v179 = vld [vmem:[%s8 + $0x110] sm:$0xff]
  %v180 = vld [vmem:[%s8 + $0x118] sm:$0xff]
  %v181 = vld [vmem:[%s8 + $0x120] sm:$0xff]
  %v182 = vld [vmem:[%s8 + $0x128] sm:$0xff]
  %v183 = vld [vmem:[%s8 + $0x130] sm:$0xff]
  %v184 = vld [vmem:[%s8 + $0x138] sm:$0xff]
  %v185 = vld [vmem:[%s8 + $0x140] sm:$0xff]
  %v186 = vld [vmem:[%s8 + $0x148] sm:$0xff]
  %v187 = vld [vmem:[%s8 + $0x150] sm:$0xff]
  %v188 = vld [vmem:[%s8 + $0x158] sm:$0xff]
  %v189 = vld [vmem:[%s8 + $0x160] sm:$0xff]
  %v190 = vld [vmem:[%s8 + $0x168] sm:$0xff]
  %v191 = vld [vmem:[%s8 + $0x170] sm:$0xff]
  %v192 = vld [vmem:[%s8 + $0x178] sm:$0xff]
  %v193 = vld [vmem:[%s10] sm:$0xff]
  %v194 = vld [vmem:[%s10 + $0x8] sm:$0xff]
  %v195 = vld [vmem:[%s10 + $0x10] sm:$0xff]
  %v196 = vld [vmem:[%s10 + $0x18] sm:$0xff]
  %v197 = vld [vmem:[%s10 + $0x20] sm:$0xff]
  %v198 = vld [vmem:[%s10 + $0x28] sm:$0xff]
  %v199 = vld [vmem:[%s10 + $0x30] sm:$0xff]
  %v200 = vld [vmem:[%s10 + $0x38] sm:$0xff]
  %v201 = vld [vmem:[%s10 + $0x40] sm:$0xff]
  %v202 = vld [vmem:[%s10 + $0x48] sm:$0xff]
  %v203 = vld [vmem:[%s10 + $0x50] sm:$0xff]
  %v204 = vld [vmem:[%s10 + $0x58] sm:$0xff]
  %v205 = vld [vmem:[%s10 + $0x60] sm:$0xff]
  %v206 = vld [vmem:[%s10 + $0x68] sm:$0xff]
  %v207 = vld [vmem:[%s10 + $0x70] sm:$0xff]
  %v208 = vld [vmem:[%s10 + $0x78] sm:$0xff]
  %v209 = vld [vmem:[%s11] sm:$0xff]
  %v210 = vld [vmem:[%s11 + $0x8] sm:$0xff]
  %v211 = vld [vmem:[%s11 + $0x10] sm:$0xff]
  %v212 = vld [vmem:[%s11 + $0x18] sm:$0xff]
  %v213 = vld [vmem:[%s11 + $0x20] sm:$0xff]
  %v214 = vld [vmem:[%s11 + $0x28] sm:$0xff]
  %v215 = vld [vmem:[%s11 + $0x30] sm:$0xff]
  %v216 = vld [vmem:[%s11 + $0x38] sm:$0xff]
  %v217 = vld [vmem:[%s11 + $0x40] sm:$0xff]
  %v218 = vld [vmem:[%s11 + $0x48] sm:$0xff]
  %v219 = vld [vmem:[%s11 + $0x50] sm:$0xff]
  %v220 = vld [vmem:[%s11 + $0x58] sm:$0xff]
  %v221 = vld [vmem:[%s11 + $0x60] sm:$0xff]
  %v222 = vld [vmem:[%s11 + $0x68] sm:$0xff]
  %v223 = vld [vmem:[%s11 + $0x70] sm:$0xff]
  %v224 = vld [vmem:[%s11 + $0x78] sm:$0xff]
  %v225 = vld [vmem:[%s5] sm:$0x1]
  %v227 = vlaneseq
  %v228 = vshrl.u32 %v227, 7
  %v229 = vsub.s32 0, %v228
  %v230 = vrot.slane %v225, %v229
  %v232 = vld [vmem:[%s9] sm:$0x1]
  %v234 = vlaneseq
  %v235 = vshrl.u32 %v234, 7
  %v236 = vsub.s32 0, %v235
  %v237 = vrot.slane %v232, %v236
  %v239 = vld [vmem:[%s7] sm:$0x7]
  %v241 = vlaneseq
  %v242 = vshrl.u32 %v241, 7
  %v243 = vsub.s32 0, %v242
  %v244 = vrot.slane %v239, %v243
  %v245 = vlaneseq
  %v246 = vshrl.u32 %v245, 7
  %v247 = vsub.s32 1, %v246
  %v248 = vrot.slane %v239, %v247
  %v249 = vlaneseq
  %v250 = vshrl.u32 %v249, 7
  %v251 = vsub.s32 2, %v250
  %v252 = vrot.slane %v239, %v251
  %256 = vmatprep.subr.mxu0 %v95
  %257 = vmatpush1.msra.mxu0 %v94
  %258 = vmatprep.subr.mxu0 %v92
  %259 = vmatpush1.msra.mxu0 %v91
  %260 = vmatprep.subr.mxu0 %v89
  %261 = vmatpush1.msra.mxu0 %v88
  %262 = vmatprep.subr.mxu0 %v86
  %263 = vmatpush1.msra.mxu0 %v85
  %264 = vmatprep.subr.mxu0 %v83
  %265 = vmatpush1.msra.mxu0 %v82
  %266 = vmatprep.subr.mxu0 %v80
  %267 = vmatpush1.msra.mxu0 %v79
  %268 = vmatprep.subr.mxu0 %v77
  %269 = vmatpush1.msra.mxu0 %v76
  %270 = vmatprep.subr.mxu0 %v74
  %271 = vmatpush1.msra.mxu0 %v73
  %272 = vmatprep.subr.mxu0 %v71
  %273 = vmatpush1.msra.mxu0 %v70
  %274 = vmatprep.subr.mxu0 %v68
  %275 = vmatpush1.msra.mxu0 %v67
  %276 = vmatprep.subr.mxu0 %v65
  %277 = vmatpush1.msra.mxu0 %v64
  %278 = vmatprep.subr.mxu0 %v62
  %279 = vmatpush1.msra.mxu0 %v61
  %280 = vmatprep.subr.mxu0 %v59
  %281 = vmatpush1.msra.mxu0 %v58
  %282 = vmatprep.subr.mxu0 %v56
  %283 = vmatpush1.msra.mxu0 %v55
  %284 = vmatprep.subr.mxu0 %v53
  %285 = vmatpush1.msra.mxu0 %v52
  %286 = vmatprep.subr.mxu0 %v50
  %287 = vmatpush1.msra.mxu0 %v49
  %288 = vmatprep.subr.mxu0 0.0
  %289 = vmatpush2.msra.mxu0 0.0
  %290 = vmatprep.subr.mxu0 0.0
  %291 = vmatpush2.msra.mxu0 0.0
  %292 = vmatprep.subr.mxu0 0.0
  %293 = vmatpush2.msra.mxu0 0.0
  %294 = vmatprep.subr.mxu0 0.0
  %295 = vmatpush2.msra.mxu0 0.0
  %296 = vmatprep.subr.mxu0 0.0
  %297 = vmatpush2.msra.mxu0 0.0
  %298 = vmatprep.subr.mxu0 0.0
  %299 = vmatpush2.msra.mxu0 0.0
  %300 = vmatprep.subr.mxu0 0.0
  %301 = vmatpush2.msra.mxu0 0.0
  %302 = vmatprep.subr.mxu0 0.0
  %303 = vmatpush2.msra.mxu0 0.0
  %304 = vmatprep.subr.mxu0 0.0
  %305 = vmatpush2.msra.mxu0 0.0
  %306 = vmatprep.subr.mxu0 0.0
  %307 = vmatpush2.msra.mxu0 0.0
  %308 = vmatprep.subr.mxu0 0.0
  %309 = vmatpush2.msra.mxu0 0.0
  %310 = vmatprep.subr.mxu0 0.0
  %311 = vmatpush2.msra.mxu0 0.0
  %312 = vmatprep.subr.mxu0 0.0
  %313 = vmatpush2.msra.mxu0 0.0
  %314 = vmatprep.subr.mxu0 0.0
  %315 = vmatpush2.msra.mxu0 0.0
  %316 = vmatprep.subr.mxu0 0.0
  %317 = vmatpush2.msra.mxu0 0.0
  %318 = vmatprep.subr.mxu0 0.0
  %319 = vmatpush2.msra.mxu0 0.0
  %320 = vmatprep.mubr.f32.mxu0 0.0
  %321 = vmatmul.mubr.f32.gmra.mxu0 0.0
  %v322 = vpop.f32.mrf.mxu0
  %v323 = vadd.f32 0.0, %v322
  %v324 = vpop.f32.mrf.mxu0
  %v325 = vadd.f32 0.0, %v324
  %326 = vdwg.mxu0
  %327 = vmatprep.subr.mxu0 0.0
  %328 = vmatpush1.msra.mxu0 %v96
  %329 = vmatprep.subr.mxu0 0.0
  %330 = vmatpush1.msra.mxu0 %v93
  %331 = vmatprep.subr.mxu0 0.0
  %332 = vmatpush1.msra.mxu0 %v90
  %333 = vmatprep.subr.mxu0 0.0
  %334 = vmatpush1.msra.mxu0 %v87
  %335 = vmatprep.subr.mxu0 0.0
  %336 = vmatpush1.msra.mxu0 %v84
  %337 = vmatprep.subr.mxu0 0.0
  %338 = vmatpush1.msra.mxu0 %v81
  %339 = vmatprep.subr.mxu0 0.0
  %340 = vmatpush1.msra.mxu0 %v78
  %341 = vmatprep.subr.mxu0 0.0
  %342 = vmatpush1.msra.mxu0 %v75
  %343 = vmatprep.subr.mxu0 0.0
  %344 = vmatpush1.msra.mxu0 %v72
  %345 = vmatprep.subr.mxu0 0.0
  %346 = vmatpush1.msra.mxu0 %v69
  %347 = vmatprep.subr.mxu0 0.0
  %348 = vmatpush1.msra.mxu0 %v66
  %349 = vmatprep.subr.mxu0 0.0
  %350 = vmatpush1.msra.mxu0 %v63
  %351 = vmatprep.subr.mxu0 0.0
  %352 = vmatpush1.msra.mxu0 %v60
  %353 = vmatprep.subr.mxu0 0.0
  %354 = vmatpush1.msra.mxu0 %v57
  %355 = vmatprep.subr.mxu0 0.0
  %356 = vmatpush1.msra.mxu0 %v54
  %357 = vmatprep.subr.mxu0 0.0
  %358 = vmatpush1.msra.mxu0 %v51
  %359 = vmatprep.subr.mxu0 0.0
  %360 = vmatpush2.msra.mxu0 0.0
  %361 = vmatprep.subr.mxu0 0.0
  %362 = vmatpush2.msra.mxu0 0.0
  %363 = vmatprep.subr.mxu0 0.0
  %364 = vmatpush2.msra.mxu0 0.0
  %365 = vmatprep.subr.mxu0 0.0
  %366 = vmatpush2.msra.mxu0 0.0
  %367 = vmatprep.subr.mxu0 0.0
  %368 = vmatpush2.msra.mxu0 0.0
  %369 = vmatprep.subr.mxu0 0.0
  %370 = vmatpush2.msra.mxu0 0.0
  %371 = vmatprep.subr.mxu0 0.0
  %372 = vmatpush2.msra.mxu0 0.0
  %373 = vmatprep.subr.mxu0 0.0
  %374 = vmatpush2.msra.mxu0 0.0
  %375 = vmatprep.subr.mxu0 0.0
  %376 = vmatpush2.msra.mxu0 0.0
  %377 = vmatprep.subr.mxu0 0.0
  %378 = vmatpush2.msra.mxu0 0.0
  %379 = vmatprep.subr.mxu0 0.0
  %380 = vmatpush2.msra.mxu0 0.0
  %381 = vmatprep.subr.mxu0 0.0
  %382 = vmatpush2.msra.mxu0 0.0
  %383 = vmatprep.subr.mxu0 0.0
  %384 = vmatpush2.msra.mxu0 0.0
  %385 = vmatprep.subr.mxu0 0.0
  %386 = vmatpush2.msra.mxu0 0.0
  %387 = vmatprep.subr.mxu0 0.0
  %388 = vmatpush2.msra.mxu0 0.0
  %389 = vmatprep.subr.mxu0 0.0
  %390 = vmatpush2.msra.mxu0 0.0
  %391 = vmatprep.mubr.f32.mxu0 0.0
  %392 = vmatmul.mubr.f32.gmra.mxu0 0.0
  %v393 = vpop.f32.mrf.mxu0
  %v394 = vadd.f32 0.0, %v393
  %v395 = vpop.f32.mrf.mxu0
  %396 = vdwg.mxu0
  %v397 = vld [vmem:[%s2] sm:$0xff]
  %v398 = vld [vmem:[%s2 + $0x8] sm:$0xff]
  %v399 = vld [vmem:[%s2 + $0x10] sm:$0xff]
  %v400 = vadd.f32 %v397, %v323
  %v401 = vxor.u32 %v400, 2147483648
  %v402 = vmul.f32 %v401, 1.442695
  %v403 = vpow.pop %v402
  %v404 = vadd.f32 %v403, 1.0
  %v405 = vrcp.pop %v404
  %v406 = vmul.f32 1.0, %v405
  %v407 = vadd.f32 %v398, %v325
  %v408 = vxor.u32 %v407, 2147483648
  %v409 = vmul.f32 %v408, 1.442695
  %v410 = vpow.pop %v409
  %v411 = vadd.f32 %v410, 1.0
  %v412 = vrcp.pop %v411
  %v413 = vmul.f32 1.0, %v412
  %v414 = vadd.f32 %v394, %v230
  %v415 = vmul.f32 %v406, %v414
  %v416 = vadd.f32 %v399, %v415
  %v417 = vtanh.pop %v416
  %v418 = vsub.f32 1.0, %v413
  %v419 = vmul.f32 %v418, %v417
  %v420 = vmul.f32 %v413, 0.0
  %v421 = vadd.f32 %v419, %v420
  %v422 = vld [vmem:[%s3] sm:$0xff]
  %424 = vset.pattern.permute.xlu0 0
  %425 = vperm.xlu0 %424, %v422
  %v426 = vpop.permute.xlu0 %425
  %v428 = vmul.f32 %v421, %v426
  %429 = vst [vmem:[#allocation2] sm:$0xff] %v428
  %430 = vmatprep.subr.mxu0 %v95
  %431 = vmatpush1.msra.mxu0 %v94
  %432 = vmatprep.subr.mxu0 %v92
  %433 = vmatpush1.msra.mxu0 %v91
  %434 = vmatprep.subr.mxu0 %v89
  %435 = vmatpush1.msra.mxu0 %v88
  %436 = vmatprep.subr.mxu0 %v86
  %437 = vmatpush1.msra.mxu0 %v85
  %438 = vmatprep.subr.mxu0 %v83
  %439 = vmatpush1.msra.mxu0 %v82
  %440 = vmatprep.subr.mxu0 %v80
  %441 = vmatpush1.msra.mxu0 %v79
  %442 = vmatprep.subr.mxu0 %v77
  %443 = vmatpush1.msra.mxu0 %v76
  %444 = vmatprep.subr.mxu0 %v74
  %445 = vmatpush1.msra.mxu0 %v73
  %446 = vmatprep.subr.mxu0 %v71
  %447 = vmatpush1.msra.mxu0 %v70
  %448 = vmatprep.subr.mxu0 %v68
  %449 = vmatpush1.msra.mxu0 %v67
  %450 = vmatprep.subr.mxu0 %v65
  %451 = vmatpush1.msra.mxu0 %v64
  %452 = vmatprep.subr.mxu0 %v62
  %453 = vmatpush1.msra.mxu0 %v61
  %454 = vmatprep.subr.mxu0 %v59
  %455 = vmatpush1.msra.mxu0 %v58
  %456 = vmatprep.subr.mxu0 %v56
  %457 = vmatpush1.msra.mxu0 %v55
  %458 = vmatprep.subr.mxu0 %v53
  %459 = vmatpush1.msra.mxu0 %v52
  %460 = vmatprep.subr.mxu0 %v50
  %461 = vmatpush1.msra.mxu0 %v49
  %462 = vmatprep.subr.mxu0 0.0
  %463 = vmatpush2.msra.mxu0 0.0
  %464 = vmatprep.subr.mxu0 0.0
  %465 = vmatpush2.msra.mxu0 0.0
  %466 = vmatprep.subr.mxu0 0.0
  %467 = vmatpush2.msra.mxu0 0.0
  %468 = vmatprep.subr.mxu0 0.0
  %469 = vmatpush2.msra.mxu0 0.0
  %470 = vmatprep.subr.mxu0 0.0
  %471 = vmatpush2.msra.mxu0 0.0
  %472 = vmatprep.subr.mxu0 0.0
  %473 = vmatpush2.msra.mxu0 0.0
  %474 = vmatprep.subr.mxu0 0.0
  %475 = vmatpush2.msra.mxu0 0.0
  %476 = vmatprep.subr.mxu0 0.0
  %477 = vmatpush2.msra.mxu0 0.0
  %478 = vmatprep.subr.mxu0 0.0
  %479 = vmatpush2.msra.mxu0 0.0
  %480 = vmatprep.subr.mxu0 0.0
  %481 = vmatpush2.msra.mxu0 0.0
  %482 = vmatprep.subr.mxu0 0.0
  %483 = vmatpush2.msra.mxu0 0.0
  %484 = vmatprep.subr.mxu0 0.0
  %485 = vmatpush2.msra.mxu0 0.0
  %486 = vmatprep.subr.mxu0 0.0
  %487 = vmatpush2.msra.mxu0 0.0
  %488 = vmatprep.subr.mxu0 0.0
  %489 = vmatpush2.msra.mxu0 0.0
  %490 = vmatprep.subr.mxu0 0.0
  %491 = vmatpush2.msra.mxu0 0.0
  %492 = vmatprep.subr.mxu0 0.0
  %493 = vmatpush2.msra.mxu0 0.0
  %494 = vmatprep.mubr.f32.mxu0 0.0
  %495 = vmatmul.mubr.f32.gmra.mxu0 %v421
  %v496 = vpop.f32.mrf.mxu0
  %v497 = vadd.f32 0.0, %v496
  %v498 = vpop.f32.mrf.mxu0
  %v499 = vadd.f32 0.0, %v498
  %500 = vdwg.mxu0
  %501 = vmatprep.subr.mxu0 0.0
  %502 = vmatpush1.msra.mxu0 %v96
  %503 = vmatprep.subr.mxu0 0.0
  %504 = vmatpush1.msra.mxu0 %v93
  %505 = vmatprep.subr.mxu0 0.0
  %506 = vmatpush1.msra.mxu0 %v90
  %507 = vmatprep.subr.mxu0 0.0
  %508 = vmatpush1.msra.mxu0 %v87
  %509 = vmatprep.subr.mxu0 0.0
  %510 = vmatpush1.msra.mxu0 %v84
  %511 = vmatprep.subr.mxu0 0.0
  %512 = vmatpush1.msra.mxu0 %v81
  %513 = vmatprep.subr.mxu0 0.0
  %514 = vmatpush1.msra.mxu0 %v78
  %515 = vmatprep.subr.mxu0 0.0
  %516 = vmatpush1.msra.mxu0 %v75
  %517 = vmatprep.subr.mxu0 0.0
  %518 = vmatpush1.msra.mxu0 %v72
  %519 = vmatprep.subr.mxu0 0.0
  %520 = vmatpush1.msra.mxu0 %v69
  %521 = vmatprep.subr.mxu0 0.0
  %522 = vmatpush1.msra.mxu0 %v66
  %523 = vmatprep.subr.mxu0 0.0
  %524 = vmatpush1.msra.mxu0 %v63
  %525 = vmatprep.subr.mxu0 0.0
  %526 = vmatpush1.msra.mxu0 %v60
  %527 = vmatprep.subr.mxu0 0.0
  %528 = vmatpush1.msra.mxu0 %v57
  %529 = vmatprep.subr.mxu0 0.0
  %530 = vmatpush1.msra.mxu0 %v54
  %531 = vmatprep.subr.mxu0 0.0
  %532 = vmatpush1.msra.mxu0 %v51
  %533 = vmatprep.subr.mxu0 0.0
  %534 = vmatpush2.msra.mxu0 0.0
  %535 = vmatprep.subr.mxu0 0.0
  %536 = vmatpush2.msra.mxu0 0.0
  %537 = vmatprep.subr.mxu0 0.0
  %538 = vmatpush2.msra.mxu0 0.0
  %539 = vmatprep.subr.mxu0 0.0
  %540 = vmatpush2.msra.mxu0 0.0
  %541 = vmatprep.subr.mxu0 0.0
  %542 = vmatpush2.msra.mxu0 0.0
  %543 = vmatprep.subr.mxu0 0.0
  %544 = vmatpush2.msra.mxu0 0.0
  %545 = vmatprep.subr.mxu0 0.0
  %546 = vmatpush2.msra.mxu0 0.0
  %547 = vmatprep.subr.mxu0 0.0
  %548 = vmatpush2.msra.mxu0 0.0
  %549 = vmatprep.subr.mxu0 0.0
  %550 = vmatpush2.msra.mxu0 0.0
  %551 = vmatprep.subr.mxu0 0.0
  %552 = vmatpush2.msra.mxu0 0.0
  %553 = vmatprep.subr.mxu0 0.0
  %554 = vmatpush2.msra.mxu0 0.0
  %555 = vmatprep.subr.mxu0 0.0
  %556 = vmatpush2.msra.mxu0 0.0
  %557 = vmatprep.subr.mxu0 0.0
  %558 = vmatpush2.msra.mxu0 0.0
  %559 = vmatprep.subr.mxu0 0.0
  %560 = vmatpush2.msra.mxu0 0.0
  %561 = vmatprep.subr.mxu0 0.0
  %562 = vmatpush2.msra.mxu0 0.0
  %563 = vmatprep.subr.mxu0 0.0
  %564 = vmatpush2.msra.mxu0 0.0
  %565 = vmatprep.mubr.f32.mxu0 0.0
  %566 = vmatmul.mubr.f32.gmra.mxu0 %v421
  %v567 = vpop.f32.mrf.mxu0
  %v568 = vadd.f32 0.0, %v567
  %v569 = vpop.f32.mrf.mxu0
  %570 = vdwg.mxu0
  %s571 = scalar_lea.vmem %s2, 24
  %v572 = vld [vmem:[%s571] sm:$0xff]
  %v573 = vld [vmem:[%s571 + $0x8] sm:$0xff]
  %v574 = vld [vmem:[%s571 + $0x10] sm:$0xff]
  %v575 = vadd.f32 %v572, %v497
  %v576 = vxor.u32 %v575, 2147483648
  %v577 = vmul.f32 %v576, 1.442695
  %v578 = vpow.pop %v577
  %v579 = vadd.f32 %v578, 1.0
  %v580 = vrcp.pop %v579
  %v581 = vmul.f32 1.0, %v580
  %v582 = vadd.f32 %v573, %v499
  %v583 = vxor.u32 %v582, 2147483648
  %v584 = vmul.f32 %v583, 1.442695
  %v585 = vpow.pop %v584
  %v586 = vadd.f32 %v585, 1.0
  %v587 = vrcp.pop %v586
  %v588 = vmul.f32 1.0, %v587
  %v589 = vadd.f32 %v568, %v230
  %v590 = vmul.f32 %v581, %v589
  %v591 = vadd.f32 %v574, %v590
  %v592 = vtanh.pop %v591
  %v593 = vsub.f32 1.0, %v588
  %v594 = vmul.f32 %v593, %v592
  %v595 = vmul.f32 %v588, %v421
  %v596 = vadd.f32 %v594, %v595
  %s597 = scalar_lea.vmem %s3, 8
  %v598 = vld [vmem:[%s597] sm:$0xff]
  %600 = vset.pattern.permute.xlu0 0
  %601 = vperm.xlu0 %600, %v598
  %v602 = vpop.permute.xlu0 %601
  %v604 = vmul.f32 %v596, %v602
  %s605 = scalar_lea.vmem [#allocation2], 8
  %606 = vst [vmem:[%s605] sm:$0xff] %v604
  %607 = vmatprep.subr.mxu0 %v95
  %608 = vmatpush1.msra.mxu0 %v94
  %609 = vmatprep.subr.mxu0 %v92
  %610 = vmatpush1.msra.mxu0 %v91
  %611 = vmatprep.subr.mxu0 %v89
  %612 = vmatpush1.msra.mxu0 %v88
  %613 = vmatprep.subr.mxu0 %v86
  %614 = vmatpush1.msra.mxu0 %v85
  %615 = vmatprep.subr.mxu0 %v83
  %616 = vmatpush1.msra.mxu0 %v82
  %617 = vmatprep.subr.mxu0 %v80
  %618 = vmatpush1.msra.mxu0 %v79
  %619 = vmatprep.subr.mxu0 %v77
  %620 = vmatpush1.msra.mxu0 %v76
  %621 = vmatprep.subr.mxu0 %v74
  %622 = vmatpush1.msra.mxu0 %v73
  %623 = vmatprep.subr.mxu0 %v71
  %624 = vmatpush1.msra.mxu0 %v70
  %625 = vmatprep.subr.mxu0 %v68
  %626 = vmatpush1.msra.mxu0 %v67
  %627 = vmatprep.subr.mxu0 %v65
  %628 = vmatpush1.msra.mxu0 %v64
  %629 = vmatprep.subr.mxu0 %v62
  %630 = vmatpush1.msra.mxu0 %v61
  %631 = vmatprep.subr.mxu0 %v59
  %632 = vmatpush1.msra.mxu0 %v58
  %633 = vmatprep.subr.mxu0 %v56
  %634 = vmatpush1.msra.mxu0 %v55
  %635 = vmatprep.subr.mxu0 %v53
  %636 = vmatpush1.msra.mxu0 %v52
  %637 = vmatprep.subr.mxu0 %v50
  %638 = vmatpush1.msra.mxu0 %v49
  %639 = vmatprep.subr.mxu0 0.0
  %640 = vmatpush2.msra.mxu0 0.0
  %641 = vmatprep.subr.mxu0 0.0
  %642 = vmatpush2.msra.mxu0 0.0
  %643 = vmatprep.subr.mxu0 0.0
  %644 = vmatpush2.msra.mxu0 0.0
  %645 = vmatprep.subr.mxu0 0.0
  %646 = vmatpush2.msra.mxu0 0.0
  %647 = vmatprep.subr.mxu0 0.0
  %648 = vmatpush2.msra.mxu0 0.0
  %649 = vmatprep.subr.mxu0 0.0
  %650 = vmatpush2.msra.mxu0 0.0
  %651 = vmatprep.subr.mxu0 0.0
  %652 = vmatpush2.msra.mxu0 0.0
  %653 = vmatprep.subr.mxu0 0.0
  %654 = vmatpush2.msra.mxu0 0.0
  %655 = vmatprep.subr.mxu0 0.0
  %656 = vmatpush2.msra.mxu0 0.0
  %657 = vmatprep.subr.mxu0 0.0
  %658 = vmatpush2.msra.mxu0 0.0
  %659 = vmatprep.subr.mxu0 0.0
  %660 = vmatpush2.msra.mxu0 0.0
  %661 = vmatprep.subr.mxu0 0.0
  %662 = vmatpush2.msra.mxu0 0.0
  %663 = vmatprep.subr.mxu0 0.0
  %664 = vmatpush2.msra.mxu0 0.0
  %665 = vmatprep.subr.mxu0 0.0
  %666 = vmatpush2.msra.mxu0 0.0
  %667 = vmatprep.subr.mxu0 0.0
  %668 = vmatpush2.msra.mxu0 0.0
  %669 = vmatprep.subr.mxu0 0.0
  %670 = vmatpush2.msra.mxu0 0.0
  %671 = vmatprep.mubr.f32.mxu0 0.0
  %672 = vmatmul.mubr.f32.gmra.mxu0 %v596
  %v673 = vpop.f32.mrf.mxu0
  %v674 = vadd.f32 0.0, %v673
  %v675 = vpop.f32.mrf.mxu0
  %v676 = vadd.f32 0.0, %v675
  %677 = vdwg.mxu0
  %678 = vmatprep.subr.mxu0 0.0
  %679 = vmatpush1.msra.mxu0 %v96
  %680 = vmatprep.subr.mxu0 0.0
  %681 = vmatpush1.msra.mxu0 %v93
  %682 = vmatprep.subr.mxu0 0.0
  %683 = vmatpush1.msra.mxu0 %v90
  %684 = vmatprep.subr.mxu0 0.0
  %685 = vmatpush1.msra.mxu0 %v87
  %686 = vmatprep.subr.mxu0 0.0
  %687 = vmatpush1.msra.mxu0 %v84
  %688 = vmatprep.subr.mxu0 0.0
  %689 = vmatpush1.msra.mxu0 %v81
  %690 = vmatprep.subr.mxu0 0.0
  %691 = vmatpush1.msra.mxu0 %v78
  %692 = vmatprep.subr.mxu0 0.0
  %693 = vmatpush1.msra.mxu0 %v75
  %694 = vmatprep.subr.mxu0 0.0
  %695 = vmatpush1.msra.mxu0 %v72
  %696 = vmatprep.subr.mxu0 0.0
  %697 = vmatpush1.msra.mxu0 %v69
  %698 = vmatprep.subr.mxu0 0.0
  %699 = vmatpush1.msra.mxu0 %v66
  %700 = vmatprep.subr.mxu0 0.0
  %701 = vmatpush1.msra.mxu0 %v63
  %702 = vmatprep.subr.mxu0 0.0
  %703 = vmatpush1.msra.mxu0 %v60
  %704 = vmatprep.subr.mxu0 0.0
  %705 = vmatpush1.msra.mxu0 %v57
  %706 = vmatprep.subr.mxu0 0.0
  %707 = vmatpush1.msra.mxu0 %v54
  %708 = vmatprep.subr.mxu0 0.0
  %709 = vmatpush1.msra.mxu0 %v51
  %710 = vmatprep.subr.mxu0 0.0
  %711 = vmatpush2.msra.mxu0 0.0
  %712 = vmatprep.subr.mxu0 0.0
  %713 = vmatpush2.msra.mxu0 0.0
  %714 = vmatprep.subr.mxu0 0.0
  %715 = vmatpush2.msra.mxu0 0.0
  %716 = vmatprep.subr.mxu0 0.0
  %717 = vmatpush2.msra.mxu0 0.0
  %718 = vmatprep.subr.mxu0 0.0
  %719 = vmatpush2.msra.mxu0 0.0
  %720 = vmatprep.subr.mxu0 0.0
  %721 = vmatpush2.msra.mxu0 0.0
  %722 = vmatprep.subr.mxu0 0.0
  %723 = vmatpush2.msra.mxu0 0.0
  %724 = vmatprep.subr.mxu0 0.0
  %725 = vmatpush2.msra.mxu0 0.0
  %726 = vmatprep.subr.mxu0 0.0
  %727 = vmatpush2.msra.mxu0 0.0
  %728 = vmatprep.subr.mxu0 0.0
  %729 = vmatpush2.msra.mxu0 0.0
  %730 = vmatprep.subr.mxu0 0.0
  %731 = vmatpush2.msra.mxu0 0.0
  %732 = vmatprep.subr.mxu0 0.0
  %733 = vmatpush2.msra.mxu0 0.0
  %734 = vmatprep.subr.mxu0 0.0
  %735 = vmatpush2.msra.mxu0 0.0
  %736 = vmatprep.subr.mxu0 0.0
  %737 = vmatpush2.msra.mxu0 0.0
  %738 = vmatprep.subr.mxu0 0.0
  %739 = vmatpush2.msra.mxu0 0.0
  %740 = vmatprep.subr.mxu0 0.0
  %741 = vmatpush2.msra.mxu0 0.0
  %742 = vmatprep.mubr.f32.mxu0 0.0
  %743 = vmatmul.mubr.f32.gmra.mxu0 %v596
  %v744 = vpop.f32.mrf.mxu0
  %v745 = vadd.f32 0.0, %v744
  %v746 = vpop.f32.mrf.mxu0
  %747 = vdwg.mxu0
  %s748 = scalar_lea.vmem %s2, 48
  %v749 = vld [vmem:[%s748] sm:$0xff]
  %v750 = vld [vmem:[%s748 + $0x8] sm:$0xff]
  %v751 = vld [vmem:[%s748 + $0x10] sm:$0xff]
  %v752 = vadd.f32 %v749, %v674
  %v753 = vxor.u32 %v752, 2147483648
  %v754 = vmul.f32 %v753, 1.442695
  %v755 = vpow.pop %v754
  %v756 = vadd.f32 %v755, 1.0
  %v757 = vrcp.pop %v756
  %v758 = vmul.f32 1.0, %v757
  %v759 = vadd.f32 %v750, %v676
  %v760 = vxor.u32 %v759, 2147483648
  %v761 = vmul.f32 %v760, 1.442695
  %v762 = vpow.pop %v761
  %v763 = vadd.f32 %v762, 1.0
  %v764 = vrcp.pop %v763
  %v765 = vmul.f32 1.0, %v764
  %v766 = vadd.f32 %v745, %v230
  %v767 = vmul.f32 %v758, %v766
  %v768 = vadd.f32 %v751, %v767
  %v769 = vtanh.pop %v768
  %v770 = vsub.f32 1.0, %v765
  %v771 = vmul.f32 %v770, %v769
  %v772 = vmul.f32 %v765, %v596
  %v773 = vadd.f32 %v771, %v772
  %s774 = scalar_lea.vmem %s3, 16
  %v775 = vld [vmem:[%s774] sm:$0xff]
  %777 = vset.pattern.permute.xlu0 0
  %778 = vperm.xlu0 %777, %v775
  %v779 = vpop.permute.xlu0 %778
  %v781 = vmul.f32 %v773, %v779
  %s782 = scalar_lea.vmem [#allocation2], 16
  %783 = vst [vmem:[%s782] sm:$0xff] %v781
  %784 = vmatprep.subr.mxu0 %v95
  %785 = vmatpush1.msra.mxu0 %v94
  %786 = vmatprep.subr.mxu0 %v92
  %787 = vmatpush1.msra.mxu0 %v91
  %788 = vmatprep.subr.mxu0 %v89
  %789 = vmatpush1.msra.mxu0 %v88
  %790 = vmatprep.subr.mxu0 %v86
  %791 = vmatpush1.msra.mxu0 %v85
  %792 = vmatprep.subr.mxu0 %v83
  %793 = vmatpush1.msra.mxu0 %v82
  %794 = vmatprep.subr.mxu0 %v80
  %795 = vmatpush1.msra.mxu0 %v79
  %796 = vmatprep.subr.mxu0 %v77
  %797 = vmatpush1.msra.mxu0 %v76
  %798 = vmatprep.subr.mxu0 %v74
  %799 = vmatpush1.msra.mxu0 %v73
  %800 = vmatprep.subr.mxu0 %v71
  %801 = vmatpush1.msra.mxu0 %v70
  %802 = vmatprep.subr.mxu0 %v68
  %803 = vmatpush1.msra.mxu0 %v67
  %804 = vmatprep.subr.mxu0 %v65
  %805 = vmatpush1.msra.mxu0 %v64
  %806 = vmatprep.subr.mxu0 %v62
  %807 = vmatpush1.msra.mxu0 %v61
  %808 = vmatprep.subr.mxu0 %v59
  %809 = vmatpush1.msra.mxu0 %v58
  %810 = vmatprep.subr.mxu0 %v56
  %811 = vmatpush1.msra.mxu0 %v55
  %812 = vmatprep.subr.mxu0 %v53
  %813 = vmatpush1.msra.mxu0 %v52
  %814 = vmatprep.subr.mxu0 %v50
  %815 = vmatpush1.msra.mxu0 %v49
  %816 = vmatprep.subr.mxu0 0.0
  %817 = vmatpush2.msra.mxu0 0.0
  %818 = vmatprep.subr.mxu0 0.0
  %819 = vmatpush2.msra.mxu0 0.0
  %820 = vmatprep.subr.mxu0 0.0
  %821 = vmatpush2.msra.mxu0 0.0
  %822 = vmatprep.subr.mxu0 0.0
  %823 = vmatpush2.msra.mxu0 0.0
  %824 = vmatprep.subr.mxu0 0.0
  %825 = vmatpush2.msra.mxu0 0.0
  %826 = vmatprep.subr.mxu0 0.0
  %827 = vmatpush2.msra.mxu0 0.0
  %828 = vmatprep.subr.mxu0 0.0
  %829 = vmatpush2.msra.mxu0 0.0
  %830 = vmatprep.subr.mxu0 0.0
  %831 = vmatpush2.msra.mxu0 0.0
  %832 = vmatprep.subr.mxu0 0.0
  %833 = vmatpush2.msra.mxu0 0.0
  %834 = vmatprep.subr.mxu0 0.0
  %835 = vmatpush2.msra.mxu0 0.0
  %836 = vmatprep.subr.mxu0 0.0
  %837 = vmatpush2.msra.mxu0 0.0
  %838 = vmatprep.subr.mxu0 0.0
  %839 = vmatpush2.msra.mxu0 0.0
  %840 = vmatprep.subr.mxu0 0.0
  %841 = vmatpush2.msra.mxu0 0.0
  %842 = vmatprep.subr.mxu0 0.0
  %843 = vmatpush2.msra.mxu0 0.0
  %844 = vmatprep.subr.mxu0 0.0
  %845 = vmatpush2.msra.mxu0 0.0
  %846 = vmatprep.subr.mxu0 0.0
  %847 = vmatpush2.msra.mxu0 0.0
  %848 = vmatprep.mubr.f32.mxu0 0.0
  %849 = vmatmul.mubr.f32.gmra.mxu0 %v773
  %v850 = vpop.f32.mrf.mxu0
  %v851 = vadd.f32 0.0, %v850
  %v852 = vpop.f32.mrf.mxu0
  %v853 = vadd.f32 0.0, %v852
  %854 = vdwg.mxu0
  %855 = vmatprep.subr.mxu0 0.0
  %856 = vmatpush1.msra.mxu0 %v96
  %857 = vmatprep.subr.mxu0 0.0
  %858 = vmatpush1.msra.mxu0 %v93
  %859 = vmatprep.subr.mxu0 0.0
  %860 = vmatpush1.msra.mxu0 %v90
  %861 = vmatprep.subr.mxu0 0.0
  %862 = vmatpush1.msra.mxu0 %v87
  %863 = vmatprep.subr.mxu0 0.0
  %864 = vmatpush1.msra.mxu0 %v84
  %865 = vmatprep.subr.mxu0 0.0
  %866 = vmatpush1.msra.mxu0 %v81
  %867 = vmatprep.subr.mxu0 0.0
  %868 = vmatpush1.msra.mxu0 %v78
  %869 = vmatprep.subr.mxu0 0.0
  %870 = vmatpush1.msra.mxu0 %v75
  %871 = vmatprep.subr.mxu0 0.0
  %872 = vmatpush1.msra.mxu0 %v72
  %873 = vmatprep.subr.mxu0 0.0
  %874 = vmatpush1.msra.mxu0 %v69
  %875 = vmatprep.subr.mxu0 0.0
  %876 = vmatpush1.msra.mxu0 %v66
  %877 = vmatprep.subr.mxu0 0.0
  %878 = vmatpush1.msra.mxu0 %v63
  %879 = vmatprep.subr.mxu0 0.0
  %880 = vmatpush1.msra.mxu0 %v60
  %881 = vmatprep.subr.mxu0 0.0
  %882 = vmatpush1.msra.mxu0 %v57
  %883 = vmatprep.subr.mxu0 0.0
  %884 = vmatpush1.msra.mxu0 %v54
  %885 = vmatprep.subr.mxu0 0.0
  %886 = vmatpush1.msra.mxu0 %v51
  %887 = vmatprep.subr.mxu0 0.0
  %888 = vmatpush2.msra.mxu0 0.0
  %889 = vmatprep.subr.mxu0 0.0
  %890 = vmatpush2.msra.mxu0 0.0
  %891 = vmatprep.subr.mxu0 0.0
  %892 = vmatpush2.msra.mxu0 0.0
  %893 = vmatprep.subr.mxu0 0.0
  %894 = vmatpush2.msra.mxu0 0.0
  %895 = vmatprep.subr.mxu0 0.0
  %896 = vmatpush2.msra.mxu0 0.0
  %897 = vmatprep.subr.mxu0 0.0
  %898 = vmatpush2.msra.mxu0 0.0
  %899 = vmatprep.subr.mxu0 0.0
  %900 = vmatpush2.msra.mxu0 0.0
  %901 = vmatprep.subr.mxu0 0.0
  %902 = vmatpush2.msra.mxu0 0.0
  %903 = vmatprep.subr.mxu0 0.0
  %904 = vmatpush2.msra.mxu0 0.0
  %905 = vmatprep.subr.mxu0 0.0
  %906 = vmatpush2.msra.mxu0 0.0
  %907 = vmatprep.subr.mxu0 0.0
  %908 = vmatpush2.msra.mxu0 0.0
  %909 = vmatprep.subr.mxu0 0.0
  %910 = vmatpush2.msra.mxu0 0.0
  %911 = vmatprep.subr.mxu0 0.0
  %912 = vmatpush2.msra.mxu0 0.0
  %913 = vmatprep.subr.mxu0 0.0
  %914 = vmatpush2.msra.mxu0 0.0
  %915 = vmatprep.subr.mxu0 0.0
  %916 = vmatpush2.msra.mxu0 0.0
  %917 = vmatprep.subr.mxu0 0.0
  %918 = vmatpush2.msra.mxu0 0.0
  %919 = vmatprep.mubr.f32.mxu0 0.0
  %920 = vmatmul.mubr.f32.gmra.mxu0 %v773
  %v921 = vpop.f32.mrf.mxu0
  %v922 = vadd.f32 0.0, %v921
  %v923 = vpop.f32.mrf.mxu0
  %924 = vdwg.mxu0
  %s925 = scalar_lea.vmem %s2, 72
  %v926 = vld [vmem:[%s925] sm:$0xff]
  %v927 = vld [vmem:[%s925 + $0x8] sm:$0xff]
  %v928 = vld [vmem:[%s925 + $0x10] sm:$0xff]
  %v929 = vadd.f32 %v926, %v851
  %v930 = vxor.u32 %v929, 2147483648
  %v931 = vmul.f32 %v930, 1.442695
  %v932 = vpow.pop %v931
  %v933 = vadd.f32 %v932, 1.0
  %v934 = vrcp.pop %v933
  %v935 = vmul.f32 1.0, %v934
  %v936 = vadd.f32 %v927, %v853
  %v937 = vxor.u32 %v936, 2147483648
  %v938 = vmul.f32 %v937, 1.442695
  %v939 = vpow.pop %v938
  %v940 = vadd.f32 %v939, 1.0
  %v941 = vrcp.pop %v940
  %v942 = vmul.f32 1.0, %v941
  %v943 = vadd.f32 %v922, %v230
  %v944 = vmul.f32 %v935, %v943
  %v945 = vadd.f32 %v928, %v944
  %v946 = vtanh.pop %v945
  %v947 = vsub.f32 1.0, %v942
  %v948 = vmul.f32 %v947, %v946
  %v949 = vmul.f32 %v942, %v773
  %v950 = vadd.f32 %v948, %v949
  %s951 = scalar_lea.vmem %s3, 24
  %v952 = vld [vmem:[%s951] sm:$0xff]
  %954 = vset.pattern.permute.xlu0 0
  %955 = vperm.xlu0 %954, %v952
  %v956 = vpop.permute.xlu0 %955
  %v958 = vmul.f32 %v950, %v956
  %s959 = scalar_lea.vmem [#allocation2], 24
  %960 = vst [vmem:[%s959] sm:$0xff] %v958
  %961 = vmatprep.subr.mxu0 %v95
  %962 = vmatpush1.msra.mxu0 %v94
  %963 = vmatprep.subr.mxu0 %v92
  %964 = vmatpush1.msra.mxu0 %v91
  %965 = vmatprep.subr.mxu0 %v89
  %966 = vmatpush1.msra.mxu0 %v88
  %967 = vmatprep.subr.mxu0 %v86
  %968 = vmatpush1.msra.mxu0 %v85
  %969 = vmatprep.subr.mxu0 %v83
  %970 = vmatpush1.msra.mxu0 %v82
  %971 = vmatprep.subr.mxu0 %v80
  %972 = vmatpush1.msra.mxu0 %v79
  %973 = vmatprep.subr.mxu0 %v77
  %974 = vmatpush1.msra.mxu0 %v76
  %975 = vmatprep.subr.mxu0 %v74
  %976 = vmatpush1.msra.mxu0 %v73
  %977 = vmatprep.subr.mxu0 %v71
  %978 = vmatpush1.msra.mxu0 %v70
  %979 = vmatprep.subr.mxu0 %v68
  %980 = vmatpush1.msra.mxu0 %v67
  %981 = vmatprep.subr.mxu0 %v65
  %982 = vmatpush1.msra.mxu0 %v64
  %983 = vmatprep.subr.mxu0 %v62
  %984 = vmatpush1.msra.mxu0 %v61
  %985 = vmatprep.subr.mxu0 %v59
  %986 = vmatpush1.msra.mxu0 %v58
  %987 = vmatprep.subr.mxu0 %v56
  %988 = vmatpush1.msra.mxu0 %v55
  %989 = vmatprep.subr.mxu0 %v53
  %990 = vmatpush1.msra.mxu0 %v52
  %991 = vmatprep.subr.mxu0 %v50
  %992 = vmatpush1.msra.mxu0 %v49
  %993 = vmatprep.subr.mxu0 0.0
  %994 = vmatpush2.msra.mxu0 0.0
  %995 = vmatprep.subr.mxu0 0.0
  %996 = vmatpush2.msra.mxu0 0.0
  %997 = vmatprep.subr.mxu0 0.0
  %998 = vmatpush2.msra.mxu0 0.0
  %999 = vmatprep.subr.mxu0 0.0
  %1000 = vmatpush2.msra.mxu0 0.0
  %1001 = vmatprep.subr.mxu0 0.0
  %1002 = vmatpush2.msra.mxu0 0.0
  %1003 = vmatprep.subr.mxu0 0.0
  %1004 = vmatpush2.msra.mxu0 0.0
  %1005 = vmatprep.subr.mxu0 0.0
  %1006 = vmatpush2.msra.mxu0 0.0
  %1007 = vmatprep.subr.mxu0 0.0
  %1008 = vmatpush2.msra.mxu0 0.0
  %1009 = vmatprep.subr.mxu0 0.0
  %1010 = vmatpush2.msra.mxu0 0.0
  %1011 = vmatprep.subr.mxu0 0.0
  %1012 = vmatpush2.msra.mxu0 0.0
  %1013 = vmatprep.subr.mxu0 0.0
  %1014 = vmatpush2.msra.mxu0 0.0
  %1015 = vmatprep.subr.mxu0 0.0
  %1016 = vmatpush2.msra.mxu0 0.0
  %1017 = vmatprep.subr.mxu0 0.0
  %1018 = vmatpush2.msra.mxu0 0.0
  %1019 = vmatprep.subr.mxu0 0.0
  %1020 = vmatpush2.msra.mxu0 0.0
  %1021 = vmatprep.subr.mxu0 0.0
  %1022 = vmatpush2.msra.mxu0 0.0
  %1023 = vmatprep.subr.mxu0 0.0
  %1024 = vmatpush2.msra.mxu0 0.0
  %1025 = vmatprep.mubr.f32.mxu0 0.0
  %1026 = vmatmul.mubr.f32.gmra.mxu0 %v950
  %v1027 = vpop.f32.mrf.mxu0
  %v1028 = vadd.f32 0.0, %v1027
  %v1029 = vpop.f32.mrf.mxu0
  %v1030 = vadd.f32 0.0, %v1029
  %1031 = vdwg.mxu0
  %1032 = vmatprep.subr.mxu0 0.0
  %1033 = vmatpush1.msra.mxu0 %v96
  %1034 = vmatprep.subr.mxu0 0.0
  %1035 = vmatpush1.msra.mxu0 %v93
  %1036 = vmatprep.subr.mxu0 0.0
  %1037 = vmatpush1.msra.mxu0 %v90
  %1038 = vmatprep.subr.mxu0 0.0
  %1039 = vmatpush1.msra.mxu0 %v87
  %1040 = vmatprep.subr.mxu0 0.0
  %1041 = vmatpush1.msra.mxu0 %v84
  %1042 = vmatprep.subr.mxu0 0.0
  %1043 = vmatpush1.msra.mxu0 %v81
  %1044 = vmatprep.subr.mxu0 0.0
  %1045 = vmatpush1.msra.mxu0 %v78
  %1046 = vmatprep.subr.mxu0 0.0
  %1047 = vmatpush1.msra.mxu0 %v75
  %1048 = vmatprep.subr.mxu0 0.0
  %1049 = vmatpush1.msra.mxu0 %v72
  %1050 = vmatprep.subr.mxu0 0.0
  %1051 = vmatpush1.msra.mxu0 %v69
  %1052 = vmatprep.subr.mxu0 0.0
  %1053 = vmatpush1.msra.mxu0 %v66
  %1054 = vmatprep.subr.mxu0 0.0
  %1055 = vmatpush1.msra.mxu0 %v63
  %1056 = vmatprep.subr.mxu0 0.0
  %1057 = vmatpush1.msra.mxu0 %v60
  %1058 = vmatprep.subr.mxu0 0.0
  %1059 = vmatpush1.msra.mxu0 %v57
  %1060 = vmatprep.subr.mxu0 0.0
  %1061 = vmatpush1.msra.mxu0 %v54
  %1062 = vmatprep.subr.mxu0 0.0
  %1063 = vmatpush1.msra.mxu0 %v51
  %1064 = vmatprep.subr.mxu0 0.0
  %1065 = vmatpush2.msra.mxu0 0.0
  %1066 = vmatprep.subr.mxu0 0.0
  %1067 = vmatpush2.msra.mxu0 0.0
  %1068 = vmatprep.subr.mxu0 0.0
  %1069 = vmatpush2.msra.mxu0 0.0
  %1070 = vmatprep.subr.mxu0 0.0
  %1071 = vmatpush2.msra.mxu0 0.0
  %1072 = vmatprep.subr.mxu0 0.0
  %1073 = vmatpush2.msra.mxu0 0.0
  %1074 = vmatprep.subr.mxu0 0.0
  %1075 = vmatpush2.msra.mxu0 0.0
  %1076 = vmatprep.subr.mxu0 0.0
  %1077 = vmatpush2.msra.mxu0 0.0
  %1078 = vmatprep.subr.mxu0 0.0
  %1079 = vmatpush2.msra.mxu0 0.0
  %1080 = vmatprep.subr.mxu0 0.0
  %1081 = vmatpush2.msra.mxu0 0.0
  %1082 = vmatprep.subr.mxu0 0.0
  %1083 = vmatpush2.msra.mxu0 0.0
  %1084 = vmatprep.subr.mxu0 0.0
  %1085 = vmatpush2.msra.mxu0 0.0
  %1086 = vmatprep.subr.mxu0 0.0
  %1087 = vmatpush2.msra.mxu0 0.0
  %1088 = vmatprep.subr.mxu0 0.0
  %1089 = vmatpush2.msra.mxu0 0.0
  %1090 = vmatprep.subr.mxu0 0.0
  %1091 = vmatpush2.msra.mxu0 0.0
  %1092 = vmatprep.subr.mxu0 0.0
  %1093 = vmatpush2.msra.mxu0 0.0
  %1094 = vmatprep.subr.mxu0 0.0
  %1095 = vmatpush2.msra.mxu0 0.0
  %1096 = vmatprep.mubr.f32.mxu0 0.0
  %1097 = vmatmul.mubr.f32.gmra.mxu0 %v950
  %v1098 = vpop.f32.mrf.mxu0
  %v1099 = vadd.f32 0.0, %v1098
  %v1100 = vpop.f32.mrf.mxu0
  %1101 = vdwg.mxu0
  %s1102 = scalar_lea.vmem %s2, 96
  %v1103 = vld [vmem:[%s1102] sm:$0xff]
  %v1104 = vld [vmem:[%s1102 + $0x8] sm:$0xff]
  %v1105 = vld [vmem:[%s1102 + $0x10] sm:$0xff]
  %v1106 = vadd.f32 %v1103, %v1028
  %v1107 = vxor.u32 %v1106, 2147483648
  %v1108 = vmul.f32 %v1107, 1.442695
  %v1109 = vpow.pop %v1108
  %v1110 = vadd.f32 %v1109, 1.0
  %v1111 = vrcp.pop %v1110
  %v1112 = vmul.f32 1.0, %v1111
  %v1113 = vadd.f32 %v1104, %v1030
  %v1114 = vxor.u32 %v1113, 2147483648
  %v1115 = vmul.f32 %v1114, 1.442695
  %v1116 = vpow.pop %v1115
  %v1117 = vadd.f32 %v1116, 1.0
  %v1118 = vrcp.pop %v1117
  %v1119 = vmul.f32 1.0, %v1118
  %v1120 = vadd.f32 %v1099, %v230
  %v1121 = vmul.f32 %v1112, %v1120
  %v1122 = vadd.f32 %v1105, %v1121
  %v1123 = vtanh.pop %v1122
  %v1124 = vsub.f32 1.0, %v1119
  %v1125 = vmul.f32 %v1124, %v1123
  %v1126 = vmul.f32 %v1119, %v950
  %v1127 = vadd.f32 %v1125, %v1126
  %s1128 = scalar_lea.vmem %s3, 32
  %v1129 = vld [vmem:[%s1128] sm:$0xff]
  %1131 = vset.pattern.permute.xlu0 0
  %1132 = vperm.xlu0 %1131, %v1129
  %v1133 = vpop.permute.xlu0 %1132
  %v1135 = vmul.f32 %v1127, %v1133
  %s1136 = scalar_lea.vmem [#allocation2], 32
  %1137 = vst [vmem:[%s1136] sm:$0xff] %v1135
  %1138 = vmatprep.subr.mxu0 %v95
  %1139 = vmatpush1.msra.mxu0 %v94
  %1140 = vmatprep.subr.mxu0 %v92
  %1141 = vmatpush1.msra.mxu0 %v91
  %1142 = vmatprep.subr.mxu0 %v89
  %1143 = vmatpush1.msra.mxu0 %v88
  %1144 = vmatprep.subr.mxu0 %v86
  %1145 = vmatpush1.msra.mxu0 %v85
  %1146 = vmatprep.subr.mxu0 %v83
  %1147 = vmatpush1.msra.mxu0 %v82
  %1148 = vmatprep.subr.mxu0 %v80
  %1149 = vmatpush1.msra.mxu0 %v79
  %1150 = vmatprep.subr.mxu0 %v77
  %1151 = vmatpush1.msra.mxu0 %v76
  %1152 = vmatprep.subr.mxu0 %v74
  %1153 = vmatpush1.msra.mxu0 %v73
  %1154 = vmatprep.subr.mxu0 %v71
  %1155 = vmatpush1.msra.mxu0 %v70
  %1156 = vmatprep.subr.mxu0 %v68
  %1157 = vmatpush1.msra.mxu0 %v67
  %1158 = vmatprep.subr.mxu0 %v65
  %1159 = vmatpush1.msra.mxu0 %v64
  %1160 = vmatprep.subr.mxu0 %v62
  %1161 = vmatpush1.msra.mxu0 %v61
  %1162 = vmatprep.subr.mxu0 %v59
  %1163 = vmatpush1.msra.mxu0 %v58
  %1164 = vmatprep.subr.mxu0 %v56
  %1165 = vmatpush1.msra.mxu0 %v55
  %1166 = vmatprep.subr.mxu0 %v53
  %1167 = vmatpush1.msra.mxu0 %v52
  %1168 = vmatprep.subr.mxu0 %v50
  %1169 = vmatpush1.msra.mxu0 %v49
  %1170 = vmatprep.subr.mxu0 0.0
  %1171 = vmatpush2.msra.mxu0 0.0
  %1172 = vmatprep.subr.mxu0 0.0
  %1173 = vmatpush2.msra.mxu0 0.0
  %1174 = vmatprep.subr.mxu0 0.0
  %1175 = vmatpush2.msra.mxu0 0.0
  %1176 = vmatprep.subr.mxu0 0.0
  %1177 = vmatpush2.msra.mxu0 0.0
  %1178 = vmatprep.subr.mxu0 0.0
  %1179 = vmatpush2.msra.mxu0 0.0
  %1180 = vmatprep.subr.mxu0 0.0
  %1181 = vmatpush2.msra.mxu0 0.0
  %1182 = vmatprep.subr.mxu0 0.0
  %1183 = vmatpush2.msra.mxu0 0.0
  %1184 = vmatprep.subr.mxu0 0.0
  %1185 = vmatpush2.msra.mxu0 0.0
  %1186 = vmatprep.subr.mxu0 0.0
  %1187 = vmatpush2.msra.mxu0 0.0
  %1188 = vmatprep.subr.mxu0 0.0
  %1189 = vmatpush2.msra.mxu0 0.0
  %1190 = vmatprep.subr.mxu0 0.0
  %1191 = vmatpush2.msra.mxu0 0.0
  %1192 = vmatprep.subr.mxu0 0.0
  %1193 = vmatpush2.msra.mxu0 0.0
  %1194 = vmatprep.subr.mxu0 0.0
  %1195 = vmatpush2.msra.mxu0 0.0
  %1196 = vmatprep.subr.mxu0 0.0
  %1197 = vmatpush2.msra.mxu0 0.0
  %1198 = vmatprep.subr.mxu0 0.0
  %1199 = vmatpush2.msra.mxu0 0.0
  %1200 = vmatprep.subr.mxu0 0.0
  %1201 = vmatpush2.msra.mxu0 0.0
  %1202 = vmatprep.mubr.f32.mxu0 0.0
  %1203 = vmatmul.mubr.f32.gmra.mxu0 %v1127
  %v1204 = vpop.f32.mrf.mxu0
  %v1205 = vadd.f32 0.0, %v1204
  %v1206 = vpop.f32.mrf.mxu0
  %v1207 = vadd.f32 0.0, %v1206
  %1208 = vdwg.mxu0
  %1209 = vmatprep.subr.mxu0 0.0
  %1210 = vmatpush1.msra.mxu0 %v96
  %1211 = vmatprep.subr.mxu0 0.0
  %1212 = vmatpush1.msra.mxu0 %v93
  %1213 = vmatprep.subr.mxu0 0.0
  %1214 = vmatpush1.msra.mxu0 %v90
  %1215 = vmatprep.subr.mxu0 0.0
  %1216 = vmatpush1.msra.mxu0 %v87
  %1217 = vmatprep.subr.mxu0 0.0
  %1218 = vmatpush1.msra.mxu0 %v84
  %1219 = vmatprep.subr.mxu0 0.0
  %1220 = vmatpush1.msra.mxu0 %v81
  %1221 = vmatprep.subr.mxu0 0.0
  %1222 = vmatpush1.msra.mxu0 %v78
  %1223 = vmatprep.subr.mxu0 0.0
  %1224 = vmatpush1.msra.mxu0 %v75
  %1225 = vmatprep.subr.mxu0 0.0
  %1226 = vmatpush1.msra.mxu0 %v72
  %1227 = vmatprep.subr.mxu0 0.0
  %1228 = vmatpush1.msra.mxu0 %v69
  %1229 = vmatprep.subr.mxu0 0.0
  %1230 = vmatpush1.msra.mxu0 %v66
  %1231 = vmatprep.subr.mxu0 0.0
  %1232 = vmatpush1.msra.mxu0 %v63
  %1233 = vmatprep.subr.mxu0 0.0
  %1234 = vmatpush1.msra.mxu0 %v60
  %1235 = vmatprep.subr.mxu0 0.0
  %1236 = vmatpush1.msra.mxu0 %v57
  %1237 = vmatprep.subr.mxu0 0.0
  %1238 = vmatpush1.msra.mxu0 %v54
  %1239 = vmatprep.subr.mxu0 0.0
  %1240 = vmatpush1.msra.mxu0 %v51
  %1241 = vmatprep.subr.mxu0 0.0
  %1242 = vmatpush2.msra.mxu0 0.0
  %1243 = vmatprep.subr.mxu0 0.0
  %1244 = vmatpush2.msra.mxu0 0.0
  %1245 = vmatprep.subr.mxu0 0.0
  %1246 = vmatpush2.msra.mxu0 0.0
  %1247 = vmatprep.subr.mxu0 0.0
  %1248 = vmatpush2.msra.mxu0 0.0
  %1249 = vmatprep.subr.mxu0 0.0
  %1250 = vmatpush2.msra.mxu0 0.0
  %1251 = vmatprep.subr.mxu0 0.0
  %1252 = vmatpush2.msra.mxu0 0.0
  %1253 = vmatprep.subr.mxu0 0.0
  %1254 = vmatpush2.msra.mxu0 0.0
  %1255 = vmatprep.subr.mxu0 0.0
  %1256 = vmatpush2.msra.mxu0 0.0
  %1257 = vmatprep.subr.mxu0 0.0
  %1258 = vmatpush2.msra.mxu0 0.0
  %1259 = vmatprep.subr.mxu0 0.0
  %1260 = vmatpush2.msra.mxu0 0.0
  %1261 = vmatprep.subr.mxu0 0.0
  %1262 = vmatpush2.msra.mxu0 0.0
  %1263 = vmatprep.subr.mxu0 0.0
  %1264 = vmatpush2.msra.mxu0 0.0
  %1265 = vmatprep.subr.mxu0 0.0
  %1266 = vmatpush2.msra.mxu0 0.0
  %1267 = vmatprep.subr.mxu0 0.0
  %1268 = vmatpush2.msra.mxu0 0.0
  %1269 = vmatprep.subr.mxu0 0.0
  %1270 = vmatpush2.msra.mxu0 0.0
  %1271 = vmatprep.subr.mxu0 0.0
  %1272 = vmatpush2.msra.mxu0 0.0
  %1273 = vmatprep.mubr.f32.mxu0 0.0
  %1274 = vmatmul.mubr.f32.gmra.mxu0 %v1127
  %v1275 = vpop.f32.mrf.mxu0
  %v1276 = vadd.f32 0.0, %v1275
  %v1277 = vpop.f32.mrf.mxu0
  %1278 = vdwg.mxu0
  %s1279 = scalar_lea.vmem %s2, 120
  %v1280 = vld [vmem:[%s1279] sm:$0xff]
  %v1281 = vld [vmem:[%s1279 + $0x8] sm:$0xff]
  %v1282 = vld [vmem:[%s1279 + $0x10] sm:$0xff]
  %v1283 = vadd.f32 %v1280, %v1205
  %v1284 = vxor.u32 %v1283, 2147483648
  %v1285 = vmul.f32 %v1284, 1.442695
  %v1286 = vpow.pop %v1285
  %v1287 = vadd.f32 %v1286, 1.0
  %v1288 = vrcp.pop %v1287
  %v1289 = vmul.f32 1.0, %v1288
  %v1290 = vadd.f32 %v1281, %v1207
  %v1291 = vxor.u32 %v1290, 2147483648
  %v1292 = vmul.f32 %v1291, 1.442695
  %v1293 = vpow.pop %v1292
  %v1294 = vadd.f32 %v1293, 1.0
  %v1295 = vrcp.pop %v1294
  %v1296 = vmul.f32 1.0, %v1295
  %v1297 = vadd.f32 %v1276, %v230
  %v1298 = vmul.f32 %v1289, %v1297
  %v1299 = vadd.f32 %v1282, %v1298
  %v1300 = vtanh.pop %v1299
  %v1301 = vsub.f32 1.0, %v1296
  %v1302 = vmul.f32 %v1301, %v1300
  %v1303 = vmul.f32 %v1296, %v1127
  %v1304 = vadd.f32 %v1302, %v1303
  %s1305 = scalar_lea.vmem %s3, 40
  %v1306 = vld [vmem:[%s1305] sm:$0xff]
  %1308 = vset.pattern.permute.xlu0 0
  %1309 = vperm.xlu0 %1308, %v1306
  %v1310 = vpop.permute.xlu0 %1309
  %v1312 = vmul.f32 %v1304, %v1310
  %s1313 = scalar_lea.vmem [#allocation2], 40
  %1314 = vst [vmem:[%s1313] sm:$0xff] %v1312
  %1315 = vmatprep.subr.mxu0 %v95
  %1316 = vmatpush1.msra.mxu0 %v94
  %1317 = vmatprep.subr.mxu0 %v92
  %1318 = vmatpush1.msra.mxu0 %v91
  %1319 = vmatprep.subr.mxu0 %v89
  %1320 = vmatpush1.msra.mxu0 %v88
  %1321 = vmatprep.subr.mxu0 %v86
  %1322 = vmatpush1.msra.mxu0 %v85
  %1323 = vmatprep.subr.mxu0 %v83
  %1324 = vmatpush1.msra.mxu0 %v82
  %1325 = vmatprep.subr.mxu0 %v80
  %1326 = vmatpush1.msra.mxu0 %v79
  %1327 = vmatprep.subr.mxu0 %v77
  %1328 = vmatpush1.msra.mxu0 %v76
  %1329 = vmatprep.subr.mxu0 %v74
  %1330 = vmatpush1.msra.mxu0 %v73
  %1331 = vmatprep.subr.mxu0 %v71
  %1332 = vmatpush1.msra.mxu0 %v70
  %1333 = vmatprep.subr.mxu0 %v68
  %1334 = vmatpush1.msra.mxu0 %v67
  %1335 = vmatprep.subr.mxu0 %v65
  %1336 = vmatpush1.msra.mxu0 %v64
  %1337 = vmatprep.subr.mxu0 %v62
  %1338 = vmatpush1.msra.mxu0 %v61
  %1339 = vmatprep.subr.mxu0 %v59
  %1340 = vmatpush1.msra.mxu0 %v58
  %1341 = vmatprep.subr.mxu0 %v56
  %1342 = vmatpush1.msra.mxu0 %v55
  %1343 = vmatprep.subr.mxu0 %v53
  %1344 = vmatpush1.msra.mxu0 %v52
  %1345 = vmatprep.subr.mxu0 %v50
  %1346 = vmatpush1.msra.mxu0 %v49
  %1347 = vmatprep.subr.mxu0 0.0
  %1348 = vmatpush2.msra.mxu0 0.0
  %1349 = vmatprep.subr.mxu0 0.0
  %1350 = vmatpush2.msra.mxu0 0.0
  %1351 = vmatprep.subr.mxu0 0.0
  %1352 = vmatpush2.msra.mxu0 0.0
  %1353 = vmatprep.subr.mxu0 0.0
  %1354 = vmatpush2.msra.mxu0 0.0
  %1355 = vmatprep.subr.mxu0 0.0
  %1356 = vmatpush2.msra.mxu0 0.0
  %1357 = vmatprep.subr.mxu0 0.0
  %1358 = vmatpush2.msra.mxu0 0.0
  %1359 = vmatprep.subr.mxu0 0.0
  %1360 = vmatpush2.msra.mxu0 0.0
  %1361 = vmatprep.subr.mxu0 0.0
  %1362 = vmatpush2.msra.mxu0 0.0
  %1363 = vmatprep.subr.mxu0 0.0
  %1364 = vmatpush2.msra.mxu0 0.0
  %1365 = vmatprep.subr.mxu0 0.0
  %1366 = vmatpush2.msra.mxu0 0.0
  %1367 = vmatprep.subr.mxu0 0.0
  %1368 = vmatpush2.msra.mxu0 0.0
  %1369 = vmatprep.subr.mxu0 0.0
  %1370 = vmatpush2.msra.mxu0 0.0
  %1371 = vmatprep.subr.mxu0 0.0
  %1372 = vmatpush2.msra.mxu0 0.0
  %1373 = vmatprep.subr.mxu0 0.0
  %1374 = vmatpush2.msra.mxu0 0.0
  %1375 = vmatprep.subr.mxu0 0.0
  %1376 = vmatpush2.msra.mxu0 0.0
  %1377 = vmatprep.subr.mxu0 0.0
  %1378 = vmatpush2.msra.mxu0 0.0
  %1379 = vmatprep.mubr.f32.mxu0 0.0
  %1380 = vmatmul.mubr.f32.gmra.mxu0 %v1304
  %v1381 = vpop.f32.mrf.mxu0
  %v1382 = vadd.f32 0.0, %v1381
  %v1383 = vpop.f32.mrf.mxu0
  %v1384 = vadd.f32 0.0, %v1383
  %1385 = vdwg.mxu0
  %1386 = vmatprep.subr.mxu0 0.0
  %1387 = vmatpush1.msra.mxu0 %v96
  %1388 = vmatprep.subr.mxu0 0.0
  %1389 = vmatpush1.msra.mxu0 %v93
  %1390 = vmatprep.subr.mxu0 0.0
  %1391 = vmatpush1.msra.mxu0 %v90
  %1392 = vmatprep.subr.mxu0 0.0
  %1393 = vmatpush1.msra.mxu0 %v87
  %1394 = vmatprep.subr.mxu0 0.0
  %1395 = vmatpush1.msra.mxu0 %v84
  %1396 = vmatprep.subr.mxu0 0.0
  %1397 = vmatpush1.msra.mxu0 %v81
  %1398 = vmatprep.subr.mxu0 0.0
  %1399 = vmatpush1.msra.mxu0 %v78
  %1400 = vmatprep.subr.mxu0 0.0
  %1401 = vmatpush1.msra.mxu0 %v75
  %1402 = vmatprep.subr.mxu0 0.0
  %1403 = vmatpush1.msra.mxu0 %v72
  %1404 = vmatprep.subr.mxu0 0.0
  %1405 = vmatpush1.msra.mxu0 %v69
  %1406 = vmatprep.subr.mxu0 0.0
  %1407 = vmatpush1.msra.mxu0 %v66
  %1408 = vmatprep.subr.mxu0 0.0
  %1409 = vmatpush1.msra.mxu0 %v63
  %1410 = vmatprep.subr.mxu0 0.0
  %1411 = vmatpush1.msra.mxu0 %v60
  %1412 = vmatprep.subr.mxu0 0.0
  %1413 = vmatpush1.msra.mxu0 %v57
  %1414 = vmatprep.subr.mxu0 0.0
  %1415 = vmatpush1.msra.mxu0 %v54
  %1416 = vmatprep.subr.mxu0 0.0
  %1417 = vmatpush1.msra.mxu0 %v51
  %1418 = vmatprep.subr.mxu0 0.0
  %1419 = vmatpush2.msra.mxu0 0.0
  %1420 = vmatprep.subr.mxu0 0.0
  %1421 = vmatpush2.msra.mxu0 0.0
  %1422 = vmatprep.subr.mxu0 0.0
  %1423 = vmatpush2.msra.mxu0 0.0
  %1424 = vmatprep.subr.mxu0 0.0
  %1425 = vmatpush2.msra.mxu0 0.0
  %1426 = vmatprep.subr.mxu0 0.0
  %1427 = vmatpush2.msra.mxu0 0.0
  %1428 = vmatprep.subr.mxu0 0.0
  %1429 = vmatpush2.msra.mxu0 0.0
  %1430 = vmatprep.subr.mxu0 0.0
  %1431 = vmatpush2.msra.mxu0 0.0
  %1432 = vmatprep.subr.mxu0 0.0
  %1433 = vmatpush2.msra.mxu0 0.0
  %1434 = vmatprep.subr.mxu0 0.0
  %1435 = vmatpush2.msra.mxu0 0.0
  %1436 = vmatprep.subr.mxu0 0.0
  %1437 = vmatpush2.msra.mxu0 0.0
  %1438 = vmatprep.subr.mxu0 0.0
  %1439 = vmatpush2.msra.mxu0 0.0
  %1440 = vmatprep.subr.mxu0 0.0
  %1441 = vmatpush2.msra.mxu0 0.0
  %1442 = vmatprep.subr.mxu0 0.0
  %1443 = vmatpush2.msra.mxu0 0.0
  %1444 = vmatprep.subr.mxu0 0.0
  %1445 = vmatpush2.msra.mxu0 0.0
  %1446 = vmatprep.subr.mxu0 0.0
  %1447 = vmatpush2.msra.mxu0 0.0
  %1448 = vmatprep.subr.mxu0 0.0
  %1449 = vmatpush2.msra.mxu0 0.0
  %1450 = vmatprep.mubr.f32.mxu0 0.0
  %1451 = vmatmul.mubr.f32.gmra.mxu0 %v1304
  %v1452 = vpop.f32.mrf.mxu0
  %v1453 = vadd.f32 0.0, %v1452
  %v1454 = vpop.f32.mrf.mxu0
  %1455 = vdwg.mxu0
  %s1456 = scalar_lea.vmem %s2, 144
  %v1457 = vld [vmem:[%s1456] sm:$0xff]
  %v1458 = vld [vmem:[%s1456 + $0x8] sm:$0xff]
  %v1459 = vld [vmem:[%s1456 + $0x10] sm:$0xff]
  %v1460 = vadd.f32 %v1457, %v1382
  %v1461 = vxor.u32 %v1460, 2147483648
  %v1462 = vmul.f32 %v1461, 1.442695
  %v1463 = vpow.pop %v1462
  %v1464 = vadd.f32 %v1463, 1.0
  %v1465 = vrcp.pop %v1464
  %v1466 = vmul.f32 1.0, %v1465
  %v1467 = vadd.f32 %v1458, %v1384
  %v1468 = vxor.u32 %v1467, 2147483648
  %v1469 = vmul.f32 %v1468, 1.442695
  %v1470 = vpow.pop %v1469
  %v1471 = vadd.f32 %v1470, 1.0
  %v1472 = vrcp.pop %v1471
  %v1473 = vmul.f32 1.0, %v1472
  %v1474 = vadd.f32 %v1453, %v230
  %v1475 = vmul.f32 %v1466, %v1474
  %v1476 = vadd.f32 %v1459, %v1475
  %v1477 = vtanh.pop %v1476
  %v1478 = vsub.f32 1.0, %v1473
  %v1479 = vmul.f32 %v1478, %v1477
  %v1480 = vmul.f32 %v1473, %v1304
  %v1481 = vadd.f32 %v1479, %v1480
  %s1482 = scalar_lea.vmem %s3, 48
  %v1483 = vld [vmem:[%s1482] sm:$0xff]
  %1485 = vset.pattern.permute.xlu0 0
  %1486 = vperm.xlu0 %1485, %v1483
  %v1487 = vpop.permute.xlu0 %1486
  %v1489 = vmul.f32 %v1481, %v1487
  %s1490 = scalar_lea.vmem [#allocation2], 48
  %1491 = vst [vmem:[%s1490] sm:$0xff] %v1489
  %1492 = vmatprep.subr.mxu0 %v95
  %1493 = vmatpush1.msra.mxu0 %v94
  %1494 = vmatprep.subr.mxu0 %v92
  %1495 = vmatpush1.msra.mxu0 %v91
  %1496 = vmatprep.subr.mxu0 %v89
  %1497 = vmatpush1.msra.mxu0 %v88
  %1498 = vmatprep.subr.mxu0 %v86
  %1499 = vmatpush1.msra.mxu0 %v85
  %1500 = vmatprep.subr.mxu0 %v83
  %1501 = vmatpush1.msra.mxu0 %v82
  %1502 = vmatprep.subr.mxu0 %v80
  %1503 = vmatpush1.msra.mxu0 %v79
  %1504 = vmatprep.subr.mxu0 %v77
  %1505 = vmatpush1.msra.mxu0 %v76
  %1506 = vmatprep.subr.mxu0 %v74
  %1507 = vmatpush1.msra.mxu0 %v73
  %1508 = vmatprep.subr.mxu0 %v71
  %1509 = vmatpush1.msra.mxu0 %v70
  %1510 = vmatprep.subr.mxu0 %v68
  %1511 = vmatpush1.msra.mxu0 %v67
  %1512 = vmatprep.subr.mxu0 %v65
  %1513 = vmatpush1.msra.mxu0 %v64
  %1514 = vmatprep.subr.mxu0 %v62
  %1515 = vmatpush1.msra.mxu0 %v61
  %1516 = vmatprep.subr.mxu0 %v59
  %1517 = vmatpush1.msra.mxu0 %v58
  %1518 = vmatprep.subr.mxu0 %v56
  %1519 = vmatpush1.msra.mxu0 %v55
  %1520 = vmatprep.subr.mxu0 %v53
  %1521 = vmatpush1.msra.mxu0 %v52
  %1522 = vmatprep.subr.mxu0 %v50
  %1523 = vmatpush1.msra.mxu0 %v49
  %1524 = vmatprep.subr.mxu0 0.0
  %1525 = vmatpush2.msra.mxu0 0.0
  %1526 = vmatprep.subr.mxu0 0.0
  %1527 = vmatpush2.msra.mxu0 0.0
  %1528 = vmatprep.subr.mxu0 0.0
  %1529 = vmatpush2.msra.mxu0 0.0
  %1530 = vmatprep.subr.mxu0 0.0
  %1531 = vmatpush2.msra.mxu0 0.0
  %1532 = vmatprep.subr.mxu0 0.0
  %1533 = vmatpush2.msra.mxu0 0.0
  %1534 = vmatprep.subr.mxu0 0.0
  %1535 = vmatpush2.msra.mxu0 0.0
  %1536 = vmatprep.subr.mxu0 0.0
  %1537 = vmatpush2.msra.mxu0 0.0
  %1538 = vmatprep.subr.mxu0 0.0
  %1539 = vmatpush2.msra.mxu0 0.0
  %1540 = vmatprep.subr.mxu0 0.0
  %1541 = vmatpush2.msra.mxu0 0.0
  %1542 = vmatprep.subr.mxu0 0.0
  %1543 = vmatpush2.msra.mxu0 0.0
  %1544 = vmatprep.subr.mxu0 0.0
  %1545 = vmatpush2.msra.mxu0 0.0
  %1546 = vmatprep.subr.mxu0 0.0
  %1547 = vmatpush2.msra.mxu0 0.0
  %1548 = vmatprep.subr.mxu0 0.0
  %1549 = vmatpush2.msra.mxu0 0.0
  %1550 = vmatprep.subr.mxu0 0.0
  %1551 = vmatpush2.msra.mxu0 0.0
  %1552 = vmatprep.subr.mxu0 0.0
  %1553 = vmatpush2.msra.mxu0 0.0
  %1554 = vmatprep.subr.mxu0 0.0
  %1555 = vmatpush2.msra.mxu0 0.0
  %1556 = vmatprep.mubr.f32.mxu0 0.0
  %1557 = vmatmul.mubr.f32.gmra.mxu0 %v1481
  %v1558 = vpop.f32.mrf.mxu0
  %v1559 = vadd.f32 0.0, %v1558
  %v1560 = vpop.f32.mrf.mxu0
  %v1561 = vadd.f32 0.0, %v1560
  %1562 = vdwg.mxu0
  %1563 = vmatprep.subr.mxu0 0.0
  %1564 = vmatpush1.msra.mxu0 %v96
  %1565 = vmatprep.subr.mxu0 0.0
  %1566 = vmatpush1.msra.mxu0 %v93
  %1567 = vmatprep.subr.mxu0 0.0
  %1568 = vmatpush1.msra.mxu0 %v90
  %1569 = vmatprep.subr.mxu0 0.0
  %1570 = vmatpush1.msra.mxu0 %v87
  %1571 = vmatprep.subr.mxu0 0.0
  %1572 = vmatpush1.msra.mxu0 %v84
  %1573 = vmatprep.subr.mxu0 0.0
  %1574 = vmatpush1.msra.mxu0 %v81
  %1575 = vmatprep.subr.mxu0 0.0
  %1576 = vmatpush1.msra.mxu0 %v78
  %1577 = vmatprep.subr.mxu0 0.0
  %1578 = vmatpush1.msra.mxu0 %v75
  %1579 = vmatprep.subr.mxu0 0.0
  %1580 = vmatpush1.msra.mxu0 %v72
  %1581 = vmatprep.subr.mxu0 0.0
  %1582 = vmatpush1.msra.mxu0 %v69
  %1583 = vmatprep.subr.mxu0 0.0
  %1584 = vmatpush1.msra.mxu0 %v66
  %1585 = vmatprep.subr.mxu0 0.0
  %1586 = vmatpush1.msra.mxu0 %v63
  %1587 = vmatprep.subr.mxu0 0.0
  %1588 = vmatpush1.msra.mxu0 %v60
  %1589 = vmatprep.subr.mxu0 0.0
  %1590 = vmatpush1.msra.mxu0 %v57
  %1591 = vmatprep.subr.mxu0 0.0
  %1592 = vmatpush1.msra.mxu0 %v54
  %1593 = vmatprep.subr.mxu0 0.0
  %1594 = vmatpush1.msra.mxu0 %v51
  %1595 = vmatprep.subr.mxu0 0.0
  %1596 = vmatpush2.msra.mxu0 0.0
  %1597 = vmatprep.subr.mxu0 0.0
  %1598 = vmatpush2.msra.mxu0 0.0
  %1599 = vmatprep.subr.mxu0 0.0
  %1600 = vmatpush2.msra.mxu0 0.0
  %1601 = vmatprep.subr.mxu0 0.0
  %1602 = vmatpush2.msra.mxu0 0.0
  %1603 = vmatprep.subr.mxu0 0.0
  %1604 = vmatpush2.msra.mxu0 0.0
  %1605 = vmatprep.subr.mxu0 0.0
  %1606 = vmatpush2.msra.mxu0 0.0
  %1607 = vmatprep.subr.mxu0 0.0
  %1608 = vmatpush2.msra.mxu0 0.0
  %1609 = vmatprep.subr.mxu0 0.0
  %1610 = vmatpush2.msra.mxu0 0.0
  %1611 = vmatprep.subr.mxu0 0.0
  %1612 = vmatpush2.msra.mxu0 0.0
  %1613 = vmatprep.subr.mxu0 0.0
  %1614 = vmatpush2.msra.mxu0 0.0
  %1615 = vmatprep.subr.mxu0 0.0
  %1616 = vmatpush2.msra.mxu0 0.0
  %1617 = vmatprep.subr.mxu0 0.0
  %1618 = vmatpush2.msra.mxu0 0.0
  %1619 = vmatprep.subr.mxu0 0.0
  %1620 = vmatpush2.msra.mxu0 0.0
  %1621 = vmatprep.subr.mxu0 0.0
  %1622 = vmatpush2.msra.mxu0 0.0
  %1623 = vmatprep.subr.mxu0 0.0
  %1624 = vmatpush2.msra.mxu0 0.0
  %1625 = vmatprep.subr.mxu0 0.0
  %1626 = vmatpush2.msra.mxu0 0.0
  %1627 = vmatprep.mubr.f32.mxu0 0.0
  %1628 = vmatmul.mubr.f32.gmra.mxu0 %v1481
  %v1629 = vpop.f32.mrf.mxu0
  %v1630 = vadd.f32 0.0, %v1629
  %v1631 = vpop.f32.mrf.mxu0
  %1632 = vdwg.mxu0
  %s1633 = scalar_lea.vmem %s2, 168
  %v1634 = vld [vmem:[%s1633] sm:$0xff]
  %v1635 = vld [vmem:[%s1633 + $0x8] sm:$0xff]
  %v1636 = vld [vmem:[%s1633 + $0x10] sm:$0xff]
  %v1637 = vadd.f32 %v1634, %v1559
  %v1638 = vxor.u32 %v1637, 2147483648
  %v1639 = vmul.f32 %v1638, 1.442695
  %v1640 = vpow.pop %v1639
  %v1641 = vadd.f32 %v1640, 1.0
  %v1642 = vrcp.pop %v1641
  %v1643 = vmul.f32 1.0, %v1642
  %v1644 = vadd.f32 %v1635, %v1561
  %v1645 = vxor.u32 %v1644, 2147483648
  %v1646 = vmul.f32 %v1645, 1.442695
  %v1647 = vpow.pop %v1646
  %v1648 = vadd.f32 %v1647, 1.0
  %v1649 = vrcp.pop %v1648
  %v1650 = vmul.f32 1.0, %v1649
  %v1651 = vadd.f32 %v1630, %v230
  %v1652 = vmul.f32 %v1643, %v1651
  %v1653 = vadd.f32 %v1636, %v1652
  %v1654 = vtanh.pop %v1653
  %v1655 = vsub.f32 1.0, %v1650
  %v1656 = vmul.f32 %v1655, %v1654
  %v1657 = vmul.f32 %v1650, %v1481
  %v1658 = vadd.f32 %v1656, %v1657
  %s1659 = scalar_lea.vmem %s3, 56
  %v1660 = vld [vmem:[%s1659] sm:$0xff]
  %1662 = vset.pattern.permute.xlu0 0
  %1663 = vperm.xlu0 %1662, %v1660
  %v1664 = vpop.permute.xlu0 %1663
  %v1666 = vmul.f32 %v1658, %v1664
  %s1667 = scalar_lea.vmem [#allocation2], 56
  %1668 = vst [vmem:[%s1667] sm:$0xff] %v1666
  %v1669 = vld [vmem:[#allocation2] sm:$0xff]
  %v1670 = vld [vmem:[#allocation2 + $0x8] sm:$0xff]
  %v1671 = vld [vmem:[#allocation2 + $0x10] sm:$0xff]
  %v1672 = vld [vmem:[#allocation2 + $0x18] sm:$0xff]
  %v1673 = vld [vmem:[#allocation2 + $0x20] sm:$0xff]
  %v1674 = vld [vmem:[#allocation2 + $0x28] sm:$0xff]
  %v1675 = vld [vmem:[#allocation2 + $0x30] sm:$0xff]
  %v1676 = vld [vmem:[#allocation2 + $0x38] sm:$0xff]
  %1677 = vmatprep.subr.mxu0 0.0
  %1678 = vmatpush1.msra.mxu0 %v224
  %1679 = vmatprep.subr.mxu0 0.0
  %1680 = vmatpush1.msra.mxu0 %v223
  %1681 = vmatprep.subr.mxu0 0.0
  %1682 = vmatpush1.msra.mxu0 %v222
  %1683 = vmatprep.subr.mxu0 0.0
  %1684 = vmatpush1.msra.mxu0 %v221
  %1685 = vmatprep.subr.mxu0 0.0
  %1686 = vmatpush1.msra.mxu0 %v220
  %1687 = vmatprep.subr.mxu0 0.0
  %1688 = vmatpush1.msra.mxu0 %v219
  %1689 = vmatprep.subr.mxu0 0.0
  %1690 = vmatpush1.msra.mxu0 %v218
  %1691 = vmatprep.subr.mxu0 0.0
  %1692 = vmatpush1.msra.mxu0 %v217
  %1693 = vmatprep.subr.mxu0 0.0
  %1694 = vmatpush1.msra.mxu0 %v216
  %1695 = vmatprep.subr.mxu0 0.0
  %1696 = vmatpush1.msra.mxu0 %v215
  %1697 = vmatprep.subr.mxu0 0.0
  %1698 = vmatpush1.msra.mxu0 %v214
  %1699 = vmatprep.subr.mxu0 0.0
  %1700 = vmatpush1.msra.mxu0 %v213
  %1701 = vmatprep.subr.mxu0 0.0
  %1702 = vmatpush1.msra.mxu0 %v212
  %1703 = vmatprep.subr.mxu0 0.0
  %1704 = vmatpush1.msra.mxu0 %v211
  %1705 = vmatprep.subr.mxu0 0.0
  %1706 = vmatpush1.msra.mxu0 %v210
  %1707 = vmatprep.subr.mxu0 0.0
  %1708 = vmatpush1.msra.mxu0 %v209
  %1709 = vmatprep.subr.mxu0 0.0
  %1710 = vmatpush2.msra.mxu0 0.0
  %1711 = vmatprep.subr.mxu0 0.0
  %1712 = vmatpush2.msra.mxu0 0.0
  %1713 = vmatprep.subr.mxu0 0.0
  %1714 = vmatpush2.msra.mxu0 0.0
  %1715 = vmatprep.subr.mxu0 0.0
  %1716 = vmatpush2.msra.mxu0 0.0
  %1717 = vmatprep.subr.mxu0 0.0
  %1718 = vmatpush2.msra.mxu0 0.0
  %1719 = vmatprep.subr.mxu0 0.0
  %1720 = vmatpush2.msra.mxu0 0.0
  %1721 = vmatprep.subr.mxu0 0.0
  %1722 = vmatpush2.msra.mxu0 0.0
  %1723 = vmatprep.subr.mxu0 0.0
  %1724 = vmatpush2.msra.mxu0 0.0
  %1725 = vmatprep.subr.mxu0 0.0
  %1726 = vmatpush2.msra.mxu0 0.0
  %1727 = vmatprep.subr.mxu0 0.0
  %1728 = vmatpush2.msra.mxu0 0.0
  %1729 = vmatprep.subr.mxu0 0.0
  %1730 = vmatpush2.msra.mxu0 0.0
  %1731 = vmatprep.subr.mxu0 0.0
  %1732 = vmatpush2.msra.mxu0 0.0
  %1733 = vmatprep.subr.mxu0 0.0
  %1734 = vmatpush2.msra.mxu0 0.0
  %1735 = vmatprep.subr.mxu0 0.0
  %1736 = vmatpush2.msra.mxu0 0.0
  %1737 = vmatprep.subr.mxu0 0.0
  %1738 = vmatpush2.msra.mxu0 0.0
  %1739 = vmatprep.subr.mxu0 0.0
  %1740 = vmatpush2.msra.mxu0 0.0
  %1741 = vmatprep.mubr.f32.mxu0 0.0
  %1742 = vmatmul.mubr.f32.gmra.mxu0 %v1669
  %v1743 = vpop.f32.mrf.mxu0
  %v1744 = vadd.f32 0.0, %v1743
  %v1745 = vpop.f32.mrf.mxu0
  %1746 = vmatprep.mubr.f32.mxu0 0.0
  %1747 = vmatmul.mubr.f32.gmra.mxu0 %v1670
  %v1748 = vpop.f32.mrf.mxu0
  %v1749 = vadd.f32 0.0, %v1748
  %v1750 = vpop.f32.mrf.mxu0
  %1751 = vmatprep.mubr.f32.mxu0 0.0
  %1752 = vmatmul.mubr.f32.gmra.mxu0 %v1671
  %v1753 = vpop.f32.mrf.mxu0
  %v1754 = vadd.f32 0.0, %v1753
  %v1755 = vpop.f32.mrf.mxu0
  %1756 = vmatprep.mubr.f32.mxu0 0.0
  %1757 = vmatmul.mubr.f32.gmra.mxu0 %v1672
  %v1758 = vpop.f32.mrf.mxu0
  %v1759 = vadd.f32 0.0, %v1758
  %v1760 = vpop.f32.mrf.mxu0
  %1761 = vmatprep.mubr.f32.mxu0 0.0
  %1762 = vmatmul.mubr.f32.gmra.mxu0 %v1673
  %v1763 = vpop.f32.mrf.mxu0
  %v1764 = vadd.f32 0.0, %v1763
  %v1765 = vpop.f32.mrf.mxu0
  %1766 = vmatprep.mubr.f32.mxu0 0.0
  %1767 = vmatmul.mubr.f32.gmra.mxu0 %v1674
  %v1768 = vpop.f32.mrf.mxu0
  %v1769 = vadd.f32 0.0, %v1768
  %v1770 = vpop.f32.mrf.mxu0
  %1771 = vmatprep.mubr.f32.mxu0 0.0
  %1772 = vmatmul.mubr.f32.gmra.mxu0 %v1675
  %v1773 = vpop.f32.mrf.mxu0
  %v1774 = vadd.f32 0.0, %v1773
  %v1775 = vpop.f32.mrf.mxu0
  %1776 = vmatprep.mubr.f32.mxu0 0.0
  %1777 = vmatmul.mubr.f32.gmra.mxu0 %v1676
  %v1778 = vpop.f32.mrf.mxu0
  %v1779 = vadd.f32 0.0, %v1778
  %v1780 = vpop.f32.mrf.mxu0
  %1781 = vdwg.mxu0
  %v1782 = vld [vmem:[%s0] sm:$0xff]
  %1783 = vmatprep.subr.mxu0 0.0
  %1784 = vmatpush1.msra.mxu0 %v208
  %1785 = vmatprep.subr.mxu0 0.0
  %1786 = vmatpush1.msra.mxu0 %v207
  %1787 = vmatprep.subr.mxu0 0.0
  %1788 = vmatpush1.msra.mxu0 %v206
  %1789 = vmatprep.subr.mxu0 0.0
  %1790 = vmatpush1.msra.mxu0 %v205
  %1791 = vmatprep.subr.mxu0 0.0
  %1792 = vmatpush1.msra.mxu0 %v204
  %1793 = vmatprep.subr.mxu0 0.0
  %1794 = vmatpush1.msra.mxu0 %v203
  %1795 = vmatprep.subr.mxu0 0.0
  %1796 = vmatpush1.msra.mxu0 %v202
  %1797 = vmatprep.subr.mxu0 0.0
  %1798 = vmatpush1.msra.mxu0 %v201
  %1799 = vmatprep.subr.mxu0 0.0
  %1800 = vmatpush1.msra.mxu0 %v200
  %1801 = vmatprep.subr.mxu0 0.0
  %1802 = vmatpush1.msra.mxu0 %v199
  %1803 = vmatprep.subr.mxu0 0.0
  %1804 = vmatpush1.msra.mxu0 %v198
  %1805 = vmatprep.subr.mxu0 0.0
  %1806 = vmatpush1.msra.mxu0 %v197
  %1807 = vmatprep.subr.mxu0 0.0
  %1808 = vmatpush1.msra.mxu0 %v196
  %1809 = vmatprep.subr.mxu0 0.0
  %1810 = vmatpush1.msra.mxu0 %v195
  %1811 = vmatprep.subr.mxu0 0.0
  %1812 = vmatpush1.msra.mxu0 %v194
  %1813 = vmatprep.subr.mxu0 0.0
  %1814 = vmatpush1.msra.mxu0 %v193
  %1815 = vmatprep.subr.mxu0 0.0
  %1816 = vmatpush2.msra.mxu0 0.0
  %1817 = vmatprep.subr.mxu0 0.0
  %1818 = vmatpush2.msra.mxu0 0.0
  %1819 = vmatprep.subr.mxu0 0.0
  %1820 = vmatpush2.msra.mxu0 0.0
  %1821 = vmatprep.subr.mxu0 0.0
  %1822 = vmatpush2.msra.mxu0 0.0
  %1823 = vmatprep.subr.mxu0 0.0
  %1824 = vmatpush2.msra.mxu0 0.0
  %1825 = vmatprep.subr.mxu0 0.0
  %1826 = vmatpush2.msra.mxu0 0.0
  %1827 = vmatprep.subr.mxu0 0.0
  %1828 = vmatpush2.msra.mxu0 0.0
  %1829 = vmatprep.subr.mxu0 0.0
  %1830 = vmatpush2.msra.mxu0 0.0
  %1831 = vmatprep.subr.mxu0 0.0
  %1832 = vmatpush2.msra.mxu0 0.0
  %1833 = vmatprep.subr.mxu0 0.0
  %1834 = vmatpush2.msra.mxu0 0.0
  %1835 = vmatprep.subr.mxu0 0.0
  %1836 = vmatpush2.msra.mxu0 0.0
  %1837 = vmatprep.subr.mxu0 0.0
  %1838 = vmatpush2.msra.mxu0 0.0
  %1839 = vmatprep.subr.mxu0 0.0
  %1840 = vmatpush2.msra.mxu0 0.0
  %1841 = vmatprep.subr.mxu0 0.0
  %1842 = vmatpush2.msra.mxu0 0.0
  %1843 = vmatprep.subr.mxu0 0.0
  %1844 = vmatpush2.msra.mxu0 0.0
  %1845 = vmatprep.subr.mxu0 0.0
  %1846 = vmatpush2.msra.mxu0 0.0
  %1847 = vmatprep.mubr.f32.mxu0 0.0
  %1848 = vmatmul.mubr.f32.gmra.mxu0 0.0
  %v1849 = vpop.f32.mrf.mxu0
  %v1850 = vadd.f32 0.0, %v1849
  %v1851 = vpop.f32.mrf.mxu0
  %1852 = vdwg.mxu0
  %v1853 = vadd.f32 %v1782, %v1850
  %1854 = vmax.xlane.f32.xlu0 %v1853
  %v1855 = vpop.xlane.xlu0 %1854
  %v1856 = vsub.f32 %v1853, %v1855
  %v1857 = vmul.f32 %v1856, 1.442695
  %v1858 = vpow.pop %v1857
  %1859 = vadd.xlane.f32.xlu0 %v1858
  %v1860 = vpop.xlane.xlu0 %1859
  %v1861 = vrcp.pop %v1860
  %v1862 = vmul.f32 %v1858, %v1861
  %1863 = vst [vmem:[%s15] sm:$0xff] %v1862
  %1864 = vxpose.xlu0.b32.start [1/16] %v1862, 128
  %1865 = vxpose.xlu0.b32.cont [2/16] 0.0, 128
  %1866 = vxpose.xlu0.b32.cont [3/16] 0.0, 128
  %1867 = vxpose.xlu0.b32.cont [4/16] 0.0, 128
  %1868 = vxpose.xlu0.b32.cont [5/16] 0.0, 128
  %1869 = vxpose.xlu0.b32.cont [6/16] 0.0, 128
  %1870 = vxpose.xlu0.b32.cont [7/16] 0.0, 128
  %1871 = vxpose.xlu0.b32.cont [8/16] 0.0, 128
  %1872 = vxpose.xlu0.b32.cont [9/16] 0.0, 128
  %1873 = vxpose.xlu0.b32.cont [10/16] 0.0, 128
  %1874 = vxpose.xlu0.b32.cont [11/16] 0.0, 128
  %1875 = vxpose.xlu0.b32.cont [12/16] 0.0, 128
  %1876 = vxpose.xlu0.b32.cont [13/16] 0.0, 128
  %1877 = vxpose.xlu0.b32.cont [14/16] 0.0, 128
  %1878 = vxpose.xlu0.b32.cont [15/16] 0.0, 128
  %1879 = vxpose.xlu0.b32.end [16/16] 0.0, 128
  %v1880 = vpop.trf.xlu0
  %v1881 = vpop.trf.xlu0
  %v1882 = vpop.trf.xlu0
  %v1883 = vpop.trf.xlu0
  %v1884 = vpop.trf.xlu0
  %v1885 = vpop.trf.xlu0
  %v1886 = vpop.trf.xlu0
  %v1887 = vpop.trf.xlu0
  %v1888 = vpop.trf.xlu0
  %v1889 = vpop.trf.xlu0
  %v1890 = vpop.trf.xlu0
  %v1891 = vpop.trf.xlu0
  %v1892 = vpop.trf.xlu0
  %v1893 = vpop.trf.xlu0
  %v1894 = vpop.trf.xlu0
  %v1895 = vpop.trf.xlu0
  %v1896 = vlaneseq
  %v1897 = vshrl.u32 %v1896, 7
  %v1898 = vsub.s32 0, %v1897
  %v1899 = vrot.slane %v1880, %v1898
  %1901 = vbcast.lane.b32.xlu0 %v1899, 256
  %v1902 = vpop.permute.xlu0 %1901
  %v1903 = vlaneseq
  %v1904 = vshrl.u32 %v1903, 7
  %v1905 = vsub.s32 1, %v1904
  %v1906 = vrot.slane %v1880, %v1905
  %1908 = vbcast.lane.b32.xlu0 %v1906, 256
  %v1909 = vpop.permute.xlu0 %1908
  %v1910 = vlaneseq
  %v1911 = vshrl.u32 %v1910, 7
  %v1912 = vsub.s32 2, %v1911
  %v1913 = vrot.slane %v1880, %v1912
  %1915 = vbcast.lane.b32.xlu0 %v1913, 256
  %v1916 = vpop.permute.xlu0 %1915
  %v1917 = vlaneseq
  %v1918 = vshrl.u32 %v1917, 7
  %v1919 = vsub.s32 3, %v1918
  %v1920 = vrot.slane %v1880, %v1919
  %1922 = vbcast.lane.b32.xlu0 %v1920, 256
  %v1923 = vpop.permute.xlu0 %1922
  %v1924 = vlaneseq
  %v1925 = vshrl.u32 %v1924, 7
  %v1926 = vsub.s32 4, %v1925
  %v1927 = vrot.slane %v1880, %v1926
  %1929 = vbcast.lane.b32.xlu0 %v1927, 256
  %v1930 = vpop.permute.xlu0 %1929
  %v1931 = vlaneseq
  %v1932 = vshrl.u32 %v1931, 7
  %v1933 = vsub.s32 5, %v1932
  %v1934 = vrot.slane %v1880, %v1933
  %1936 = vbcast.lane.b32.xlu0 %v1934, 256
  %v1937 = vpop.permute.xlu0 %1936
  %v1938 = vlaneseq
  %v1939 = vshrl.u32 %v1938, 7
  %v1940 = vsub.s32 6, %v1939
  %v1941 = vrot.slane %v1880, %v1940
  %1943 = vbcast.lane.b32.xlu0 %v1941, 256
  %v1944 = vpop.permute.xlu0 %1943
  %v1945 = vlaneseq
  %v1946 = vshrl.u32 %v1945, 7
  %v1947 = vsub.s32 7, %v1946
  %v1948 = vrot.slane %v1880, %v1947
  %1950 = vbcast.lane.b32.xlu0 %v1948, 256
  %v1951 = vpop.permute.xlu0 %1950
  %v1952 = vmul.f32 %v1902, %v1744
  %v1953 = vmul.f32 %v1909, %v1749
  %v1954 = vmul.f32 %v1916, %v1754
  %v1955 = vmul.f32 %v1923, %v1759
  %v1956 = vmul.f32 %v1930, %v1764
  %v1957 = vmul.f32 %v1937, %v1769
  %v1958 = vmul.f32 %v1944, %v1774
  %v1959 = vmul.f32 %v1951, %v1779
  %v1960 = vadd.f32 %v1952, %v1953
  %v1961 = vadd.f32 %v1960, %v1954
  %v1962 = vadd.f32 %v1961, %v1955
  %v1963 = vadd.f32 %v1962, %v1956
  %v1964 = vadd.f32 %v1963, %v1957
  %v1965 = vadd.f32 %v1964, %v1958
  %v1966 = vadd.f32 %v1965, %v1959
  %v1967 = vld [vmem:[%s1] sm:$0xff]
  %v1968 = vadd.f32 %v1967, %v1966
  %v1969 = vmax.f32 %v1968, 0.0
  %1970 = vmatprep.subr.mxu0 %v143
  %1971 = vmatpush1.msra.mxu0 %v142
  %1972 = vmatprep.subr.mxu0 %v140
  %1973 = vmatpush1.msra.mxu0 %v139
  %1974 = vmatprep.subr.mxu0 %v137
  %1975 = vmatpush1.msra.mxu0 %v136
  %1976 = vmatprep.subr.mxu0 %v134
  %1977 = vmatpush1.msra.mxu0 %v133
  %1978 = vmatprep.subr.mxu0 %v131
  %1979 = vmatpush1.msra.mxu0 %v130
  %1980 = vmatprep.subr.mxu0 %v128
  %1981 = vmatpush1.msra.mxu0 %v127
  %1982 = vmatprep.subr.mxu0 %v125
  %1983 = vmatpush1.msra.mxu0 %v124
  %1984 = vmatprep.subr.mxu0 %v122
  %1985 = vmatpush1.msra.mxu0 %v121
  %1986 = vmatprep.subr.mxu0 %v119
  %1987 = vmatpush1.msra.mxu0 %v118
  %1988 = vmatprep.subr.mxu0 %v116
  %1989 = vmatpush1.msra.mxu0 %v115
  %1990 = vmatprep.subr.mxu0 %v113
  %1991 = vmatpush1.msra.mxu0 %v112
  %1992 = vmatprep.subr.mxu0 %v110
  %1993 = vmatpush1.msra.mxu0 %v109
  %1994 = vmatprep.subr.mxu0 %v107
  %1995 = vmatpush1.msra.mxu0 %v106
  %1996 = vmatprep.subr.mxu0 %v104
  %1997 = vmatpush1.msra.mxu0 %v103
  %1998 = vmatprep.subr.mxu0 %v101
  %1999 = vmatpush1.msra.mxu0 %v100
  %2000 = vmatprep.subr.mxu0 %v98
  %2001 = vmatpush1.msra.mxu0 %v97
  %2002 = vmatprep.subr.mxu0 0.0
  %2003 = vmatpush2.msra.mxu0 0.0
  %2004 = vmatprep.subr.mxu0 0.0
  %2005 = vmatpush2.msra.mxu0 0.0
  %2006 = vmatprep.subr.mxu0 0.0
  %2007 = vmatpush2.msra.mxu0 0.0
  %2008 = vmatprep.subr.mxu0 0.0
  %2009 = vmatpush2.msra.mxu0 0.0
  %2010 = vmatprep.subr.mxu0 0.0
  %2011 = vmatpush2.msra.mxu0 0.0
  %2012 = vmatprep.subr.mxu0 0.0
  %2013 = vmatpush2.msra.mxu0 0.0
  %2014 = vmatprep.subr.mxu0 0.0
  %2015 = vmatpush2.msra.mxu0 0.0
  %2016 = vmatprep.subr.mxu0 0.0
  %2017 = vmatpush2.msra.mxu0 0.0
  %2018 = vmatprep.subr.mxu0 0.0
  %2019 = vmatpush2.msra.mxu0 0.0
  %2020 = vmatprep.subr.mxu0 0.0
  %2021 = vmatpush2.msra.mxu0 0.0
  %2022 = vmatprep.subr.mxu0 0.0
  %2023 = vmatpush2.msra.mxu0 0.0
  %2024 = vmatprep.subr.mxu0 0.0
  %2025 = vmatpush2.msra.mxu0 0.0
  %2026 = vmatprep.subr.mxu0 0.0
  %2027 = vmatpush2.msra.mxu0 0.0
  %2028 = vmatprep.subr.mxu0 0.0
  %2029 = vmatpush2.msra.mxu0 0.0
  %2030 = vmatprep.subr.mxu0 0.0
  %2031 = vmatpush2.msra.mxu0 0.0
  %2032 = vmatprep.subr.mxu0 0.0
  %2033 = vmatpush2.msra.mxu0 0.0
  %2034 = vmatprep.mubr.f32.mxu0 0.0
  %2035 = vmatmul.mubr.f32.gmra.mxu0 %v1969
  %v2036 = vpop.f32.mrf.mxu0
  %v2037 = vadd.f32 %v244, %v2036
  %v2038 = vpop.f32.mrf.mxu0
  %v2039 = vadd.f32 %v248, %v2038
  %2040 = vdwg.mxu0
  %2041 = vmatprep.subr.mxu0 0.0
  %2042 = vmatpush1.msra.mxu0 %v144
  %2043 = vmatprep.subr.mxu0 0.0
  %2044 = vmatpush1.msra.mxu0 %v141
  %2045 = vmatprep.subr.mxu0 0.0
  %2046 = vmatpush1.msra.mxu0 %v138
  %2047 = vmatprep.subr.mxu0 0.0
  %2048 = vmatpush1.msra.mxu0 %v135
  %2049 = vmatprep.subr.mxu0 0.0
  %2050 = vmatpush1.msra.mxu0 %v132
  %2051 = vmatprep.subr.mxu0 0.0
  %2052 = vmatpush1.msra.mxu0 %v129
  %2053 = vmatprep.subr.mxu0 0.0
  %2054 = vmatpush1.msra.mxu0 %v126
  %2055 = vmatprep.subr.mxu0 0.0
  %2056 = vmatpush1.msra.mxu0 %v123
  %2057 = vmatprep.subr.mxu0 0.0
  %2058 = vmatpush1.msra.mxu0 %v120
  %2059 = vmatprep.subr.mxu0 0.0
  %2060 = vmatpush1.msra.mxu0 %v117
  %2061 = vmatprep.subr.mxu0 0.0
  %2062 = vmatpush1.msra.mxu0 %v114
  %2063 = vmatprep.subr.mxu0 0.0
  %2064 = vmatpush1.msra.mxu0 %v111
  %2065 = vmatprep.subr.mxu0 0.0
  %2066 = vmatpush1.msra.mxu0 %v108
  %2067 = vmatprep.subr.mxu0 0.0
  %2068 = vmatpush1.msra.mxu0 %v105
  %2069 = vmatprep.subr.mxu0 0.0
  %2070 = vmatpush1.msra.mxu0 %v102
  %2071 = vmatprep.subr.mxu0 0.0
  %2072 = vmatpush1.msra.mxu0 %v99
  %2073 = vmatprep.subr.mxu0 0.0
  %2074 = vmatpush2.msra.mxu0 0.0
  %2075 = vmatprep.subr.mxu0 0.0
  %2076 = vmatpush2.msra.mxu0 0.0
  %2077 = vmatprep.subr.mxu0 0.0
  %2078 = vmatpush2.msra.mxu0 0.0
  %2079 = vmatprep.subr.mxu0 0.0
  %2080 = vmatpush2.msra.mxu0 0.0
  %2081 = vmatprep.subr.mxu0 0.0
  %2082 = vmatpush2.msra.mxu0 0.0
  %2083 = vmatprep.subr.mxu0 0.0
  %2084 = vmatpush2.msra.mxu0 0.0
  %2085 = vmatprep.subr.mxu0 0.0
  %2086 = vmatpush2.msra.mxu0 0.0
  %2087 = vmatprep.subr.mxu0 0.0
  %2088 = vmatpush2.msra.mxu0 0.0
  %2089 = vmatprep.subr.mxu0 0.0
  %2090 = vmatpush2.msra.mxu0 0.0
  %2091 = vmatprep.subr.mxu0 0.0
  %2092 = vmatpush2.msra.mxu0 0.0
  %2093 = vmatprep.subr.mxu0 0.0
  %2094 = vmatpush2.msra.mxu0 0.0
  %2095 = vmatprep.subr.mxu0 0.0
  %2096 = vmatpush2.msra.mxu0 0.0
  %2097 = vmatprep.subr.mxu0 0.0
  %2098 = vmatpush2.msra.mxu0 0.0
  %2099 = vmatprep.subr.mxu0 0.0
  %2100 = vmatpush2.msra.mxu0 0.0
  %2101 = vmatprep.subr.mxu0 0.0
  %2102 = vmatpush2.msra.mxu0 0.0
  %2103 = vmatprep.subr.mxu0 0.0
  %2104 = vmatpush2.msra.mxu0 0.0
  %2105 = vmatprep.mubr.f32.mxu0 0.0
  %2106 = vmatmul.mubr.f32.gmra.mxu0 %v1969
  %v2107 = vpop.f32.mrf.mxu0
  %v2108 = vadd.f32 %v252, %v2107
  %v2109 = vpop.f32.mrf.mxu0
  %2110 = vdwg.mxu0
  %2111 = vmatprep.subr.mxu0 %v191
  %2112 = vmatpush1.msra.mxu0 %v190
  %2113 = vmatprep.subr.mxu0 %v188
  %2114 = vmatpush1.msra.mxu0 %v187
  %2115 = vmatprep.subr.mxu0 %v185
  %2116 = vmatpush1.msra.mxu0 %v184
  %2117 = vmatprep.subr.mxu0 %v182
  %2118 = vmatpush1.msra.mxu0 %v181
  %2119 = vmatprep.subr.mxu0 %v179
  %2120 = vmatpush1.msra.mxu0 %v178
  %2121 = vmatprep.subr.mxu0 %v176
  %2122 = vmatpush1.msra.mxu0 %v175
  %2123 = vmatprep.subr.mxu0 %v173
  %2124 = vmatpush1.msra.mxu0 %v172
  %2125 = vmatprep.subr.mxu0 %v170
  %2126 = vmatpush1.msra.mxu0 %v169
  %2127 = vmatprep.subr.mxu0 %v167
  %2128 = vmatpush1.msra.mxu0 %v166
  %2129 = vmatprep.subr.mxu0 %v164
  %2130 = vmatpush1.msra.mxu0 %v163
  %2131 = vmatprep.subr.mxu0 %v161
  %2132 = vmatpush1.msra.mxu0 %v160
  %2133 = vmatprep.subr.mxu0 %v158
  %2134 = vmatpush1.msra.mxu0 %v157
  %2135 = vmatprep.subr.mxu0 %v155
  %2136 = vmatpush1.msra.mxu0 %v154
  %2137 = vmatprep.subr.mxu0 %v152
  %2138 = vmatpush1.msra.mxu0 %v151
  %2139 = vmatprep.subr.mxu0 %v149
  %2140 = vmatpush1.msra.mxu0 %v148
  %2141 = vmatprep.subr.mxu0 %v146
  %2142 = vmatpush1.msra.mxu0 %v145
  %2143 = vmatprep.subr.mxu0 0.0
  %2144 = vmatpush2.msra.mxu0 0.0
  %2145 = vmatprep.subr.mxu0 0.0
  %2146 = vmatpush2.msra.mxu0 0.0
  %2147 = vmatprep.subr.mxu0 0.0
  %2148 = vmatpush2.msra.mxu0 0.0
  %2149 = vmatprep.subr.mxu0 0.0
  %2150 = vmatpush2.msra.mxu0 0.0
  %2151 = vmatprep.subr.mxu0 0.0
  %2152 = vmatpush2.msra.mxu0 0.0
  %2153 = vmatprep.subr.mxu0 0.0
  %2154 = vmatpush2.msra.mxu0 0.0
  %2155 = vmatprep.subr.mxu0 0.0
  %2156 = vmatpush2.msra.mxu0 0.0
  %2157 = vmatprep.subr.mxu0 0.0
  %2158 = vmatpush2.msra.mxu0 0.0
  %2159 = vmatprep.subr.mxu0 0.0
  %2160 = vmatpush2.msra.mxu0 0.0
  %2161 = vmatprep.subr.mxu0 0.0
  %2162 = vmatpush2.msra.mxu0 0.0
  %2163 = vmatprep.subr.mxu0 0.0
  %2164 = vmatpush2.msra.mxu0 0.0
  %2165 = vmatprep.subr.mxu0 0.0
  %2166 = vmatpush2.msra.mxu0 0.0
  %2167 = vmatprep.subr.mxu0 0.0
  %2168 = vmatpush2.msra.mxu0 0.0
  %2169 = vmatprep.subr.mxu0 0.0
  %2170 = vmatpush2.msra.mxu0 0.0
  %2171 = vmatprep.subr.mxu0 0.0
  %2172 = vmatpush2.msra.mxu0 0.0
  %2173 = vmatprep.subr.mxu0 0.0
  %2174 = vmatpush2.msra.mxu0 0.0
  %2175 = vmatprep.mubr.f32.mxu0 0.0
  %2176 = vmatmul.mubr.f32.gmra.mxu0 0.0
  %v2177 = vpop.f32.mrf.mxu0
  %v2178 = vadd.f32 0.0, %v2177
  %v2179 = vpop.f32.mrf.mxu0
  %v2180 = vadd.f32 0.0, %v2179
  %2181 = vdwg.mxu0
  %2182 = vmatprep.subr.mxu0 0.0
  %2183 = vmatpush1.msra.mxu0 %v192
  %2184 = vmatprep.subr.mxu0 0.0
  %2185 = vmatpush1.msra.mxu0 %v189
  %2186 = vmatprep.subr.mxu0 0.0
  %2187 = vmatpush1.msra.mxu0 %v186
  %2188 = vmatprep.subr.mxu0 0.0
  %2189 = vmatpush1.msra.mxu0 %v183
  %2190 = vmatprep.subr.mxu0 0.0
  %2191 = vmatpush1.msra.mxu0 %v180
  %2192 = vmatprep.subr.mxu0 0.0
  %2193 = vmatpush1.msra.mxu0 %v177
  %2194 = vmatprep.subr.mxu0 0.0
  %2195 = vmatpush1.msra.mxu0 %v174
  %2196 = vmatprep.subr.mxu0 0.0
  %2197 = vmatpush1.msra.mxu0 %v171
  %2198 = vmatprep.subr.mxu0 0.0
  %2199 = vmatpush1.msra.mxu0 %v168
  %2200 = vmatprep.subr.mxu0 0.0
  %2201 = vmatpush1.msra.mxu0 %v165
  %2202 = vmatprep.subr.mxu0 0.0
  %2203 = vmatpush1.msra.mxu0 %v162
  %2204 = vmatprep.subr.mxu0 0.0
  %2205 = vmatpush1.msra.mxu0 %v159
  %2206 = vmatprep.subr.mxu0 0.0
  %2207 = vmatpush1.msra.mxu0 %v156
  %2208 = vmatprep.subr.mxu0 0.0
  %2209 = vmatpush1.msra.mxu0 %v153
  %2210 = vmatprep.subr.mxu0 0.0
  %2211 = vmatpush1.msra.mxu0 %v150
  %2212 = vmatprep.subr.mxu0 0.0
  %2213 = vmatpush1.msra.mxu0 %v147
  %2214 = vmatprep.subr.mxu0 0.0
  %2215 = vmatpush2.msra.mxu0 0.0
  %2216 = vmatprep.subr.mxu0 0.0
  %2217 = vmatpush2.msra.mxu0 0.0
  %2218 = vmatprep.subr.mxu0 0.0
  %2219 = vmatpush2.msra.mxu0 0.0
  %2220 = vmatprep.subr.mxu0 0.0
  %2221 = vmatpush2.msra.mxu0 0.0
  %2222 = vmatprep.subr.mxu0 0.0
  %2223 = vmatpush2.msra.mxu0 0.0
  %2224 = vmatprep.subr.mxu0 0.0
  %2225 = vmatpush2.msra.mxu0 0.0
  %2226 = vmatprep.subr.mxu0 0.0
  %2227 = vmatpush2.msra.mxu0 0.0
  %2228 = vmatprep.subr.mxu0 0.0
  %2229 = vmatpush2.msra.mxu0 0.0
  %2230 = vmatprep.subr.mxu0 0.0
  %2231 = vmatpush2.msra.mxu0 0.0
  %2232 = vmatprep.subr.mxu0 0.0
  %2233 = vmatpush2.msra.mxu0 0.0
  %2234 = vmatprep.subr.mxu0 0.0
  %2235 = vmatpush2.msra.mxu0 0.0
  %2236 = vmatprep.subr.mxu0 0.0
  %2237 = vmatpush2.msra.mxu0 0.0
  %2238 = vmatprep.subr.mxu0 0.0
  %2239 = vmatpush2.msra.mxu0 0.0
  %2240 = vmatprep.subr.mxu0 0.0
  %2241 = vmatpush2.msra.mxu0 0.0
  %2242 = vmatprep.subr.mxu0 0.0
  %2243 = vmatpush2.msra.mxu0 0.0
  %2244 = vmatprep.subr.mxu0 0.0
  %2245 = vmatpush2.msra.mxu0 0.0
  %2246 = vmatprep.mubr.f32.mxu0 0.0
  %2247 = vmatmul.mubr.f32.gmra.mxu0 0.0
  %v2248 = vpop.f32.mrf.mxu0
  %v2249 = vadd.f32 0.0, %v2248
  %v2250 = vpop.f32.mrf.mxu0
  %2251 = vdwg.mxu0
  %v2252 = vadd.f32 %v2037, %v2178
  %v2253 = vxor.u32 %v2252, 2147483648
  %v2254 = vmul.f32 %v2253, 1.442695
  %v2255 = vpow.pop %v2254
  %v2256 = vadd.f32 %v2255, 1.0
  %v2257 = vrcp.pop %v2256
  %v2258 = vmul.f32 1.0, %v2257
  %v2259 = vadd.f32 %v2039, %v2180
  %v2260 = vxor.u32 %v2259, 2147483648
  %v2261 = vmul.f32 %v2260, 1.442695
  %v2262 = vpow.pop %v2261
  %v2263 = vadd.f32 %v2262, 1.0
  %v2264 = vrcp.pop %v2263
  %v2265 = vmul.f32 1.0, %v2264
  %v2266 = vadd.f32 %v2249, %v237
  %v2267 = vmul.f32 %v2258, %v2266
  %v2268 = vadd.f32 %v2108, %v2267
  %v2269 = vtanh.pop %v2268
  %v2270 = vsub.f32 1.0, %v2265
  %v2271 = vmul.f32 %v2270, %v2269
  %v2272 = vmul.f32 %v2265, 0.0
  %v2273 = vadd.f32 %v2271, %v2272
  %s2274 = scalar_lea.vmem %s0, 8
  %v2275 = vld [vmem:[%s2274] sm:$0xff]
  %2276 = vmatprep.subr.mxu0 0.0
  %2277 = vmatpush1.msra.mxu0 %v208
  %2278 = vmatprep.subr.mxu0 0.0
  %2279 = vmatpush1.msra.mxu0 %v207
  %2280 = vmatprep.subr.mxu0 0.0
  %2281 = vmatpush1.msra.mxu0 %v206
  %2282 = vmatprep.subr.mxu0 0.0
  %2283 = vmatpush1.msra.mxu0 %v205
  %2284 = vmatprep.subr.mxu0 0.0
  %2285 = vmatpush1.msra.mxu0 %v204
  %2286 = vmatprep.subr.mxu0 0.0
  %2287 = vmatpush1.msra.mxu0 %v203
  %2288 = vmatprep.subr.mxu0 0.0
  %2289 = vmatpush1.msra.mxu0 %v202
  %2290 = vmatprep.subr.mxu0 0.0
  %2291 = vmatpush1.msra.mxu0 %v201
  %2292 = vmatprep.subr.mxu0 0.0
  %2293 = vmatpush1.msra.mxu0 %v200
  %2294 = vmatprep.subr.mxu0 0.0
  %2295 = vmatpush1.msra.mxu0 %v199
  %2296 = vmatprep.subr.mxu0 0.0
  %2297 = vmatpush1.msra.mxu0 %v198
  %2298 = vmatprep.subr.mxu0 0.0
  %2299 = vmatpush1.msra.mxu0 %v197
  %2300 = vmatprep.subr.mxu0 0.0
  %2301 = vmatpush1.msra.mxu0 %v196
  %2302 = vmatprep.subr.mxu0 0.0
  %2303 = vmatpush1.msra.mxu0 %v195
  %2304 = vmatprep.subr.mxu0 0.0
  %2305 = vmatpush1.msra.mxu0 %v194
  %2306 = vmatprep.subr.mxu0 0.0
  %2307 = vmatpush1.msra.mxu0 %v193
  %2308 = vmatprep.subr.mxu0 0.0
  %2309 = vmatpush2.msra.mxu0 0.0
  %2310 = vmatprep.subr.mxu0 0.0
  %2311 = vmatpush2.msra.mxu0 0.0
  %2312 = vmatprep.subr.mxu0 0.0
  %2313 = vmatpush2.msra.mxu0 0.0
  %2314 = vmatprep.subr.mxu0 0.0
  %2315 = vmatpush2.msra.mxu0 0.0
  %2316 = vmatprep.subr.mxu0 0.0
  %2317 = vmatpush2.msra.mxu0 0.0
  %2318 = vmatprep.subr.mxu0 0.0
  %2319 = vmatpush2.msra.mxu0 0.0
  %2320 = vmatprep.subr.mxu0 0.0
  %2321 = vmatpush2.msra.mxu0 0.0
  %2322 = vmatprep.subr.mxu0 0.0
  %2323 = vmatpush2.msra.mxu0 0.0
  %2324 = vmatprep.subr.mxu0 0.0
  %2325 = vmatpush2.msra.mxu0 0.0
  %2326 = vmatprep.subr.mxu0 0.0
  %2327 = vmatpush2.msra.mxu0 0.0
  %2328 = vmatprep.subr.mxu0 0.0
  %2329 = vmatpush2.msra.mxu0 0.0
  %2330 = vmatprep.subr.mxu0 0.0
  %2331 = vmatpush2.msra.mxu0 0.0
  %2332 = vmatprep.subr.mxu0 0.0
  %2333 = vmatpush2.msra.mxu0 0.0
  %2334 = vmatprep.subr.mxu0 0.0
  %2335 = vmatpush2.msra.mxu0 0.0
  %2336 = vmatprep.subr.mxu0 0.0
  %2337 = vmatpush2.msra.mxu0 0.0
  %2338 = vmatprep.subr.mxu0 0.0
  %2339 = vmatpush2.msra.mxu0 0.0
  %2340 = vmatprep.mubr.f32.mxu0 0.0
  %2341 = vmatmul.mubr.f32.gmra.mxu0 %v2273
  %v2342 = vpop.f32.mrf.mxu0
  %v2343 = vadd.f32 0.0, %v2342
  %v2344 = vpop.f32.mrf.mxu0
  %2345 = vdwg.mxu0
  %v2346 = vadd.f32 %v2275, %v2343
  %2347 = vmax.xlane.f32.xlu0 %v2346
  %v2348 = vpop.xlane.xlu0 %2347
  %v2349 = vsub.f32 %v2346, %v2348
  %v2350 = vmul.f32 %v2349, 1.442695
  %v2351 = vpow.pop %v2350
  %2352 = vadd.xlane.f32.xlu0 %v2351
  %v2353 = vpop.xlane.xlu0 %2352
  %v2354 = vrcp.pop %v2353
  %v2355 = vmul.f32 %v2351, %v2354
  %s2356 = scalar_lea.vmem %s15, 8
  %2357 = vst [vmem:[%s2356] sm:$0xff] %v2355
  %2358 = vxpose.xlu0.b32.start [1/16] %v2355, 128
  %2359 = vxpose.xlu0.b32.cont [2/16] 0.0, 128
  %2360 = vxpose.xlu0.b32.cont [3/16] 0.0, 128
  %2361 = vxpose.xlu0.b32.cont [4/16] 0.0, 128
  %2362 = vxpose.xlu0.b32.cont [5/16] 0.0, 128
  %2363 = vxpose.xlu0.b32.cont [6/16] 0.0, 128
  %2364 = vxpose.xlu0.b32.cont [7/16] 0.0, 128
  %2365 = vxpose.xlu0.b32.cont [8/16] 0.0, 128
  %2366 = vxpose.xlu0.b32.cont [9/16] 0.0, 128
  %2367 = vxpose.xlu0.b32.cont [10/16] 0.0, 128
  %2368 = vxpose.xlu0.b32.cont [11/16] 0.0, 128
  %2369 = vxpose.xlu0.b32.cont [12/16] 0.0, 128
  %2370 = vxpose.xlu0.b32.cont [13/16] 0.0, 128
  %2371 = vxpose.xlu0.b32.cont [14/16] 0.0, 128
  %2372 = vxpose.xlu0.b32.cont [15/16] 0.0, 128
  %2373 = vxpose.xlu0.b32.end [16/16] 0.0, 128
  %v2374 = vpop.trf.xlu0
  %v2375 = vpop.trf.xlu0
  %v2376 = vpop.trf.xlu0
  %v2377 = vpop.trf.xlu0
  %v2378 = vpop.trf.xlu0
  %v2379 = vpop.trf.xlu0
  %v2380 = vpop.trf.xlu0
  %v2381 = vpop.trf.xlu0
  %v2382 = vpop.trf.xlu0
  %v2383 = vpop.trf.xlu0
  %v2384 = vpop.trf.xlu0
  %v2385 = vpop.trf.xlu0
  %v2386 = vpop.trf.xlu0
  %v2387 = vpop.trf.xlu0
  %v2388 = vpop.trf.xlu0
  %v2389 = vpop.trf.xlu0
  %v2390 = vlaneseq
  %v2391 = vshrl.u32 %v2390, 7
  %v2392 = vsub.s32 0, %v2391
  %v2393 = vrot.slane %v2374, %v2392
  %2395 = vbcast.lane.b32.xlu0 %v2393, 256
  %v2396 = vpop.permute.xlu0 %2395
  %v2397 = vlaneseq
  %v2398 = vshrl.u32 %v2397, 7
  %v2399 = vsub.s32 1, %v2398
  %v2400 = vrot.slane %v2374, %v2399
  %2402 = vbcast.lane.b32.xlu0 %v2400, 256
  %v2403 = vpop.permute.xlu0 %2402
  %v2404 = vlaneseq
  %v2405 = vshrl.u32 %v2404, 7
  %v2406 = vsub.s32 2, %v2405
  %v2407 = vrot.slane %v2374, %v2406
  %2409 = vbcast.lane.b32.xlu0 %v2407, 256
  %v2410 = vpop.permute.xlu0 %2409
  %v2411 = vlaneseq
  %v2412 = vshrl.u32 %v2411, 7
  %v2413 = vsub.s32 3, %v2412
  %v2414 = vrot.slane %v2374, %v2413
  %2416 = vbcast.lane.b32.xlu0 %v2414, 256
  %v2417 = vpop.permute.xlu0 %2416
  %v2418 = vlaneseq
  %v2419 = vshrl.u32 %v2418, 7
  %v2420 = vsub.s32 4, %v2419
  %v2421 = vrot.slane %v2374, %v2420
  %2423 = vbcast.lane.b32.xlu0 %v2421, 256
  %v2424 = vpop.permute.xlu0 %2423
  %v2425 = vlaneseq
  %v2426 = vshrl.u32 %v2425, 7
  %v2427 = vsub.s32 5, %v2426
  %v2428 = vrot.slane %v2374, %v2427
  %2430 = vbcast.lane.b32.xlu0 %v2428, 256
  %v2431 = vpop.permute.xlu0 %2430
  %v2432 = vlaneseq
  %v2433 = vshrl.u32 %v2432, 7
  %v2434 = vsub.s32 6, %v2433
  %v2435 = vrot.slane %v2374, %v2434
  %2437 = vbcast.lane.b32.xlu0 %v2435, 256
  %v2438 = vpop.permute.xlu0 %2437
  %v2439 = vlaneseq
  %v2440 = vshrl.u32 %v2439, 7
  %v2441 = vsub.s32 7, %v2440
  %v2442 = vrot.slane %v2374, %v2441
  %2444 = vbcast.lane.b32.xlu0 %v2442, 256
  %v2445 = vpop.permute.xlu0 %2444
  %v2446 = vmul.f32 %v2396, %v1744
  %v2447 = vmul.f32 %v2403, %v1749
  %v2448 = vmul.f32 %v2410, %v1754
  %v2449 = vmul.f32 %v2417, %v1759
  %v2450 = vmul.f32 %v2424, %v1764
  %v2451 = vmul.f32 %v2431, %v1769
  %v2452 = vmul.f32 %v2438, %v1774
  %v2453 = vmul.f32 %v2445, %v1779
  %v2454 = vadd.f32 %v2446, %v2447
  %v2455 = vadd.f32 %v2454, %v2448
  %v2456 = vadd.f32 %v2455, %v2449
  %v2457 = vadd.f32 %v2456, %v2450
  %v2458 = vadd.f32 %v2457, %v2451
  %v2459 = vadd.f32 %v2458, %v2452
  %v2460 = vadd.f32 %v2459, %v2453
  %s2461 = scalar_lea.vmem %s1, 8
  %v2462 = vld [vmem:[%s2461] sm:$0xff]
  %v2463 = vadd.f32 %v2462, %v2460
  %v2464 = vmax.f32 %v2463, 0.0
  %2465 = vmatprep.subr.mxu0 %v143
  %2466 = vmatpush1.msra.mxu0 %v142
  %2467 = vmatprep.subr.mxu0 %v140
  %2468 = vmatpush1.msra.mxu0 %v139
  %2469 = vmatprep.subr.mxu0 %v137
  %2470 = vmatpush1.msra.mxu0 %v136
  %2471 = vmatprep.subr.mxu0 %v134
  %2472 = vmatpush1.msra.mxu0 %v133
  %2473 = vmatprep.subr.mxu0 %v131
  %2474 = vmatpush1.msra.mxu0 %v130
  %2475 = vmatprep.subr.mxu0 %v128
  %2476 = vmatpush1.msra.mxu0 %v127
  %2477 = vmatprep.subr.mxu0 %v125
  %2478 = vmatpush1.msra.mxu0 %v124
  %2479 = vmatprep.subr.mxu0 %v122
  %2480 = vmatpush1.msra.mxu0 %v121
  %2481 = vmatprep.subr.mxu0 %v119
  %2482 = vmatpush1.msra.mxu0 %v118
  %2483 = vmatprep.subr.mxu0 %v116
  %2484 = vmatpush1.msra.mxu0 %v115
  %2485 = vmatprep.subr.mxu0 %v113
  %2486 = vmatpush1.msra.mxu0 %v112
  %2487 = vmatprep.subr.mxu0 %v110
  %2488 = vmatpush1.msra.mxu0 %v109
  %2489 = vmatprep.subr.mxu0 %v107
  %2490 = vmatpush1.msra.mxu0 %v106
  %2491 = vmatprep.subr.mxu0 %v104
  %2492 = vmatpush1.msra.mxu0 %v103
  %2493 = vmatprep.subr.mxu0 %v101
  %2494 = vmatpush1.msra.mxu0 %v100
  %2495 = vmatprep.subr.mxu0 %v98
  %2496 = vmatpush1.msra.mxu0 %v97
  %2497 = vmatprep.subr.mxu0 0.0
  %2498 = vmatpush2.msra.mxu0 0.0
  %2499 = vmatprep.subr.mxu0 0.0
  %2500 = vmatpush2.msra.mxu0 0.0
  %2501 = vmatprep.subr.mxu0 0.0
  %2502 = vmatpush2.msra.mxu0 0.0
  %2503 = vmatprep.subr.mxu0 0.0
  %2504 = vmatpush2.msra.mxu0 0.0
  %2505 = vmatprep.subr.mxu0 0.0
  %2506 = vmatpush2.msra.mxu0 0.0
  %2507 = vmatprep.subr.mxu0 0.0
  %2508 = vmatpush2.msra.mxu0 0.0
  %2509 = vmatprep.subr.mxu0 0.0
  %2510 = vmatpush2.msra.mxu0 0.0
  %2511 = vmatprep.subr.mxu0 0.0
  %2512 = vmatpush2.msra.mxu0 0.0
  %2513 = vmatprep.subr.mxu0 0.0
  %2514 = vmatpush2.msra.mxu0 0.0
  %2515 = vmatprep.subr.mxu0 0.0
  %2516 = vmatpush2.msra.mxu0 0.0
  %2517 = vmatprep.subr.mxu0 0.0
  %2518 = vmatpush2.msra.mxu0 0.0
  %2519 = vmatprep.subr.mxu0 0.0
  %2520 = vmatpush2.msra.mxu0 0.0
  %2521 = vmatprep.subr.mxu0 0.0
  %2522 = vmatpush2.msra.mxu0 0.0
  %2523 = vmatprep.subr.mxu0 0.0
  %2524 = vmatpush2.msra.mxu0 0.0
  %2525 = vmatprep.subr.mxu0 0.0
  %2526 = vmatpush2.msra.mxu0 0.0
  %2527 = vmatprep.subr.mxu0 0.0
  %2528 = vmatpush2.msra.mxu0 0.0
  %2529 = vmatprep.mubr.f32.mxu0 0.0
  %2530 = vmatmul.mubr.f32.gmra.mxu0 %v2464
  %v2531 = vpop.f32.mrf.mxu0
  %v2532 = vadd.f32 %v244, %v2531
  %v2533 = vpop.f32.mrf.mxu0
  %v2534 = vadd.f32 %v248, %v2533
  %2535 = vdwg.mxu0
  %2536 = vmatprep.subr.mxu0 0.0
  %2537 = vmatpush1.msra.mxu0 %v144
  %2538 = vmatprep.subr.mxu0 0.0
  %2539 = vmatpush1.msra.mxu0 %v141
  %2540 = vmatprep.subr.mxu0 0.0
  %2541 = vmatpush1.msra.mxu0 %v138
  %2542 = vmatprep.subr.mxu0 0.0
  %2543 = vmatpush1.msra.mxu0 %v135
  %2544 = vmatprep.subr.mxu0 0.0
  %2545 = vmatpush1.msra.mxu0 %v132
  %2546 = vmatprep.subr.mxu0 0.0
  %2547 = vmatpush1.msra.mxu0 %v129
  %2548 = vmatprep.subr.mxu0 0.0
  %2549 = vmatpush1.msra.mxu0 %v126
  %2550 = vmatprep.subr.mxu0 0.0
  %2551 = vmatpush1.msra.mxu0 %v123
  %2552 = vmatprep.subr.mxu0 0.0
  %2553 = vmatpush1.msra.mxu0 %v120
  %2554 = vmatprep.subr.mxu0 0.0
  %2555 = vmatpush1.msra.mxu0 %v117
  %2556 = vmatprep.subr.mxu0 0.0
  %2557 = vmatpush1.msra.mxu0 %v114
  %2558 = vmatprep.subr.mxu0 0.0
  %2559 = vmatpush1.msra.mxu0 %v111
  %2560 = vmatprep.subr.mxu0 0.0
  %2561 = vmatpush1.msra.mxu0 %v108
  %2562 = vmatprep.subr.mxu0 0.0
  %2563 = vmatpush1.msra.mxu0 %v105
  %2564 = vmatprep.subr.mxu0 0.0
  %2565 = vmatpush1.msra.mxu0 %v102
  %2566 = vmatprep.subr.mxu0 0.0
  %2567 = vmatpush1.msra.mxu0 %v99
  %2568 = vmatprep.subr.mxu0 0.0
  %2569 = vmatpush2.msra.mxu0 0.0
  %2570 = vmatprep.subr.mxu0 0.0
  %2571 = vmatpush2.msra.mxu0 0.0
  %2572 = vmatprep.subr.mxu0 0.0
  %2573 = vmatpush2.msra.mxu0 0.0
  %2574 = vmatprep.subr.mxu0 0.0
  %2575 = vmatpush2.msra.mxu0 0.0
  %2576 = vmatprep.subr.mxu0 0.0
  %2577 = vmatpush2.msra.mxu0 0.0
  %2578 = vmatprep.subr.mxu0 0.0
  %2579 = vmatpush2.msra.mxu0 0.0
  %2580 = vmatprep.subr.mxu0 0.0
  %2581 = vmatpush2.msra.mxu0 0.0
  %2582 = vmatprep.subr.mxu0 0.0
  %2583 = vmatpush2.msra.mxu0 0.0
  %2584 = vmatprep.subr.mxu0 0.0
  %2585 = vmatpush2.msra.mxu0 0.0
  %2586 = vmatprep.subr.mxu0 0.0
  %2587 = vmatpush2.msra.mxu0 0.0
  %2588 = vmatprep.subr.mxu0 0.0
  %2589 = vmatpush2.msra.mxu0 0.0
  %2590 = vmatprep.subr.mxu0 0.0
  %2591 = vmatpush2.msra.mxu0 0.0
  %2592 = vmatprep.subr.mxu0 0.0
  %2593 = vmatpush2.msra.mxu0 0.0
  %2594 = vmatprep.subr.mxu0 0.0
  %2595 = vmatpush2.msra.mxu0 0.0
  %2596 = vmatprep.subr.mxu0 0.0
  %2597 = vmatpush2.msra.mxu0 0.0
  %2598 = vmatprep.subr.mxu0 0.0
  %2599 = vmatpush2.msra.mxu0 0.0
  %2600 = vmatprep.mubr.f32.mxu0 0.0
  %2601 = vmatmul.mubr.f32.gmra.mxu0 %v2464
  %v2602 = vpop.f32.mrf.mxu0
  %v2603 = vadd.f32 %v252, %v2602
  %v2604 = vpop.f32.mrf.mxu0
  %2605 = vdwg.mxu0
  %2606 = vmatprep.subr.mxu0 %v191
  %2607 = vmatpush1.msra.mxu0 %v190
  %2608 = vmatprep.subr.mxu0 %v188
  %2609 = vmatpush1.msra.mxu0 %v187
  %2610 = vmatprep.subr.mxu0 %v185
  %2611 = vmatpush1.msra.mxu0 %v184
  %2612 = vmatprep.subr.mxu0 %v182
  %2613 = vmatpush1.msra.mxu0 %v181
  %2614 = vmatprep.subr.mxu0 %v179
  %2615 = vmatpush1.msra.mxu0 %v178
  %2616 = vmatprep.subr.mxu0 %v176
  %2617 = vmatpush1.msra.mxu0 %v175
  %2618 = vmatprep.subr.mxu0 %v173
  %2619 = vmatpush1.msra.mxu0 %v172
  %2620 = vmatprep.subr.mxu0 %v170
  %2621 = vmatpush1.msra.mxu0 %v169
  %2622 = vmatprep.subr.mxu0 %v167
  %2623 = vmatpush1.msra.mxu0 %v166
  %2624 = vmatprep.subr.mxu0 %v164
  %2625 = vmatpush1.msra.mxu0 %v163
  %2626 = vmatprep.subr.mxu0 %v161
  %2627 = vmatpush1.msra.mxu0 %v160
  %2628 = vmatprep.subr.mxu0 %v158
  %2629 = vmatpush1.msra.mxu0 %v157
  %2630 = vmatprep.subr.mxu0 %v155
  %2631 = vmatpush1.msra.mxu0 %v154
  %2632 = vmatprep.subr.mxu0 %v152
  %2633 = vmatpush1.msra.mxu0 %v151
  %2634 = vmatprep.subr.mxu0 %v149
  %2635 = vmatpush1.msra.mxu0 %v148
  %2636 = vmatprep.subr.mxu0 %v146
  %2637 = vmatpush1.msra.mxu0 %v145
  %2638 = vmatprep.subr.mxu0 0.0
  %2639 = vmatpush2.msra.mxu0 0.0
  %2640 = vmatprep.subr.mxu0 0.0
  %2641 = vmatpush2.msra.mxu0 0.0
  %2642 = vmatprep.subr.mxu0 0.0
  %2643 = vmatpush2.msra.mxu0 0.0
  %2644 = vmatprep.subr.mxu0 0.0
  %2645 = vmatpush2.msra.mxu0 0.0
  %2646 = vmatprep.subr.mxu0 0.0
  %2647 = vmatpush2.msra.mxu0 0.0
  %2648 = vmatprep.subr.mxu0 0.0
  %2649 = vmatpush2.msra.mxu0 0.0
  %2650 = vmatprep.subr.mxu0 0.0
  %2651 = vmatpush2.msra.mxu0 0.0
  %2652 = vmatprep.subr.mxu0 0.0
  %2653 = vmatpush2.msra.mxu0 0.0
  %2654 = vmatprep.subr.mxu0 0.0
  %2655 = vmatpush2.msra.mxu0 0.0
  %2656 = vmatprep.subr.mxu0 0.0
  %2657 = vmatpush2.msra.mxu0 0.0
  %2658 = vmatprep.subr.mxu0 0.0
  %2659 = vmatpush2.msra.mxu0 0.0
  %2660 = vmatprep.subr.mxu0 0.0
  %2661 = vmatpush2.msra.mxu0 0.0
  %2662 = vmatprep.subr.mxu0 0.0
  %2663 = vmatpush2.msra.mxu0 0.0
  %2664 = vmatprep.subr.mxu0 0.0
  %2665 = vmatpush2.msra.mxu0 0.0
  %2666 = vmatprep.subr.mxu0 0.0
  %2667 = vmatpush2.msra.mxu0 0.0
  %2668 = vmatprep.subr.mxu0 0.0
  %2669 = vmatpush2.msra.mxu0 0.0
  %2670 = vmatprep.mubr.f32.mxu0 0.0
  %2671 = vmatmul.mubr.f32.gmra.mxu0 %v2273
  %v2672 = vpop.f32.mrf.mxu0
  %v2673 = vadd.f32 0.0, %v2672
  %v2674 = vpop.f32.mrf.mxu0
  %v2675 = vadd.f32 0.0, %v2674
  %2676 = vdwg.mxu0
  %2677 = vmatprep.subr.mxu0 0.0
  %2678 = vmatpush1.msra.mxu0 %v192
  %2679 = vmatprep.subr.mxu0 0.0
  %2680 = vmatpush1.msra.mxu0 %v189
  %2681 = vmatprep.subr.mxu0 0.0
  %2682 = vmatpush1.msra.mxu0 %v186
  %2683 = vmatprep.subr.mxu0 0.0
  %2684 = vmatpush1.msra.mxu0 %v183
  %2685 = vmatprep.subr.mxu0 0.0
  %2686 = vmatpush1.msra.mxu0 %v180
  %2687 = vmatprep.subr.mxu0 0.0
  %2688 = vmatpush1.msra.mxu0 %v177
  %2689 = vmatprep.subr.mxu0 0.0
  %2690 = vmatpush1.msra.mxu0 %v174
  %2691 = vmatprep.subr.mxu0 0.0
  %2692 = vmatpush1.msra.mxu0 %v171
  %2693 = vmatprep.subr.mxu0 0.0
  %2694 = vmatpush1.msra.mxu0 %v168
  %2695 = vmatprep.subr.mxu0 0.0
  %2696 = vmatpush1.msra.mxu0 %v165
  %2697 = vmatprep.subr.mxu0 0.0
  %2698 = vmatpush1.msra.mxu0 %v162
  %2699 = vmatprep.subr.mxu0 0.0
  %2700 = vmatpush1.msra.mxu0 %v159
  %2701 = vmatprep.subr.mxu0 0.0
  %2702 = vmatpush1.msra.mxu0 %v156
  %2703 = vmatprep.subr.mxu0 0.0
  %2704 = vmatpush1.msra.mxu0 %v153
  %2705 = vmatprep.subr.mxu0 0.0
  %2706 = vmatpush1.msra.mxu0 %v150
  %2707 = vmatprep.subr.mxu0 0.0
  %2708 = vmatpush1.msra.mxu0 %v147
  %2709 = vmatprep.subr.mxu0 0.0
  %2710 = vmatpush2.msra.mxu0 0.0
  %2711 = vmatprep.subr.mxu0 0.0
  %2712 = vmatpush2.msra.mxu0 0.0
  %2713 = vmatprep.subr.mxu0 0.0
  %2714 = vmatpush2.msra.mxu0 0.0
  %2715 = vmatprep.subr.mxu0 0.0
  %2716 = vmatpush2.msra.mxu0 0.0
  %2717 = vmatprep.subr.mxu0 0.0
  %2718 = vmatpush2.msra.mxu0 0.0
  %2719 = vmatprep.subr.mxu0 0.0
  %2720 = vmatpush2.msra.mxu0 0.0
  %2721 = vmatprep.subr.mxu0 0.0
  %2722 = vmatpush2.msra.mxu0 0.0
  %2723 = vmatprep.subr.mxu0 0.0
  %2724 = vmatpush2.msra.mxu0 0.0
  %2725 = vmatprep.subr.mxu0 0.0
  %2726 = vmatpush2.msra.mxu0 0.0
  %2727 = vmatprep.subr.mxu0 0.0
  %2728 = vmatpush2.msra.mxu0 0.0
  %2729 = vmatprep.subr.mxu0 0.0
  %2730 = vmatpush2.msra.mxu0 0.0
  %2731 = vmatprep.subr.mxu0 0.0
  %2732 = vmatpush2.msra.mxu0 0.0
  %2733 = vmatprep.subr.mxu0 0.0
  %2734 = vmatpush2.msra.mxu0 0.0
  %2735 = vmatprep.subr.mxu0 0.0
  %2736 = vmatpush2.msra.mxu0 0.0
  %2737 = vmatprep.subr.mxu0 0.0
  %2738 = vmatpush2.msra.mxu0 0.0
  %2739 = vmatprep.subr.mxu0 0.0
  %2740 = vmatpush2.msra.mxu0 0.0
  %2741 = vmatprep.mubr.f32.mxu0 0.0
  %2742 = vmatmul.mubr.f32.gmra.mxu0 %v2273
  %v2743 = vpop.f32.mrf.mxu0
  %v2744 = vadd.f32 0.0, %v2743
  %v2745 = vpop.f32.mrf.mxu0
  %2746 = vdwg.mxu0
  %v2747 = vadd.f32 %v2532, %v2673
  %v2748 = vxor.u32 %v2747, 2147483648
  %v2749 = vmul.f32 %v2748, 1.442695
  %v2750 = vpow.pop %v2749
  %v2751 = vadd.f32 %v2750, 1.0
  %v2752 = vrcp.pop %v2751
  %v2753 = vmul.f32 1.0, %v2752
  %v2754 = vadd.f32 %v2534, %v2675
  %v2755 = vxor.u32 %v2754, 2147483648
  %v2756 = vmul.f32 %v2755, 1.442695
  %v2757 = vpow.pop %v2756
  %v2758 = vadd.f32 %v2757, 1.0
  %v2759 = vrcp.pop %v2758
  %v2760 = vmul.f32 1.0, %v2759
  %v2761 = vadd.f32 %v2744, %v237
  %v2762 = vmul.f32 %v2753, %v2761
  %v2763 = vadd.f32 %v2603, %v2762
  %v2764 = vtanh.pop %v2763
  %v2765 = vsub.f32 1.0, %v2760
  %v2766 = vmul.f32 %v2765, %v2764
  %v2767 = vmul.f32 %v2760, %v2273
  %v2768 = vadd.f32 %v2766, %v2767
  %s2769 = scalar_lea.vmem %s0, 16
  %v2770 = vld [vmem:[%s2769] sm:$0xff]
  %2771 = vmatprep.subr.mxu0 0.0
  %2772 = vmatpush1.msra.mxu0 %v208
  %2773 = vmatprep.subr.mxu0 0.0
  %2774 = vmatpush1.msra.mxu0 %v207
  %2775 = vmatprep.subr.mxu0 0.0
  %2776 = vmatpush1.msra.mxu0 %v206
  %2777 = vmatprep.subr.mxu0 0.0
  %2778 = vmatpush1.msra.mxu0 %v205
  %2779 = vmatprep.subr.mxu0 0.0
  %2780 = vmatpush1.msra.mxu0 %v204
  %2781 = vmatprep.subr.mxu0 0.0
  %2782 = vmatpush1.msra.mxu0 %v203
  %2783 = vmatprep.subr.mxu0 0.0
  %2784 = vmatpush1.msra.mxu0 %v202
  %2785 = vmatprep.subr.mxu0 0.0
  %2786 = vmatpush1.msra.mxu0 %v201
  %2787 = vmatprep.subr.mxu0 0.0
  %2788 = vmatpush1.msra.mxu0 %v200
  %2789 = vmatprep.subr.mxu0 0.0
  %2790 = vmatpush1.msra.mxu0 %v199
  %2791 = vmatprep.subr.mxu0 0.0
  %2792 = vmatpush1.msra.mxu0 %v198
  %2793 = vmatprep.subr.mxu0 0.0
  %2794 = vmatpush1.msra.mxu0 %v197
  %2795 = vmatprep.subr.mxu0 0.0
  %2796 = vmatpush1.msra.mxu0 %v196
  %2797 = vmatprep.subr.mxu0 0.0
  %2798 = vmatpush1.msra.mxu0 %v195
  %2799 = vmatprep.subr.mxu0 0.0
  %2800 = vmatpush1.msra.mxu0 %v194
  %2801 = vmatprep.subr.mxu0 0.0
  %2802 = vmatpush1.msra.mxu0 %v193
  %2803 = vmatprep.subr.mxu0 0.0
  %2804 = vmatpush2.msra.mxu0 0.0
  %2805 = vmatprep.subr.mxu0 0.0
  %2806 = vmatpush2.msra.mxu0 0.0
  %2807 = vmatprep.subr.mxu0 0.0
  %2808 = vmatpush2.msra.mxu0 0.0
  %2809 = vmatprep.subr.mxu0 0.0
  %2810 = vmatpush2.msra.mxu0 0.0
  %2811 = vmatprep.subr.mxu0 0.0
  %2812 = vmatpush2.msra.mxu0 0.0
  %2813 = vmatprep.subr.mxu0 0.0
  %2814 = vmatpush2.msra.mxu0 0.0
  %2815 = vmatprep.subr.mxu0 0.0
  %2816 = vmatpush2.msra.mxu0 0.0
  %2817 = vmatprep.subr.mxu0 0.0
  %2818 = vmatpush2.msra.mxu0 0.0
  %2819 = vmatprep.subr.mxu0 0.0
  %2820 = vmatpush2.msra.mxu0 0.0
  %2821 = vmatprep.subr.mxu0 0.0
  %2822 = vmatpush2.msra.mxu0 0.0
  %2823 = vmatprep.subr.mxu0 0.0
  %2824 = vmatpush2.msra.mxu0 0.0
  %2825 = vmatprep.subr.mxu0 0.0
  %2826 = vmatpush2.msra.mxu0 0.0
  %2827 = vmatprep.subr.mxu0 0.0
  %2828 = vmatpush2.msra.mxu0 0.0
  %2829 = vmatprep.subr.mxu0 0.0
  %2830 = vmatpush2.msra.mxu0 0.0
  %2831 = vmatprep.subr.mxu0 0.0
  %2832 = vmatpush2.msra.mxu0 0.0
  %2833 = vmatprep.subr.mxu0 0.0
  %2834 = vmatpush2.msra.mxu0 0.0
  %2835 = vmatprep.mubr.f32.mxu0 0.0
  %2836 = vmatmul.mubr.f32.gmra.mxu0 %v2768
  %v2837 = vpop.f32.mrf.mxu0
  %v2838 = vadd.f32 0.0, %v2837
  %v2839 = vpop.f32.mrf.mxu0
  %2840 = vdwg.mxu0
  %v2841 = vadd.f32 %v2770, %v2838
  %2842 = vmax.xlane.f32.xlu0 %v2841
  %v2843 = vpop.xlane.xlu0 %2842
  %v2844 = vsub.f32 %v2841, %v2843
  %v2845 = vmul.f32 %v2844, 1.442695
  %v2846 = vpow.pop %v2845
  %2847 = vadd.xlane.f32.xlu0 %v2846
  %v2848 = vpop.xlane.xlu0 %2847
  %v2849 = vrcp.pop %v2848
  %v2850 = vmul.f32 %v2846, %v2849
  %s2851 = scalar_lea.vmem %s15, 16
  %2852 = vst [vmem:[%s2851] sm:$0xff] %v2850
  %2853 = vxpose.xlu0.b32.start [1/16] %v2850, 128
  %2854 = vxpose.xlu0.b32.cont [2/16] 0.0, 128
  %2855 = vxpose.xlu0.b32.cont [3/16] 0.0, 128
  %2856 = vxpose.xlu0.b32.cont [4/16] 0.0, 128
  %2857 = vxpose.xlu0.b32.cont [5/16] 0.0, 128
  %2858 = vxpose.xlu0.b32.cont [6/16] 0.0, 128
  %2859 = vxpose.xlu0.b32.cont [7/16] 0.0, 128
  %2860 = vxpose.xlu0.b32.cont [8/16] 0.0, 128
  %2861 = vxpose.xlu0.b32.cont [9/16] 0.0, 128
  %2862 = vxpose.xlu0.b32.cont [10/16] 0.0, 128
  %2863 = vxpose.xlu0.b32.cont [11/16] 0.0, 128
  %2864 = vxpose.xlu0.b32.cont [12/16] 0.0, 128
  %2865 = vxpose.xlu0.b32.cont [13/16] 0.0, 128
  %2866 = vxpose.xlu0.b32.cont [14/16] 0.0, 128
  %2867 = vxpose.xlu0.b32.cont [15/16] 0.0, 128
  %2868 = vxpose.xlu0.b32.end [16/16] 0.0, 128
  %v2869 = vpop.trf.xlu0
  %v2870 = vpop.trf.xlu0
  %v2871 = vpop.trf.xlu0
  %v2872 = vpop.trf.xlu0
  %v2873 = vpop.trf.xlu0
  %v2874 = vpop.trf.xlu0
  %v2875 = vpop.trf.xlu0
  %v2876 = vpop.trf.xlu0
  %v2877 = vpop.trf.xlu0
  %v2878 = vpop.trf.xlu0
  %v2879 = vpop.trf.xlu0
  %v2880 = vpop.trf.xlu0
  %v2881 = vpop.trf.xlu0
  %v2882 = vpop.trf.xlu0
  %v2883 = vpop.trf.xlu0
  %v2884 = vpop.trf.xlu0
  %v2885 = vlaneseq
  %v2886 = vshrl.u32 %v2885, 7
  %v2887 = vsub.s32 0, %v2886
  %v2888 = vrot.slane %v2869, %v2887
  %2890 = vbcast.lane.b32.xlu0 %v2888, 256
  %v2891 = vpop.permute.xlu0 %2890
  %v2892 = vlaneseq
  %v2893 = vshrl.u32 %v2892, 7
  %v2894 = vsub.s32 1, %v2893
  %v2895 = vrot.slane %v2869, %v2894
  %2897 = vbcast.lane.b32.xlu0 %v2895, 256
  %v2898 = vpop.permute.xlu0 %2897
  %v2899 = vlaneseq
  %v2900 = vshrl.u32 %v2899, 7
  %v2901 = vsub.s32 2, %v2900
  %v2902 = vrot.slane %v2869, %v2901
  %2904 = vbcast.lane.b32.xlu0 %v2902, 256
  %v2905 = vpop.permute.xlu0 %2904
  %v2906 = vlaneseq
  %v2907 = vshrl.u32 %v2906, 7
  %v2908 = vsub.s32 3, %v2907
  %v2909 = vrot.slane %v2869, %v2908
  %2911 = vbcast.lane.b32.xlu0 %v2909, 256
  %v2912 = vpop.permute.xlu0 %2911
  %v2913 = vlaneseq
  %v2914 = vshrl.u32 %v2913, 7
  %v2915 = vsub.s32 4, %v2914
  %v2916 = vrot.slane %v2869, %v2915
  %2918 = vbcast.lane.b32.xlu0 %v2916, 256
  %v2919 = vpop.permute.xlu0 %2918
  %v2920 = vlaneseq
  %v2921 = vshrl.u32 %v2920, 7
  %v2922 = vsub.s32 5, %v2921
  %v2923 = vrot.slane %v2869, %v2922
  %2925 = vbcast.lane.b32.xlu0 %v2923, 256
  %v2926 = vpop.permute.xlu0 %2925
  %v2927 = vlaneseq
  %v2928 = vshrl.u32 %v2927, 7
  %v2929 = vsub.s32 6, %v2928
  %v2930 = vrot.slane %v2869, %v2929
  %2932 = vbcast.lane.b32.xlu0 %v2930, 256
  %v2933 = vpop.permute.xlu0 %2932
  %v2934 = vlaneseq
  %v2935 = vshrl.u32 %v2934, 7
  %v2936 = vsub.s32 7, %v2935
  %v2937 = vrot.slane %v2869, %v2936
  %2939 = vbcast.lane.b32.xlu0 %v2937, 256
  %v2940 = vpop.permute.xlu0 %2939
  %v2941 = vmul.f32 %v2891, %v1744
  %v2942 = vmul.f32 %v2898, %v1749
  %v2943 = vmul.f32 %v2905, %v1754
  %v2944 = vmul.f32 %v2912, %v1759
  %v2945 = vmul.f32 %v2919, %v1764
  %v2946 = vmul.f32 %v2926, %v1769
  %v2947 = vmul.f32 %v2933, %v1774
  %v2948 = vmul.f32 %v2940, %v1779
  %v2949 = vadd.f32 %v2941, %v2942
  %v2950 = vadd.f32 %v2949, %v2943
  %v2951 = vadd.f32 %v2950, %v2944
  %v2952 = vadd.f32 %v2951, %v2945
  %v2953 = vadd.f32 %v2952, %v2946
  %v2954 = vadd.f32 %v2953, %v2947
  %v2955 = vadd.f32 %v2954, %v2948
  %s2956 = scalar_lea.vmem %s1, 16
  %v2957 = vld [vmem:[%s2956] sm:$0xff]
  %v2958 = vadd.f32 %v2957, %v2955
  %v2959 = vmax.f32 %v2958, 0.0
  %2960 = vmatprep.subr.mxu0 %v143
  %2961 = vmatpush1.msra.mxu0 %v142
  %2962 = vmatprep.subr.mxu0 %v140
  %2963 = vmatpush1.msra.mxu0 %v139
  %2964 = vmatprep.subr.mxu0 %v137
  %2965 = vmatpush1.msra.mxu0 %v136
  %2966 = vmatprep.subr.mxu0 %v134
  %2967 = vmatpush1.msra.mxu0 %v133
  %2968 = vmatprep.subr.mxu0 %v131
  %2969 = vmatpush1.msra.mxu0 %v130
  %2970 = vmatprep.subr.mxu0 %v128
  %2971 = vmatpush1.msra.mxu0 %v127
  %2972 = vmatprep.subr.mxu0 %v125
  %2973 = vmatpush1.msra.mxu0 %v124
  %2974 = vmatprep.subr.mxu0 %v122
  %2975 = vmatpush1.msra.mxu0 %v121
  %2976 = vmatprep.subr.mxu0 %v119
  %2977 = vmatpush1.msra.mxu0 %v118
  %2978 = vmatprep.subr.mxu0 %v116
  %2979 = vmatpush1.msra.mxu0 %v115
  %2980 = vmatprep.subr.mxu0 %v113
  %2981 = vmatpush1.msra.mxu0 %v112
  %2982 = vmatprep.subr.mxu0 %v110
  %2983 = vmatpush1.msra.mxu0 %v109
  %2984 = vmatprep.subr.mxu0 %v107
  %2985 = vmatpush1.msra.mxu0 %v106
  %2986 = vmatprep.subr.mxu0 %v104
  %2987 = vmatpush1.msra.mxu0 %v103
  %2988 = vmatprep.subr.mxu0 %v101
  %2989 = vmatpush1.msra.mxu0 %v100
  %2990 = vmatprep.subr.mxu0 %v98
  %2991 = vmatpush1.msra.mxu0 %v97
  %2992 = vmatprep.subr.mxu0 0.0
  %2993 = vmatpush2.msra.mxu0 0.0
  %2994 = vmatprep.subr.mxu0 0.0
  %2995 = vmatpush2.msra.mxu0 0.0
  %2996 = vmatprep.subr.mxu0 0.0
  %2997 = vmatpush2.msra.mxu0 0.0
  %2998 = vmatprep.subr.mxu0 0.0
  %2999 = vmatpush2.msra.mxu0 0.0
  %3000 = vmatprep.subr.mxu0 0.0
  %3001 = vmatpush2.msra.mxu0 0.0
  %3002 = vmatprep.subr.mxu0 0.0
  %3003 = vmatpush2.msra.mxu0 0.0
  %3004 = vmatprep.subr.mxu0 0.0
  %3005 = vmatpush2.msra.mxu0 0.0
  %3006 = vmatprep.subr.mxu0 0.0
  %3007 = vmatpush2.msra.mxu0 0.0
  %3008 = vmatprep.subr.mxu0 0.0
  %3009 = vmatpush2.msra.mxu0 0.0
  %3010 = vmatprep.subr.mxu0 0.0
  %3011 = vmatpush2.msra.mxu0 0.0
  %3012 = vmatprep.subr.mxu0 0.0
  %3013 = vmatpush2.msra.mxu0 0.0
  %3014 = vmatprep.subr.mxu0 0.0
  %3015 = vmatpush2.msra.mxu0 0.0
  %3016 = vmatprep.subr.mxu0 0.0
  %3017 = vmatpush2.msra.mxu0 0.0
  %3018 = vmatprep.subr.mxu0 0.0
  %3019 = vmatpush2.msra.mxu0 0.0
  %3020 = vmatprep.subr.mxu0 0.0
  %3021 = vmatpush2.msra.mxu0 0.0
  %3022 = vmatprep.subr.mxu0 0.0
  %3023 = vmatpush2.msra.mxu0 0.0
  %3024 = vmatprep.mubr.f32.mxu0 0.0
  %3025 = vmatmul.mubr.f32.gmra.mxu0 %v2959
  %v3026 = vpop.f32.mrf.mxu0
  %v3027 = vadd.f32 %v244, %v3026
  %v3028 = vpop.f32.mrf.mxu0
  %v3029 = vadd.f32 %v248, %v3028
  %3030 = vdwg.mxu0
  %3031 = vmatprep.subr.mxu0 0.0
  %3032 = vmatpush1.msra.mxu0 %v144
  %3033 = vmatprep.subr.mxu0 0.0
  %3034 = vmatpush1.msra.mxu0 %v141
  %3035 = vmatprep.subr.mxu0 0.0
  %3036 = vmatpush1.msra.mxu0 %v138
  %3037 = vmatprep.subr.mxu0 0.0
  %3038 = vmatpush1.msra.mxu0 %v135
  %3039 = vmatprep.subr.mxu0 0.0
  %3040 = vmatpush1.msra.mxu0 %v132
  %3041 = vmatprep.subr.mxu0 0.0
  %3042 = vmatpush1.msra.mxu0 %v129
  %3043 = vmatprep.subr.mxu0 0.0
  %3044 = vmatpush1.msra.mxu0 %v126
  %3045 = vmatprep.subr.mxu0 0.0
  %3046 = vmatpush1.msra.mxu0 %v123
  %3047 = vmatprep.subr.mxu0 0.0
  %3048 = vmatpush1.msra.mxu0 %v120
  %3049 = vmatprep.subr.mxu0 0.0
  %3050 = vmatpush1.msra.mxu0 %v117
  %3051 = vmatprep.subr.mxu0 0.0
  %3052 = vmatpush1.msra.mxu0 %v114
  %3053 = vmatprep.subr.mxu0 0.0
  %3054 = vmatpush1.msra.mxu0 %v111
  %3055 = vmatprep.subr.mxu0 0.0
  %3056 = vmatpush1.msra.mxu0 %v108
  %3057 = vmatprep.subr.mxu0 0.0
  %3058 = vmatpush1.msra.mxu0 %v105
  %3059 = vmatprep.subr.mxu0 0.0
  %3060 = vmatpush1.msra.mxu0 %v102
  %3061 = vmatprep.subr.mxu0 0.0
  %3062 = vmatpush1.msra.mxu0 %v99
  %3063 = vmatprep.subr.mxu0 0.0
  %3064 = vmatpush2.msra.mxu0 0.0
  %3065 = vmatprep.subr.mxu0 0.0
  %3066 = vmatpush2.msra.mxu0 0.0
  %3067 = vmatprep.subr.mxu0 0.0
  %3068 = vmatpush2.msra.mxu0 0.0
  %3069 = vmatprep.subr.mxu0 0.0
  %3070 = vmatpush2.msra.mxu0 0.0
  %3071 = vmatprep.subr.mxu0 0.0
  %3072 = vmatpush2.msra.mxu0 0.0
  %3073 = vmatprep.subr.mxu0 0.0
  %3074 = vmatpush2.msra.mxu0 0.0
  %3075 = vmatprep.subr.mxu0 0.0
  %3076 = vmatpush2.msra.mxu0 0.0
  %3077 = vmatprep.subr.mxu0 0.0
  %3078 = vmatpush2.msra.mxu0 0.0
  %3079 = vmatprep.subr.mxu0 0.0
  %3080 = vmatpush2.msra.mxu0 0.0
  %3081 = vmatprep.subr.mxu0 0.0
  %3082 = vmatpush2.msra.mxu0 0.0
  %3083 = vmatprep.subr.mxu0 0.0
  %3084 = vmatpush2.msra.mxu0 0.0
  %3085 = vmatprep.subr.mxu0 0.0
  %3086 = vmatpush2.msra.mxu0 0.0
  %3087 = vmatprep.subr.mxu0 0.0
  %3088 = vmatpush2.msra.mxu0 0.0
  %3089 = vmatprep.subr.mxu0 0.0
  %3090 = vmatpush2.msra.mxu0 0.0
  %3091 = vmatprep.subr.mxu0 0.0
  %3092 = vmatpush2.msra.mxu0 0.0
  %3093 = vmatprep.subr.mxu0 0.0
  %3094 = vmatpush2.msra.mxu0 0.0
  %3095 = vmatprep.mubr.f32.mxu0 0.0
  %3096 = vmatmul.mubr.f32.gmra.mxu0 %v2959
  %v3097 = vpop.f32.mrf.mxu0
  %v3098 = vadd.f32 %v252, %v3097
  %v3099 = vpop.f32.mrf.mxu0
  %3100 = vdwg.mxu0
  %3101 = vmatprep.subr.mxu0 %v191
  %3102 = vmatpush1.msra.mxu0 %v190
  %3103 = vmatprep.subr.mxu0 %v188
  %3104 = vmatpush1.msra.mxu0 %v187
  %3105 = vmatprep.subr.mxu0 %v185
  %3106 = vmatpush1.msra.mxu0 %v184
  %3107 = vmatprep.subr.mxu0 %v182
  %3108 = vmatpush1.msra.mxu0 %v181
  %3109 = vmatprep.subr.mxu0 %v179
  %3110 = vmatpush1.msra.mxu0 %v178
  %3111 = vmatprep.subr.mxu0 %v176
  %3112 = vmatpush1.msra.mxu0 %v175
  %3113 = vmatprep.subr.mxu0 %v173
  %3114 = vmatpush1.msra.mxu0 %v172
  %3115 = vmatprep.subr.mxu0 %v170
  %3116 = vmatpush1.msra.mxu0 %v169
  %3117 = vmatprep.subr.mxu0 %v167
  %3118 = vmatpush1.msra.mxu0 %v166
  %3119 = vmatprep.subr.mxu0 %v164
  %3120 = vmatpush1.msra.mxu0 %v163
  %3121 = vmatprep.subr.mxu0 %v161
  %3122 = vmatpush1.msra.mxu0 %v160
  %3123 = vmatprep.subr.mxu0 %v158
  %3124 = vmatpush1.msra.mxu0 %v157
  %3125 = vmatprep.subr.mxu0 %v155
  %3126 = vmatpush1.msra.mxu0 %v154
  %3127 = vmatprep.subr.mxu0 %v152
  %3128 = vmatpush1.msra.mxu0 %v151
  %3129 = vmatprep.subr.mxu0 %v149
  %3130 = vmatpush1.msra.mxu0 %v148
  %3131 = vmatprep.subr.mxu0 %v146
  %3132 = vmatpush1.msra.mxu0 %v145
  %3133 = vmatprep.subr.mxu0 0.0
  %3134 = vmatpush2.msra.mxu0 0.0
  %3135 = vmatprep.subr.mxu0 0.0
  %3136 = vmatpush2.msra.mxu0 0.0
  %3137 = vmatprep.subr.mxu0 0.0
  %3138 = vmatpush2.msra.mxu0 0.0
  %3139 = vmatprep.subr.mxu0 0.0
  %3140 = vmatpush2.msra.mxu0 0.0
  %3141 = vmatprep.subr.mxu0 0.0
  %3142 = vmatpush2.msra.mxu0 0.0
  %3143 = vmatprep.subr.mxu0 0.0
  %3144 = vmatpush2.msra.mxu0 0.0
  %3145 = vmatprep.subr.mxu0 0.0
  %3146 = vmatpush2.msra.mxu0 0.0
  %3147 = vmatprep.subr.mxu0 0.0
  %3148 = vmatpush2.msra.mxu0 0.0
  %3149 = vmatprep.subr.mxu0 0.0
  %3150 = vmatpush2.msra.mxu0 0.0
  %3151 = vmatprep.subr.mxu0 0.0
  %3152 = vmatpush2.msra.mxu0 0.0
  %3153 = vmatprep.subr.mxu0 0.0
  %3154 = vmatpush2.msra.mxu0 0.0
  %3155 = vmatprep.subr.mxu0 0.0
  %3156 = vmatpush2.msra.mxu0 0.0
  %3157 = vmatprep.subr.mxu0 0.0
  %3158 = vmatpush2.msra.mxu0 0.0
  %3159 = vmatprep.subr.mxu0 0.0
  %3160 = vmatpush2.msra.mxu0 0.0
  %3161 = vmatprep.subr.mxu0 0.0
  %3162 = vmatpush2.msra.mxu0 0.0
  %3163 = vmatprep.subr.mxu0 0.0
  %3164 = vmatpush2.msra.mxu0 0.0
  %3165 = vmatprep.mubr.f32.mxu0 0.0
  %3166 = vmatmul.mubr.f32.gmra.mxu0 %v2768
  %v3167 = vpop.f32.mrf.mxu0
  %v3168 = vadd.f32 0.0, %v3167
  %v3169 = vpop.f32.mrf.mxu0
  %v3170 = vadd.f32 0.0, %v3169
  %3171 = vdwg.mxu0
  %3172 = vmatprep.subr.mxu0 0.0
  %3173 = vmatpush1.msra.mxu0 %v192
  %3174 = vmatprep.subr.mxu0 0.0
  %3175 = vmatpush1.msra.mxu0 %v189
  %3176 = vmatprep.subr.mxu0 0.0
  %3177 = vmatpush1.msra.mxu0 %v186
  %3178 = vmatprep.subr.mxu0 0.0
  %3179 = vmatpush1.msra.mxu0 %v183
  %3180 = vmatprep.subr.mxu0 0.0
  %3181 = vmatpush1.msra.mxu0 %v180
  %3182 = vmatprep.subr.mxu0 0.0
  %3183 = vmatpush1.msra.mxu0 %v177
  %3184 = vmatprep.subr.mxu0 0.0
  %3185 = vmatpush1.msra.mxu0 %v174
  %3186 = vmatprep.subr.mxu0 0.0
  %3187 = vmatpush1.msra.mxu0 %v171
  %3188 = vmatprep.subr.mxu0 0.0
  %3189 = vmatpush1.msra.mxu0 %v168
  %3190 = vmatprep.subr.mxu0 0.0
  %3191 = vmatpush1.msra.mxu0 %v165
  %3192 = vmatprep.subr.mxu0 0.0
  %3193 = vmatpush1.msra.mxu0 %v162
  %3194 = vmatprep.subr.mxu0 0.0
  %3195 = vmatpush1.msra.mxu0 %v159
  %3196 = vmatprep.subr.mxu0 0.0
  %3197 = vmatpush1.msra.mxu0 %v156
  %3198 = vmatprep.subr.mxu0 0.0
  %3199 = vmatpush1.msra.mxu0 %v153
  %3200 = vmatprep.subr.mxu0 0.0
  %3201 = vmatpush1.msra.mxu0 %v150
  %3202 = vmatprep.subr.mxu0 0.0
  %3203 = vmatpush1.msra.mxu0 %v147
  %3204 = vmatprep.subr.mxu0 0.0
  %3205 = vmatpush2.msra.mxu0 0.0
  %3206 = vmatprep.subr.mxu0 0.0
  %3207 = vmatpush2.msra.mxu0 0.0
  %3208 = vmatprep.subr.mxu0 0.0
  %3209 = vmatpush2.msra.mxu0 0.0
  %3210 = vmatprep.subr.mxu0 0.0
  %3211 = vmatpush2.msra.mxu0 0.0
  %3212 = vmatprep.subr.mxu0 0.0
  %3213 = vmatpush2.msra.mxu0 0.0
  %3214 = vmatprep.subr.mxu0 0.0
  %3215 = vmatpush2.msra.mxu0 0.0
  %3216 = vmatprep.subr.mxu0 0.0
  %3217 = vmatpush2.msra.mxu0 0.0
  %3218 = vmatprep.subr.mxu0 0.0
  %3219 = vmatpush2.msra.mxu0 0.0
  %3220 = vmatprep.subr.mxu0 0.0
  %3221 = vmatpush2.msra.mxu0 0.0
  %3222 = vmatprep.subr.mxu0 0.0
  %3223 = vmatpush2.msra.mxu0 0.0
  %3224 = vmatprep.subr.mxu0 0.0
  %3225 = vmatpush2.msra.mxu0 0.0
  %3226 = vmatprep.subr.mxu0 0.0
  %3227 = vmatpush2.msra.mxu0 0.0
  %3228 = vmatprep.subr.mxu0 0.0
  %3229 = vmatpush2.msra.mxu0 0.0
  %3230 = vmatprep.subr.mxu0 0.0
  %3231 = vmatpush2.msra.mxu0 0.0
  %3232 = vmatprep.subr.mxu0 0.0
  %3233 = vmatpush2.msra.mxu0 0.0
  %3234 = vmatprep.subr.mxu0 0.0
  %3235 = vmatpush2.msra.mxu0 0.0
  %3236 = vmatprep.mubr.f32.mxu0 0.0
  %3237 = vmatmul.mubr.f32.gmra.mxu0 %v2768
  %v3238 = vpop.f32.mrf.mxu0
  %v3239 = vadd.f32 0.0, %v3238
  %v3240 = vpop.f32.mrf.mxu0
  %3241 = vdwg.mxu0
  %v3242 = vadd.f32 %v3027, %v3168
  %v3243 = vxor.u32 %v3242, 2147483648
  %v3244 = vmul.f32 %v3243, 1.442695
  %v3245 = vpow.pop %v3244
  %v3246 = vadd.f32 %v3245, 1.0
  %v3247 = vrcp.pop %v3246
  %v3248 = vmul.f32 1.0, %v3247
  %v3249 = vadd.f32 %v3029, %v3170
  %v3250 = vxor.u32 %v3249, 2147483648
  %v3251 = vmul.f32 %v3250, 1.442695
  %v3252 = vpow.pop %v3251
  %v3253 = vadd.f32 %v3252, 1.0
  %v3254 = vrcp.pop %v3253
  %v3255 = vmul.f32 1.0, %v3254
  %v3256 = vadd.f32 %v3239, %v237
  %v3257 = vmul.f32 %v3248, %v3256
  %v3258 = vadd.f32 %v3098, %v3257
  %v3259 = vtanh.pop %v3258
  %v3260 = vsub.f32 1.0, %v3255
  %v3261 = vmul.f32 %v3260, %v3259
  %v3262 = vmul.f32 %v3255, %v2768
  %v3263 = vadd.f32 %v3261, %v3262
  %s3264 = scalar_lea.vmem %s0, 24
  %v3265 = vld [vmem:[%s3264] sm:$0xff]
  %3266 = vmatprep.subr.mxu0 0.0
  %3267 = vmatpush1.msra.mxu0 %v208
  %3268 = vmatprep.subr.mxu0 0.0
  %3269 = vmatpush1.msra.mxu0 %v207
  %3270 = vmatprep.subr.mxu0 0.0
  %3271 = vmatpush1.msra.mxu0 %v206
  %3272 = vmatprep.subr.mxu0 0.0
  %3273 = vmatpush1.msra.mxu0 %v205
  %3274 = vmatprep.subr.mxu0 0.0
  %3275 = vmatpush1.msra.mxu0 %v204
  %3276 = vmatprep.subr.mxu0 0.0
  %3277 = vmatpush1.msra.mxu0 %v203
  %3278 = vmatprep.subr.mxu0 0.0
  %3279 = vmatpush1.msra.mxu0 %v202
  %3280 = vmatprep.subr.mxu0 0.0
  %3281 = vmatpush1.msra.mxu0 %v201
  %3282 = vmatprep.subr.mxu0 0.0
  %3283 = vmatpush1.msra.mxu0 %v200
  %3284 = vmatprep.subr.mxu0 0.0
  %3285 = vmatpush1.msra.mxu0 %v199
  %3286 = vmatprep.subr.mxu0 0.0
  %3287 = vmatpush1.msra.mxu0 %v198
  %3288 = vmatprep.subr.mxu0 0.0
  %3289 = vmatpush1.msra.mxu0 %v197
  %3290 = vmatprep.subr.mxu0 0.0
  %3291 = vmatpush1.msra.mxu0 %v196
  %3292 = vmatprep.subr.mxu0 0.0
  %3293 = vmatpush1.msra.mxu0 %v195
  %3294 = vmatprep.subr.mxu0 0.0
  %3295 = vmatpush1.msra.mxu0 %v194
  %3296 = vmatprep.subr.mxu0 0.0
  %3297 = vmatpush1.msra.mxu0 %v193
  %3298 = vmatprep.subr.mxu0 0.0
  %3299 = vmatpush2.msra.mxu0 0.0
  %3300 = vmatprep.subr.mxu0 0.0
  %3301 = vmatpush2.msra.mxu0 0.0
  %3302 = vmatprep.subr.mxu0 0.0
  %3303 = vmatpush2.msra.mxu0 0.0
  %3304 = vmatprep.subr.mxu0 0.0
  %3305 = vmatpush2.msra.mxu0 0.0
  %3306 = vmatprep.subr.mxu0 0.0
  %3307 = vmatpush2.msra.mxu0 0.0
  %3308 = vmatprep.subr.mxu0 0.0
  %3309 = vmatpush2.msra.mxu0 0.0
  %3310 = vmatprep.subr.mxu0 0.0
  %3311 = vmatpush2.msra.mxu0 0.0
  %3312 = vmatprep.subr.mxu0 0.0
  %3313 = vmatpush2.msra.mxu0 0.0
  %3314 = vmatprep.subr.mxu0 0.0
  %3315 = vmatpush2.msra.mxu0 0.0
  %3316 = vmatprep.subr.mxu0 0.0
  %3317 = vmatpush2.msra.mxu0 0.0
  %3318 = vmatprep.subr.mxu0 0.0
  %3319 = vmatpush2.msra.mxu0 0.0
  %3320 = vmatprep.subr.mxu0 0.0
  %3321 = vmatpush2.msra.mxu0 0.0
  %3322 = vmatprep.subr.mxu0 0.0
  %3323 = vmatpush2.msra.mxu0 0.0
  %3324 = vmatprep.subr.mxu0 0.0
  %3325 = vmatpush2.msra.mxu0 0.0
  %3326 = vmatprep.subr.mxu0 0.0
  %3327 = vmatpush2.msra.mxu0 0.0
  %3328 = vmatprep.subr.mxu0 0.0
  %3329 = vmatpush2.msra.mxu0 0.0
  %3330 = vmatprep.mubr.f32.mxu0 0.0
  %3331 = vmatmul.mubr.f32.gmra.mxu0 %v3263
  %v3332 = vpop.f32.mrf.mxu0
  %v3333 = vadd.f32 0.0, %v3332
  %v3334 = vpop.f32.mrf.mxu0
  %3335 = vdwg.mxu0
  %v3336 = vadd.f32 %v3265, %v3333
  %3337 = vmax.xlane.f32.xlu0 %v3336
  %v3338 = vpop.xlane.xlu0 %3337
  %v3339 = vsub.f32 %v3336, %v3338
  %v3340 = vmul.f32 %v3339, 1.442695
  %v3341 = vpow.pop %v3340
  %3342 = vadd.xlane.f32.xlu0 %v3341
  %v3343 = vpop.xlane.xlu0 %3342
  %v3344 = vrcp.pop %v3343
  %v3345 = vmul.f32 %v3341, %v3344
  %s3346 = scalar_lea.vmem %s15, 24
  %3347 = vst [vmem:[%s3346] sm:$0xff] %v3345
  %3348 = vxpose.xlu0.b32.start [1/16] %v3345, 128
  %3349 = vxpose.xlu0.b32.cont [2/16] 0.0, 128
  %3350 = vxpose.xlu0.b32.cont [3/16] 0.0, 128
  %3351 = vxpose.xlu0.b32.cont [4/16] 0.0, 128
  %3352 = vxpose.xlu0.b32.cont [5/16] 0.0, 128
  %3353 = vxpose.xlu0.b32.cont [6/16] 0.0, 128
  %3354 = vxpose.xlu0.b32.cont [7/16] 0.0, 128
  %3355 = vxpose.xlu0.b32.cont [8/16] 0.0, 128
  %3356 = vxpose.xlu0.b32.cont [9/16] 0.0, 128
  %3357 = vxpose.xlu0.b32.cont [10/16] 0.0, 128
  %3358 = vxpose.xlu0.b32.cont [11/16] 0.0, 128
  %3359 = vxpose.xlu0.b32.cont [12/16] 0.0, 128
  %3360 = vxpose.xlu0.b32.cont [13/16] 0.0, 128
  %3361 = vxpose.xlu0.b32.cont [14/16] 0.0, 128
  %3362 = vxpose.xlu0.b32.cont [15/16] 0.0, 128
  %3363 = vxpose.xlu0.b32.end [16/16] 0.0, 128
  %v3364 = vpop.trf.xlu0
  %v3365 = vpop.trf.xlu0
  %v3366 = vpop.trf.xlu0
  %v3367 = vpop.trf.xlu0
  %v3368 = vpop.trf.xlu0
  %v3369 = vpop.trf.xlu0
  %v3370 = vpop.trf.xlu0
  %v3371 = vpop.trf.xlu0
  %v3372 = vpop.trf.xlu0
  %v3373 = vpop.trf.xlu0
  %v3374 = vpop.trf.xlu0
  %v3375 = vpop.trf.xlu0
  %v3376 = vpop.trf.xlu0
  %v3377 = vpop.trf.xlu0
  %v3378 = vpop.trf.xlu0
  %v3379 = vpop.trf.xlu0
  %v3380 = vlaneseq
  %v3381 = vshrl.u32 %v3380, 7
  %v3382 = vsub.s32 0, %v3381
  %v3383 = vrot.slane %v3364, %v3382
  %3385 = vbcast.lane.b32.xlu0 %v3383, 256
  %v3386 = vpop.permute.xlu0 %3385
  %v3387 = vlaneseq
  %v3388 = vshrl.u32 %v3387, 7
  %v3389 = vsub.s32 1, %v3388
  %v3390 = vrot.slane %v3364, %v3389
  %3392 = vbcast.lane.b32.xlu0 %v3390, 256
  %v3393 = vpop.permute.xlu0 %3392
  %v3394 = vlaneseq
  %v3395 = vshrl.u32 %v3394, 7
  %v3396 = vsub.s32 2, %v3395
  %v3397 = vrot.slane %v3364, %v3396
  %3399 = vbcast.lane.b32.xlu0 %v3397, 256
  %v3400 = vpop.permute.xlu0 %3399
  %v3401 = vlaneseq
  %v3402 = vshrl.u32 %v3401, 7
  %v3403 = vsub.s32 3, %v3402
  %v3404 = vrot.slane %v3364, %v3403
  %3406 = vbcast.lane.b32.xlu0 %v3404, 256
  %v3407 = vpop.permute.xlu0 %3406
  %v3408 = vlaneseq
  %v3409 = vshrl.u32 %v3408, 7
  %v3410 = vsub.s32 4, %v3409
  %v3411 = vrot.slane %v3364, %v3410
  %3413 = vbcast.lane.b32.xlu0 %v3411, 256
  %v3414 = vpop.permute.xlu0 %3413
  %v3415 = vlaneseq
  %v3416 = vshrl.u32 %v3415, 7
  %v3417 = vsub.s32 5, %v3416
  %v3418 = vrot.slane %v3364, %v3417
  %3420 = vbcast.lane.b32.xlu0 %v3418, 256
  %v3421 = vpop.permute.xlu0 %3420
  %v3422 = vlaneseq
  %v3423 = vshrl.u32 %v3422, 7
  %v3424 = vsub.s32 6, %v3423
  %v3425 = vrot.slane %v3364, %v3424
  %3427 = vbcast.lane.b32.xlu0 %v3425, 256
  %v3428 = vpop.permute.xlu0 %3427
  %v3429 = vlaneseq
  %v3430 = vshrl.u32 %v3429, 7
  %v3431 = vsub.s32 7, %v3430
  %v3432 = vrot.slane %v3364, %v3431
  %3434 = vbcast.lane.b32.xlu0 %v3432, 256
  %v3435 = vpop.permute.xlu0 %3434
  %v3436 = vmul.f32 %v3386, %v1744
  %v3437 = vmul.f32 %v3393, %v1749
  %v3438 = vmul.f32 %v3400, %v1754
  %v3439 = vmul.f32 %v3407, %v1759
  %v3440 = vmul.f32 %v3414, %v1764
  %v3441 = vmul.f32 %v3421, %v1769
  %v3442 = vmul.f32 %v3428, %v1774
  %v3443 = vmul.f32 %v3435, %v1779
  %v3444 = vadd.f32 %v3436, %v3437
  %v3445 = vadd.f32 %v3444, %v3438
  %v3446 = vadd.f32 %v3445, %v3439
  %v3447 = vadd.f32 %v3446, %v3440
  %v3448 = vadd.f32 %v3447, %v3441
  %v3449 = vadd.f32 %v3448, %v3442
  %v3450 = vadd.f32 %v3449, %v3443
  %s3451 = scalar_lea.vmem %s1, 24
  %v3452 = vld [vmem:[%s3451] sm:$0xff]
  %v3453 = vadd.f32 %v3452, %v3450
  %v3454 = vmax.f32 %v3453, 0.0
  %3455 = vmatprep.subr.mxu0 %v143
  %3456 = vmatpush1.msra.mxu0 %v142
  %3457 = vmatprep.subr.mxu0 %v140
  %3458 = vmatpush1.msra.mxu0 %v139
  %3459 = vmatprep.subr.mxu0 %v137
  %3460 = vmatpush1.msra.mxu0 %v136
  %3461 = vmatprep.subr.mxu0 %v134
  %3462 = vmatpush1.msra.mxu0 %v133
  %3463 = vmatprep.subr.mxu0 %v131
  %3464 = vmatpush1.msra.mxu0 %v130
  %3465 = vmatprep.subr.mxu0 %v128
  %3466 = vmatpush1.msra.mxu0 %v127
  %3467 = vmatprep.subr.mxu0 %v125
  %3468 = vmatpush1.msra.mxu0 %v124
  %3469 = vmatprep.subr.mxu0 %v122
  %3470 = vmatpush1.msra.mxu0 %v121
  %3471 = vmatprep.subr.mxu0 %v119
  %3472 = vmatpush1.msra.mxu0 %v118
  %3473 = vmatprep.subr.mxu0 %v116
  %3474 = vmatpush1.msra.mxu0 %v115
  %3475 = vmatprep.subr.mxu0 %v113
  %3476 = vmatpush1.msra.mxu0 %v112
  %3477 = vmatprep.subr.mxu0 %v110
  %3478 = vmatpush1.msra.mxu0 %v109
  %3479 = vmatprep.subr.mxu0 %v107
  %3480 = vmatpush1.msra.mxu0 %v106
  %3481 = vmatprep.subr.mxu0 %v104
  %3482 = vmatpush1.msra.mxu0 %v103
  %3483 = vmatprep.subr.mxu0 %v101
  %3484 = vmatpush1.msra.mxu0 %v100
  %3485 = vmatprep.subr.mxu0 %v98
  %3486 = vmatpush1.msra.mxu0 %v97
  %3487 = vmatprep.subr.mxu0 0.0
  %3488 = vmatpush2.msra.mxu0 0.0
  %3489 = vmatprep.subr.mxu0 0.0
  %3490 = vmatpush2.msra.mxu0 0.0
  %3491 = vmatprep.subr.mxu0 0.0
  %3492 = vmatpush2.msra.mxu0 0.0
  %3493 = vmatprep.subr.mxu0 0.0
  %3494 = vmatpush2.msra.mxu0 0.0
  %3495 = vmatprep.subr.mxu0 0.0
  %3496 = vmatpush2.msra.mxu0 0.0
  %3497 = vmatprep.subr.mxu0 0.0
  %3498 = vmatpush2.msra.mxu0 0.0
  %3499 = vmatprep.subr.mxu0 0.0
  %3500 = vmatpush2.msra.mxu0 0.0
  %3501 = vmatprep.subr.mxu0 0.0
  %3502 = vmatpush2.msra.mxu0 0.0
  %3503 = vmatprep.subr.mxu0 0.0
  %3504 = vmatpush2.msra.mxu0 0.0
  %3505 = vmatprep.subr.mxu0 0.0
  %3506 = vmatpush2.msra.mxu0 0.0
  %3507 = vmatprep.subr.mxu0 0.0
  %3508 = vmatpush2.msra.mxu0 0.0
  %3509 = vmatprep.subr.mxu0 0.0
  %3510 = vmatpush2.msra.mxu0 0.0
  %3511 = vmatprep.subr.mxu0 0.0
  %3512 = vmatpush2.msra.mxu0 0.0
  %3513 = vmatprep.subr.mxu0 0.0
  %3514 = vmatpush2.msra.mxu0 0.0
  %3515 = vmatprep.subr.mxu0 0.0
  %3516 = vmatpush2.msra.mxu0 0.0
  %3517 = vmatprep.subr.mxu0 0.0
  %3518 = vmatpush2.msra.mxu0 0.0
  %3519 = vmatprep.mubr.f32.mxu0 0.0
  %3520 = vmatmul.mubr.f32.gmra.mxu0 %v3454
  %v3521 = vpop.f32.mrf.mxu0
  %v3522 = vadd.f32 %v244, %v3521
  %v3523 = vpop.f32.mrf.mxu0
  %v3524 = vadd.f32 %v248, %v3523
  %3525 = vdwg.mxu0
  %3526 = vmatprep.subr.mxu0 0.0
  %3527 = vmatpush1.msra.mxu0 %v144
  %3528 = vmatprep.subr.mxu0 0.0
  %3529 = vmatpush1.msra.mxu0 %v141
  %3530 = vmatprep.subr.mxu0 0.0
  %3531 = vmatpush1.msra.mxu0 %v138
  %3532 = vmatprep.subr.mxu0 0.0
  %3533 = vmatpush1.msra.mxu0 %v135
  %3534 = vmatprep.subr.mxu0 0.0
  %3535 = vmatpush1.msra.mxu0 %v132
  %3536 = vmatprep.subr.mxu0 0.0
  %3537 = vmatpush1.msra.mxu0 %v129
  %3538 = vmatprep.subr.mxu0 0.0
  %3539 = vmatpush1.msra.mxu0 %v126
  %3540 = vmatprep.subr.mxu0 0.0
  %3541 = vmatpush1.msra.mxu0 %v123
  %3542 = vmatprep.subr.mxu0 0.0
  %3543 = vmatpush1.msra.mxu0 %v120
  %3544 = vmatprep.subr.mxu0 0.0
  %3545 = vmatpush1.msra.mxu0 %v117
  %3546 = vmatprep.subr.mxu0 0.0
  %3547 = vmatpush1.msra.mxu0 %v114
  %3548 = vmatprep.subr.mxu0 0.0
  %3549 = vmatpush1.msra.mxu0 %v111
  %3550 = vmatprep.subr.mxu0 0.0
  %3551 = vmatpush1.msra.mxu0 %v108
  %3552 = vmatprep.subr.mxu0 0.0
  %3553 = vmatpush1.msra.mxu0 %v105
  %3554 = vmatprep.subr.mxu0 0.0
  %3555 = vmatpush1.msra.mxu0 %v102
  %3556 = vmatprep.subr.mxu0 0.0
  %3557 = vmatpush1.msra.mxu0 %v99
  %3558 = vmatprep.subr.mxu0 0.0
  %3559 = vmatpush2.msra.mxu0 0.0
  %3560 = vmatprep.subr.mxu0 0.0
  %3561 = vmatpush2.msra.mxu0 0.0
  %3562 = vmatprep.subr.mxu0 0.0
  %3563 = vmatpush2.msra.mxu0 0.0
  %3564 = vmatprep.subr.mxu0 0.0
  %3565 = vmatpush2.msra.mxu0 0.0
  %3566 = vmatprep.subr.mxu0 0.0
  %3567 = vmatpush2.msra.mxu0 0.0
  %3568 = vmatprep.subr.mxu0 0.0
  %3569 = vmatpush2.msra.mxu0 0.0
  %3570 = vmatprep.subr.mxu0 0.0
  %3571 = vmatpush2.msra.mxu0 0.0
  %3572 = vmatprep.subr.mxu0 0.0
  %3573 = vmatpush2.msra.mxu0 0.0
  %3574 = vmatprep.subr.mxu0 0.0
  %3575 = vmatpush2.msra.mxu0 0.0
  %3576 = vmatprep.subr.mxu0 0.0
  %3577 = vmatpush2.msra.mxu0 0.0
  %3578 = vmatprep.subr.mxu0 0.0
  %3579 = vmatpush2.msra.mxu0 0.0
  %3580 = vmatprep.subr.mxu0 0.0
  %3581 = vmatpush2.msra.mxu0 0.0
  %3582 = vmatprep.subr.mxu0 0.0
  %3583 = vmatpush2.msra.mxu0 0.0
  %3584 = vmatprep.subr.mxu0 0.0
  %3585 = vmatpush2.msra.mxu0 0.0
  %3586 = vmatprep.subr.mxu0 0.0
  %3587 = vmatpush2.msra.mxu0 0.0
  %3588 = vmatprep.subr.mxu0 0.0
  %3589 = vmatpush2.msra.mxu0 0.0
  %3590 = vmatprep.mubr.f32.mxu0 0.0
  %3591 = vmatmul.mubr.f32.gmra.mxu0 %v3454
  %v3592 = vpop.f32.mrf.mxu0
  %v3593 = vadd.f32 %v252, %v3592
  %v3594 = vpop.f32.mrf.mxu0
  %3595 = vdwg.mxu0
  %3596 = vmatprep.subr.mxu0 %v191
  %3597 = vmatpush1.msra.mxu0 %v190
  %3598 = vmatprep.subr.mxu0 %v188
  %3599 = vmatpush1.msra.mxu0 %v187
  %3600 = vmatprep.subr.mxu0 %v185
  %3601 = vmatpush1.msra.mxu0 %v184
  %3602 = vmatprep.subr.mxu0 %v182
  %3603 = vmatpush1.msra.mxu0 %v181
  %3604 = vmatprep.subr.mxu0 %v179
  %3605 = vmatpush1.msra.mxu0 %v178
  %3606 = vmatprep.subr.mxu0 %v176
  %3607 = vmatpush1.msra.mxu0 %v175
  %3608 = vmatprep.subr.mxu0 %v173
  %3609 = vmatpush1.msra.mxu0 %v172
  %3610 = vmatprep.subr.mxu0 %v170
  %3611 = vmatpush1.msra.mxu0 %v169
  %3612 = vmatprep.subr.mxu0 %v167
  %3613 = vmatpush1.msra.mxu0 %v166
  %3614 = vmatprep.subr.mxu0 %v164
  %3615 = vmatpush1.msra.mxu0 %v163
  %3616 = vmatprep.subr.mxu0 %v161
  %3617 = vmatpush1.msra.mxu0 %v160
  %3618 = vmatprep.subr.mxu0 %v158
  %3619 = vmatpush1.msra.mxu0 %v157
  %3620 = vmatprep.subr.mxu0 %v155
  %3621 = vmatpush1.msra.mxu0 %v154
  %3622 = vmatprep.subr.mxu0 %v152
  %3623 = vmatpush1.msra.mxu0 %v151
  %3624 = vmatprep.subr.mxu0 %v149
  %3625 = vmatpush1.msra.mxu0 %v148
  %3626 = vmatprep.subr.mxu0 %v146
  %3627 = vmatpush1.msra.mxu0 %v145
  %3628 = vmatprep.subr.mxu0 0.0
  %3629 = vmatpush2.msra.mxu0 0.0
  %3630 = vmatprep.subr.mxu0 0.0
  %3631 = vmatpush2.msra.mxu0 0.0
  %3632 = vmatprep.subr.mxu0 0.0
  %3633 = vmatpush2.msra.mxu0 0.0
  %3634 = vmatprep.subr.mxu0 0.0
  %3635 = vmatpush2.msra.mxu0 0.0
  %3636 = vmatprep.subr.mxu0 0.0
  %3637 = vmatpush2.msra.mxu0 0.0
  %3638 = vmatprep.subr.mxu0 0.0
  %3639 = vmatpush2.msra.mxu0 0.0
  %3640 = vmatprep.subr.mxu0 0.0
  %3641 = vmatpush2.msra.mxu0 0.0
  %3642 = vmatprep.subr.mxu0 0.0
  %3643 = vmatpush2.msra.mxu0 0.0
  %3644 = vmatprep.subr.mxu0 0.0
  %3645 = vmatpush2.msra.mxu0 0.0
  %3646 = vmatprep.subr.mxu0 0.0
  %3647 = vmatpush2.msra.mxu0 0.0
  %3648 = vmatprep.subr.mxu0 0.0
  %3649 = vmatpush2.msra.mxu0 0.0
  %3650 = vmatprep.subr.mxu0 0.0
  %3651 = vmatpush2.msra.mxu0 0.0
  %3652 = vmatprep.subr.mxu0 0.0
  %3653 = vmatpush2.msra.mxu0 0.0
  %3654 = vmatprep.subr.mxu0 0.0
  %3655 = vmatpush2.msra.mxu0 0.0
  %3656 = vmatprep.subr.mxu0 0.0
  %3657 = vmatpush2.msra.mxu0 0.0
  %3658 = vmatprep.subr.mxu0 0.0
  %3659 = vmatpush2.msra.mxu0 0.0
  %3660 = vmatprep.mubr.f32.mxu0 0.0
  %3661 = vmatmul.mubr.f32.gmra.mxu0 %v3263
  %v3662 = vpop.f32.mrf.mxu0
  %v3663 = vadd.f32 0.0, %v3662
  %v3664 = vpop.f32.mrf.mxu0
  %v3665 = vadd.f32 0.0, %v3664
  %3666 = vdwg.mxu0
  %3667 = vmatprep.subr.mxu0 0.0
  %3668 = vmatpush1.msra.mxu0 %v192
  %3669 = vmatprep.subr.mxu0 0.0
  %3670 = vmatpush1.msra.mxu0 %v189
  %3671 = vmatprep.subr.mxu0 0.0
  %3672 = vmatpush1.msra.mxu0 %v186
  %3673 = vmatprep.subr.mxu0 0.0
  %3674 = vmatpush1.msra.mxu0 %v183
  %3675 = vmatprep.subr.mxu0 0.0
  %3676 = vmatpush1.msra.mxu0 %v180
  %3677 = vmatprep.subr.mxu0 0.0
  %3678 = vmatpush1.msra.mxu0 %v177
  %3679 = vmatprep.subr.mxu0 0.0
  %3680 = vmatpush1.msra.mxu0 %v174
  %3681 = vmatprep.subr.mxu0 0.0
  %3682 = vmatpush1.msra.mxu0 %v171
  %3683 = vmatprep.subr.mxu0 0.0
  %3684 = vmatpush1.msra.mxu0 %v168
  %3685 = vmatprep.subr.mxu0 0.0
  %3686 = vmatpush1.msra.mxu0 %v165
  %3687 = vmatprep.subr.mxu0 0.0
  %3688 = vmatpush1.msra.mxu0 %v162
  %3689 = vmatprep.subr.mxu0 0.0
  %3690 = vmatpush1.msra.mxu0 %v159
  %3691 = vmatprep.subr.mxu0 0.0
  %3692 = vmatpush1.msra.mxu0 %v156
  %3693 = vmatprep.subr.mxu0 0.0
  %3694 = vmatpush1.msra.mxu0 %v153
  %3695 = vmatprep.subr.mxu0 0.0
  %3696 = vmatpush1.msra.mxu0 %v150
  %3697 = vmatprep.subr.mxu0 0.0
  %3698 = vmatpush1.msra.mxu0 %v147
  %3699 = vmatprep.subr.mxu0 0.0
  %3700 = vmatpush2.msra.mxu0 0.0
  %3701 = vmatprep.subr.mxu0 0.0
  %3702 = vmatpush2.msra.mxu0 0.0
  %3703 = vmatprep.subr.mxu0 0.0
  %3704 = vmatpush2.msra.mxu0 0.0
  %3705 = vmatprep.subr.mxu0 0.0
  %3706 = vmatpush2.msra.mxu0 0.0
  %3707 = vmatprep.subr.mxu0 0.0
  %3708 = vmatpush2.msra.mxu0 0.0
  %3709 = vmatprep.subr.mxu0 0.0
  %3710 = vmatpush2.msra.mxu0 0.0
  %3711 = vmatprep.subr.mxu0 0.0
  %3712 = vmatpush2.msra.mxu0 0.0
  %3713 = vmatprep.subr.mxu0 0.0
  %3714 = vmatpush2.msra.mxu0 0.0
  %3715 = vmatprep.subr.mxu0 0.0
  %3716 = vmatpush2.msra.mxu0 0.0
  %3717 = vmatprep.subr.mxu0 0.0
  %3718 = vmatpush2.msra.mxu0 0.0
  %3719 = vmatprep.subr.mxu0 0.0
  %3720 = vmatpush2.msra.mxu0 0.0
  %3721 = vmatprep.subr.mxu0 0.0
  %3722 = vmatpush2.msra.mxu0 0.0
  %3723 = vmatprep.subr.mxu0 0.0
  %3724 = vmatpush2.msra.mxu0 0.0
  %3725 = vmatprep.subr.mxu0 0.0
  %3726 = vmatpush2.msra.mxu0 0.0
  %3727 = vmatprep.subr.mxu0 0.0
  %3728 = vmatpush2.msra.mxu0 0.0
  %3729 = vmatprep.subr.mxu0 0.0
  %3730 = vmatpush2.msra.mxu0 0.0
  %3731 = vmatprep.mubr.f32.mxu0 0.0
  %3732 = vmatmul.mubr.f32.gmra.mxu0 %v3263
  %v3733 = vpop.f32.mrf.mxu0
  %v3734 = vadd.f32 0.0, %v3733
  %v3735 = vpop.f32.mrf.mxu0
  %3736 = vdwg.mxu0
  %v3737 = vadd.f32 %v3522, %v3663
  %v3738 = vxor.u32 %v3737, 2147483648
  %v3739 = vmul.f32 %v3738, 1.442695
  %v3740 = vpow.pop %v3739
  %v3741 = vadd.f32 %v3740, 1.0
  %v3742 = vrcp.pop %v3741
  %v3743 = vmul.f32 1.0, %v3742
  %v3744 = vadd.f32 %v3524, %v3665
  %v3745 = vxor.u32 %v3744, 2147483648
  %v3746 = vmul.f32 %v3745, 1.442695
  %v3747 = vpow.pop %v3746
  %v3748 = vadd.f32 %v3747, 1.0
  %v3749 = vrcp.pop %v3748
  %v3750 = vmul.f32 1.0, %v3749
  %v3751 = vadd.f32 %v3734, %v237
  %v3752 = vmul.f32 %v3743, %v3751
  %v3753 = vadd.f32 %v3593, %v3752
  %v3754 = vtanh.pop %v3753
  %v3755 = vsub.f32 1.0, %v3750
  %v3756 = vmul.f32 %v3755, %v3754
  %v3757 = vmul.f32 %v3750, %v3263
  %v3758 = vadd.f32 %v3756, %v3757
  %s3759 = scalar_lea.vmem %s0, 32
  %v3760 = vld [vmem:[%s3759] sm:$0xff]
  %3761 = vmatprep.subr.mxu0 0.0
  %3762 = vmatpush1.msra.mxu0 %v208
  %3763 = vmatprep.subr.mxu0 0.0
  %3764 = vmatpush1.msra.mxu0 %v207
  %3765 = vmatprep.subr.mxu0 0.0
  %3766 = vmatpush1.msra.mxu0 %v206
  %3767 = vmatprep.subr.mxu0 0.0
  %3768 = vmatpush1.msra.mxu0 %v205
  %3769 = vmatprep.subr.mxu0 0.0
  %3770 = vmatpush1.msra.mxu0 %v204
  %3771 = vmatprep.subr.mxu0 0.0
  %3772 = vmatpush1.msra.mxu0 %v203
  %3773 = vmatprep.subr.mxu0 0.0
  %3774 = vmatpush1.msra.mxu0 %v202
  %3775 = vmatprep.subr.mxu0 0.0
  %3776 = vmatpush1.msra.mxu0 %v201
  %3777 = vmatprep.subr.mxu0 0.0
  %3778 = vmatpush1.msra.mxu0 %v200
  %3779 = vmatprep.subr.mxu0 0.0
  %3780 = vmatpush1.msra.mxu0 %v199
  %3781 = vmatprep.subr.mxu0 0.0
  %3782 = vmatpush1.msra.mxu0 %v198
  %3783 = vmatprep.subr.mxu0 0.0
  %3784 = vmatpush1.msra.mxu0 %v197
  %3785 = vmatprep.subr.mxu0 0.0
  %3786 = vmatpush1.msra.mxu0 %v196
  %3787 = vmatprep.subr.mxu0 0.0
  %3788 = vmatpush1.msra.mxu0 %v195
  %3789 = vmatprep.subr.mxu0 0.0
  %3790 = vmatpush1.msra.mxu0 %v194
  %3791 = vmatprep.subr.mxu0 0.0
  %3792 = vmatpush1.msra.mxu0 %v193
  %3793 = vmatprep.subr.mxu0 0.0
  %3794 = vmatpush2.msra.mxu0 0.0
  %3795 = vmatprep.subr.mxu0 0.0
  %3796 = vmatpush2.msra.mxu0 0.0
  %3797 = vmatprep.subr.mxu0 0.0
  %3798 = vmatpush2.msra.mxu0 0.0
  %3799 = vmatprep.subr.mxu0 0.0
  %3800 = vmatpush2.msra.mxu0 0.0
  %3801 = vmatprep.subr.mxu0 0.0
  %3802 = vmatpush2.msra.mxu0 0.0
  %3803 = vmatprep.subr.mxu0 0.0
  %3804 = vmatpush2.msra.mxu0 0.0
  %3805 = vmatprep.subr.mxu0 0.0
  %3806 = vmatpush2.msra.mxu0 0.0
  %3807 = vmatprep.subr.mxu0 0.0
  %3808 = vmatpush2.msra.mxu0 0.0
  %3809 = vmatprep.subr.mxu0 0.0
  %3810 = vmatpush2.msra.mxu0 0.0
  %3811 = vmatprep.subr.mxu0 0.0
  %3812 = vmatpush2.msra.mxu0 0.0
  %3813 = vmatprep.subr.mxu0 0.0
  %3814 = vmatpush2.msra.mxu0 0.0
  %3815 = vmatprep.subr.mxu0 0.0
  %3816 = vmatpush2.msra.mxu0 0.0
  %3817 = vmatprep.subr.mxu0 0.0
  %3818 = vmatpush2.msra.mxu0 0.0
  %3819 = vmatprep.subr.mxu0 0.0
  %3820 = vmatpush2.msra.mxu0 0.0
  %3821 = vmatprep.subr.mxu0 0.0
  %3822 = vmatpush2.msra.mxu0 0.0
  %3823 = vmatprep.subr.mxu0 0.0
  %3824 = vmatpush2.msra.mxu0 0.0
  %3825 = vmatprep.mubr.f32.mxu0 0.0
  %3826 = vmatmul.mubr.f32.gmra.mxu0 %v3758
  %v3827 = vpop.f32.mrf.mxu0
  %v3828 = vadd.f32 0.0, %v3827
  %v3829 = vpop.f32.mrf.mxu0
  %3830 = vdwg.mxu0
  %v3831 = vadd.f32 %v3760, %v3828
  %3832 = vmax.xlane.f32.xlu0 %v3831
  %v3833 = vpop.xlane.xlu0 %3832
  %v3834 = vsub.f32 %v3831, %v3833
  %v3835 = vmul.f32 %v3834, 1.442695
  %v3836 = vpow.pop %v3835
  %3837 = vadd.xlane.f32.xlu0 %v3836
  %v3838 = vpop.xlane.xlu0 %3837
  %v3839 = vrcp.pop %v3838
  %v3840 = vmul.f32 %v3836, %v3839
  %s3841 = scalar_lea.vmem %s15, 32
  %3842 = vst [vmem:[%s3841] sm:$0xff] %v3840
  %3843 = vxpose.xlu0.b32.start [1/16] %v3840, 128
  %3844 = vxpose.xlu0.b32.cont [2/16] 0.0, 128
  %3845 = vxpose.xlu0.b32.cont [3/16] 0.0, 128
  %3846 = vxpose.xlu0.b32.cont [4/16] 0.0, 128
  %3847 = vxpose.xlu0.b32.cont [5/16] 0.0, 128
  %3848 = vxpose.xlu0.b32.cont [6/16] 0.0, 128
  %3849 = vxpose.xlu0.b32.cont [7/16] 0.0, 128
  %3850 = vxpose.xlu0.b32.cont [8/16] 0.0, 128
  %3851 = vxpose.xlu0.b32.cont [9/16] 0.0, 128
  %3852 = vxpose.xlu0.b32.cont [10/16] 0.0, 128
  %3853 = vxpose.xlu0.b32.cont [11/16] 0.0, 128
  %3854 = vxpose.xlu0.b32.cont [12/16] 0.0, 128
  %3855 = vxpose.xlu0.b32.cont [13/16] 0.0, 128
  %3856 = vxpose.xlu0.b32.cont [14/16] 0.0, 128
  %3857 = vxpose.xlu0.b32.cont [15/16] 0.0, 128
  %3858 = vxpose.xlu0.b32.end [16/16] 0.0, 128
  %v3859 = vpop.trf.xlu0
  %v3860 = vpop.trf.xlu0
  %v3861 = vpop.trf.xlu0
  %v3862 = vpop.trf.xlu0
  %v3863 = vpop.trf.xlu0
  %v3864 = vpop.trf.xlu0
  %v3865 = vpop.trf.xlu0
  %v3866 = vpop.trf.xlu0
  %v3867 = vpop.trf.xlu0
  %v3868 = vpop.trf.xlu0
  %v3869 = vpop.trf.xlu0
  %v3870 = vpop.trf.xlu0
  %v3871 = vpop.trf.xlu0
  %v3872 = vpop.trf.xlu0
  %v3873 = vpop.trf.xlu0
  %v3874 = vpop.trf.xlu0
  %v3875 = vlaneseq
  %v3876 = vshrl.u32 %v3875, 7
  %v3877 = vsub.s32 0, %v3876
  %v3878 = vrot.slane %v3859, %v3877
  %3880 = vbcast.lane.b32.xlu0 %v3878, 256
  %v3881 = vpop.permute.xlu0 %3880
  %v3882 = vlaneseq
  %v3883 = vshrl.u32 %v3882, 7
  %v3884 = vsub.s32 1, %v3883
  %v3885 = vrot.slane %v3859, %v3884
  %3887 = vbcast.lane.b32.xlu0 %v3885, 256
  %v3888 = vpop.permute.xlu0 %3887
  %v3889 = vlaneseq
  %v3890 = vshrl.u32 %v3889, 7
  %v3891 = vsub.s32 2, %v3890
  %v3892 = vrot.slane %v3859, %v3891
  %3894 = vbcast.lane.b32.xlu0 %v3892, 256
  %v3895 = vpop.permute.xlu0 %3894
  %v3896 = vlaneseq
  %v3897 = vshrl.u32 %v3896, 7
  %v3898 = vsub.s32 3, %v3897
  %v3899 = vrot.slane %v3859, %v3898
  %3901 = vbcast.lane.b32.xlu0 %v3899, 256
  %v3902 = vpop.permute.xlu0 %3901
  %v3903 = vlaneseq
  %v3904 = vshrl.u32 %v3903, 7
  %v3905 = vsub.s32 4, %v3904
  %v3906 = vrot.slane %v3859, %v3905
  %3908 = vbcast.lane.b32.xlu0 %v3906, 256
  %v3909 = vpop.permute.xlu0 %3908
  %v3910 = vlaneseq
  %v3911 = vshrl.u32 %v3910, 7
  %v3912 = vsub.s32 5, %v3911
  %v3913 = vrot.slane %v3859, %v3912
  %3915 = vbcast.lane.b32.xlu0 %v3913, 256
  %v3916 = vpop.permute.xlu0 %3915
  %v3917 = vlaneseq
  %v3918 = vshrl.u32 %v3917, 7
  %v3919 = vsub.s32 6, %v3918
  %v3920 = vrot.slane %v3859, %v3919
  %3922 = vbcast.lane.b32.xlu0 %v3920, 256
  %v3923 = vpop.permute.xlu0 %3922
  %v3924 = vlaneseq
  %v3925 = vshrl.u32 %v3924, 7
  %v3926 = vsub.s32 7, %v3925
  %v3927 = vrot.slane %v3859, %v3926
  %3929 = vbcast.lane.b32.xlu0 %v3927, 256
  %v3930 = vpop.permute.xlu0 %3929
  %v3931 = vmul.f32 %v3881, %v1744
  %v3932 = vmul.f32 %v3888, %v1749
  %v3933 = vmul.f32 %v3895, %v1754
  %v3934 = vmul.f32 %v3902, %v1759
  %v3935 = vmul.f32 %v3909, %v1764
  %v3936 = vmul.f32 %v3916, %v1769
  %v3937 = vmul.f32 %v3923, %v1774
  %v3938 = vmul.f32 %v3930, %v1779
  %v3939 = vadd.f32 %v3931, %v3932
  %v3940 = vadd.f32 %v3939, %v3933
  %v3941 = vadd.f32 %v3940, %v3934
  %v3942 = vadd.f32 %v3941, %v3935
  %v3943 = vadd.f32 %v3942, %v3936
  %v3944 = vadd.f32 %v3943, %v3937
  %v3945 = vadd.f32 %v3944, %v3938
  %s3946 = scalar_lea.vmem %s1, 32
  %v3947 = vld [vmem:[%s3946] sm:$0xff]
  %v3948 = vadd.f32 %v3947, %v3945
  %v3949 = vmax.f32 %v3948, 0.0
  %3950 = vmatprep.subr.mxu0 %v143
  %3951 = vmatpush1.msra.mxu0 %v142
  %3952 = vmatprep.subr.mxu0 %v140
  %3953 = vmatpush1.msra.mxu0 %v139
  %3954 = vmatprep.subr.mxu0 %v137
  %3955 = vmatpush1.msra.mxu0 %v136
  %3956 = vmatprep.subr.mxu0 %v134
  %3957 = vmatpush1.msra.mxu0 %v133
  %3958 = vmatprep.subr.mxu0 %v131
  %3959 = vmatpush1.msra.mxu0 %v130
  %3960 = vmatprep.subr.mxu0 %v128
  %3961 = vmatpush1.msra.mxu0 %v127
  %3962 = vmatprep.subr.mxu0 %v125
  %3963 = vmatpush1.msra.mxu0 %v124
  %3964 = vmatprep.subr.mxu0 %v122
  %3965 = vmatpush1.msra.mxu0 %v121
  %3966 = vmatprep.subr.mxu0 %v119
  %3967 = vmatpush1.msra.mxu0 %v118
  %3968 = vmatprep.subr.mxu0 %v116
  %3969 = vmatpush1.msra.mxu0 %v115
  %3970 = vmatprep.subr.mxu0 %v113
  %3971 = vmatpush1.msra.mxu0 %v112
  %3972 = vmatprep.subr.mxu0 %v110
  %3973 = vmatpush1.msra.mxu0 %v109
  %3974 = vmatprep.subr.mxu0 %v107
  %3975 = vmatpush1.msra.mxu0 %v106
  %3976 = vmatprep.subr.mxu0 %v104
  %3977 = vmatpush1.msra.mxu0 %v103
  %3978 = vmatprep.subr.mxu0 %v101
  %3979 = vmatpush1.msra.mxu0 %v100
  %3980 = vmatprep.subr.mxu0 %v98
  %3981 = vmatpush1.msra.mxu0 %v97
  %3982 = vmatprep.subr.mxu0 0.0
  %3983 = vmatpush2.msra.mxu0 0.0
  %3984 = vmatprep.subr.mxu0 0.0
  %3985 = vmatpush2.msra.mxu0 0.0
  %3986 = vmatprep.subr.mxu0 0.0
  %3987 = vmatpush2.msra.mxu0 0.0
  %3988 = vmatprep.subr.mxu0 0.0
  %3989 = vmatpush2.msra.mxu0 0.0
  %3990 = vmatprep.subr.mxu0 0.0
  %3991 = vmatpush2.msra.mxu0 0.0
  %3992 = vmatprep.subr.mxu0 0.0
  %3993 = vmatpush2.msra.mxu0 0.0
  %3994 = vmatprep.subr.mxu0 0.0
  %3995 = vmatpush2.msra.mxu0 0.0
  %3996 = vmatprep.subr.mxu0 0.0
  %3997 = vmatpush2.msra.mxu0 0.0
  %3998 = vmatprep.subr.mxu0 0.0
  %3999 = vmatpush2.msra.mxu0 0.0
  %4000 = vmatprep.subr.mxu0 0.0
  %4001 = vmatpush2.msra.mxu0 0.0
  %4002 = vmatprep.subr.mxu0 0.0
  %4003 = vmatpush2.msra.mxu0 0.0
  %4004 = vmatprep.subr.mxu0 0.0
  %4005 = vmatpush2.msra.mxu0 0.0
  %4006 = vmatprep.subr.mxu0 0.0
  %4007 = vmatpush2.msra.mxu0 0.0
  %4008 = vmatprep.subr.mxu0 0.0
  %4009 = vmatpush2.msra.mxu0 0.0
  %4010 = vmatprep.subr.mxu0 0.0
  %4011 = vmatpush2.msra.mxu0 0.0
  %4012 = vmatprep.subr.mxu0 0.0
  %4013 = vmatpush2.msra.mxu0 0.0
  %4014 = vmatprep.mubr.f32.mxu0 0.0
  %4015 = vmatmul.mubr.f32.gmra.mxu0 %v3949
  %v4016 = vpop.f32.mrf.mxu0
  %v4017 = vadd.f32 %v244, %v4016
  %v4018 = vpop.f32.mrf.mxu0
  %v4019 = vadd.f32 %v248, %v4018
  %4020 = vdwg.mxu0
  %4021 = vmatprep.subr.mxu0 0.0
  %4022 = vmatpush1.msra.mxu0 %v144
  %4023 = vmatprep.subr.mxu0 0.0
  %4024 = vmatpush1.msra.mxu0 %v141
  %4025 = vmatprep.subr.mxu0 0.0
  %4026 = vmatpush1.msra.mxu0 %v138
  %4027 = vmatprep.subr.mxu0 0.0
  %4028 = vmatpush1.msra.mxu0 %v135
  %4029 = vmatprep.subr.mxu0 0.0
  %4030 = vmatpush1.msra.mxu0 %v132
  %4031 = vmatprep.subr.mxu0 0.0
  %4032 = vmatpush1.msra.mxu0 %v129
  %4033 = vmatprep.subr.mxu0 0.0
  %4034 = vmatpush1.msra.mxu0 %v126
  %4035 = vmatprep.subr.mxu0 0.0
  %4036 = vmatpush1.msra.mxu0 %v123
  %4037 = vmatprep.subr.mxu0 0.0
  %4038 = vmatpush1.msra.mxu0 %v120
  %4039 = vmatprep.subr.mxu0 0.0
  %4040 = vmatpush1.msra.mxu0 %v117
  %4041 = vmatprep.subr.mxu0 0.0
  %4042 = vmatpush1.msra.mxu0 %v114
  %4043 = vmatprep.subr.mxu0 0.0
  %4044 = vmatpush1.msra.mxu0 %v111
  %4045 = vmatprep.subr.mxu0 0.0
  %4046 = vmatpush1.msra.mxu0 %v108
  %4047 = vmatprep.subr.mxu0 0.0
  %4048 = vmatpush1.msra.mxu0 %v105
  %4049 = vmatprep.subr.mxu0 0.0
  %4050 = vmatpush1.msra.mxu0 %v102
  %4051 = vmatprep.subr.mxu0 0.0
  %4052 = vmatpush1.msra.mxu0 %v99
  %4053 = vmatprep.subr.mxu0 0.0
  %4054 = vmatpush2.msra.mxu0 0.0
  %4055 = vmatprep.subr.mxu0 0.0
  %4056 = vmatpush2.msra.mxu0 0.0
  %4057 = vmatprep.subr.mxu0 0.0
  %4058 = vmatpush2.msra.mxu0 0.0
  %4059 = vmatprep.subr.mxu0 0.0
  %4060 = vmatpush2.msra.mxu0 0.0
  %4061 = vmatprep.subr.mxu0 0.0
  %4062 = vmatpush2.msra.mxu0 0.0
  %4063 = vmatprep.subr.mxu0 0.0
  %4064 = vmatpush2.msra.mxu0 0.0
  %4065 = vmatprep.subr.mxu0 0.0
  %4066 = vmatpush2.msra.mxu0 0.0
  %4067 = vmatprep.subr.mxu0 0.0
  %4068 = vmatpush2.msra.mxu0 0.0
  %4069 = vmatprep.subr.mxu0 0.0
  %4070 = vmatpush2.msra.mxu0 0.0
  %4071 = vmatprep.subr.mxu0 0.0
  %4072 = vmatpush2.msra.mxu0 0.0
  %4073 = vmatprep.subr.mxu0 0.0
  %4074 = vmatpush2.msra.mxu0 0.0
  %4075 = vmatprep.subr.mxu0 0.0
  %4076 = vmatpush2.msra.mxu0 0.0
  %4077 = vmatprep.subr.mxu0 0.0
  %4078 = vmatpush2.msra.mxu0 0.0
  %4079 = vmatprep.subr.mxu0 0.0
  %4080 = vmatpush2.msra.mxu0 0.0
  %4081 = vmatprep.subr.mxu0 0.0
  %4082 = vmatpush2.msra.mxu0 0.0
  %4083 = vmatprep.subr.mxu0 0.0
  %4084 = vmatpush2.msra.mxu0 0.0
  %4085 = vmatprep.mubr.f32.mxu0 0.0
  %4086 = vmatmul.mubr.f32.gmra.mxu0 %v3949
  %v4087 = vpop.f32.mrf.mxu0
  %v4088 = vadd.f32 %v252, %v4087
  %v4089 = vpop.f32.mrf.mxu0
  %4090 = vdwg.mxu0
  %4091 = vmatprep.subr.mxu0 %v191
  %4092 = vmatpush1.msra.mxu0 %v190
  %4093 = vmatprep.subr.mxu0 %v188
  %4094 = vmatpush1.msra.mxu0 %v187
  %4095 = vmatprep.subr.mxu0 %v185
  %4096 = vmatpush1.msra.mxu0 %v184
  %4097 = vmatprep.subr.mxu0 %v182
  %4098 = vmatpush1.msra.mxu0 %v181
  %4099 = vmatprep.subr.mxu0 %v179
  %4100 = vmatpush1.msra.mxu0 %v178
  %4101 = vmatprep.subr.mxu0 %v176
  %4102 = vmatpush1.msra.mxu0 %v175
  %4103 = vmatprep.subr.mxu0 %v173
  %4104 = vmatpush1.msra.mxu0 %v172
  %4105 = vmatprep.subr.mxu0 %v170
  %4106 = vmatpush1.msra.mxu0 %v169
  %4107 = vmatprep.subr.mxu0 %v167
  %4108 = vmatpush1.msra.mxu0 %v166
  %4109 = vmatprep.subr.mxu0 %v164
  %4110 = vmatpush1.msra.mxu0 %v163
  %4111 = vmatprep.subr.mxu0 %v161
  %4112 = vmatpush1.msra.mxu0 %v160
  %4113 = vmatprep.subr.mxu0 %v158
  %4114 = vmatpush1.msra.mxu0 %v157
  %4115 = vmatprep.subr.mxu0 %v155
  %4116 = vmatpush1.msra.mxu0 %v154
  %4117 = vmatprep.subr.mxu0 %v152
  %4118 = vmatpush1.msra.mxu0 %v151
  %4119 = vmatprep.subr.mxu0 %v149
  %4120 = vmatpush1.msra.mxu0 %v148
  %4121 = vmatprep.subr.mxu0 %v146
  %4122 = vmatpush1.msra.mxu0 %v145
  %4123 = vmatprep.subr.mxu0 0.0
  %4124 = vmatpush2.msra.mxu0 0.0
  %4125 = vmatprep.subr.mxu0 0.0
  %4126 = vmatpush2.msra.mxu0 0.0
  %4127 = vmatprep.subr.mxu0 0.0
  %4128 = vmatpush2.msra.mxu0 0.0
  %4129 = vmatprep.subr.mxu0 0.0
  %4130 = vmatpush2.msra.mxu0 0.0
  %4131 = vmatprep.subr.mxu0 0.0
  %4132 = vmatpush2.msra.mxu0 0.0
  %4133 = vmatprep.subr.mxu0 0.0
  %4134 = vmatpush2.msra.mxu0 0.0
  %4135 = vmatprep.subr.mxu0 0.0
  %4136 = vmatpush2.msra.mxu0 0.0
  %4137 = vmatprep.subr.mxu0 0.0
  %4138 = vmatpush2.msra.mxu0 0.0
  %4139 = vmatprep.subr.mxu0 0.0
  %4140 = vmatpush2.msra.mxu0 0.0
  %4141 = vmatprep.subr.mxu0 0.0
  %4142 = vmatpush2.msra.mxu0 0.0
  %4143 = vmatprep.subr.mxu0 0.0
  %4144 = vmatpush2.msra.mxu0 0.0
  %4145 = vmatprep.subr.mxu0 0.0
  %4146 = vmatpush2.msra.mxu0 0.0
  %4147 = vmatprep.subr.mxu0 0.0
  %4148 = vmatpush2.msra.mxu0 0.0
  %4149 = vmatprep.subr.mxu0 0.0
  %4150 = vmatpush2.msra.mxu0 0.0
  %4151 = vmatprep.subr.mxu0 0.0
  %4152 = vmatpush2.msra.mxu0 0.0
  %4153 = vmatprep.subr.mxu0 0.0
  %4154 = vmatpush2.msra.mxu0 0.0
  %4155 = vmatprep.mubr.f32.mxu0 0.0
  %4156 = vmatmul.mubr.f32.gmra.mxu0 %v3758
  %v4157 = vpop.f32.mrf.mxu0
  %v4158 = vadd.f32 0.0, %v4157
  %v4159 = vpop.f32.mrf.mxu0
  %v4160 = vadd.f32 0.0, %v4159
  %4161 = vdwg.mxu0
  %4162 = vmatprep.subr.mxu0 0.0
  %4163 = vmatpush1.msra.mxu0 %v192
  %4164 = vmatprep.subr.mxu0 0.0
  %4165 = vmatpush1.msra.mxu0 %v189
  %4166 = vmatprep.subr.mxu0 0.0
  %4167 = vmatpush1.msra.mxu0 %v186
  %4168 = vmatprep.subr.mxu0 0.0
  %4169 = vmatpush1.msra.mxu0 %v183
  %4170 = vmatprep.subr.mxu0 0.0
  %4171 = vmatpush1.msra.mxu0 %v180
  %4172 = vmatprep.subr.mxu0 0.0
  %4173 = vmatpush1.msra.mxu0 %v177
  %4174 = vmatprep.subr.mxu0 0.0
  %4175 = vmatpush1.msra.mxu0 %v174
  %4176 = vmatprep.subr.mxu0 0.0
  %4177 = vmatpush1.msra.mxu0 %v171
  %4178 = vmatprep.subr.mxu0 0.0
  %4179 = vmatpush1.msra.mxu0 %v168
  %4180 = vmatprep.subr.mxu0 0.0
  %4181 = vmatpush1.msra.mxu0 %v165
  %4182 = vmatprep.subr.mxu0 0.0
  %4183 = vmatpush1.msra.mxu0 %v162
  %4184 = vmatprep.subr.mxu0 0.0
  %4185 = vmatpush1.msra.mxu0 %v159
  %4186 = vmatprep.subr.mxu0 0.0
  %4187 = vmatpush1.msra.mxu0 %v156
  %4188 = vmatprep.subr.mxu0 0.0
  %4189 = vmatpush1.msra.mxu0 %v153
  %4190 = vmatprep.subr.mxu0 0.0
  %4191 = vmatpush1.msra.mxu0 %v150
  %4192 = vmatprep.subr.mxu0 0.0
  %4193 = vmatpush1.msra.mxu0 %v147
  %4194 = vmatprep.subr.mxu0 0.0
  %4195 = vmatpush2.msra.mxu0 0.0
  %4196 = vmatprep.subr.mxu0 0.0
  %4197 = vmatpush2.msra.mxu0 0.0
  %4198 = vmatprep.subr.mxu0 0.0
  %4199 = vmatpush2.msra.mxu0 0.0
  %4200 = vmatprep.subr.mxu0 0.0
  %4201 = vmatpush2.msra.mxu0 0.0
  %4202 = vmatprep.subr.mxu0 0.0
  %4203 = vmatpush2.msra.mxu0 0.0
  %4204 = vmatprep.subr.mxu0 0.0
  %4205 = vmatpush2.msra.mxu0 0.0
  %4206 = vmatprep.subr.mxu0 0.0
  %4207 = vmatpush2.msra.mxu0 0.0
  %4208 = vmatprep.subr.mxu0 0.0
  %4209 = vmatpush2.msra.mxu0 0.0
  %4210 = vmatprep.subr.mxu0 0.0
  %4211 = vmatpush2.msra.mxu0 0.0
  %4212 = vmatprep.subr.mxu0 0.0
  %4213 = vmatpush2.msra.mxu0 0.0
  %4214 = vmatprep.subr.mxu0 0.0
  %4215 = vmatpush2.msra.mxu0 0.0
  %4216 = vmatprep.subr.mxu0 0.0
  %4217 = vmatpush2.msra.mxu0 0.0
  %4218 = vmatprep.subr.mxu0 0.0
  %4219 = vmatpush2.msra.mxu0 0.0
  %4220 = vmatprep.subr.mxu0 0.0
  %4221 = vmatpush2.msra.mxu0 0.0
  %4222 = vmatprep.subr.mxu0 0.0
  %4223 = vmatpush2.msra.mxu0 0.0
  %4224 = vmatprep.subr.mxu0 0.0
  %4225 = vmatpush2.msra.mxu0 0.0
  %4226 = vmatprep.mubr.f32.mxu0 0.0
  %4227 = vmatmul.mubr.f32.gmra.mxu0 %v3758
  %v4228 = vpop.f32.mrf.mxu0
  %v4229 = vadd.f32 0.0, %v4228
  %v4230 = vpop.f32.mrf.mxu0
  %4231 = vdwg.mxu0
  %v4232 = vadd.f32 %v4017, %v4158
  %v4233 = vxor.u32 %v4232, 2147483648
  %v4234 = vmul.f32 %v4233, 1.442695
  %v4235 = vpow.pop %v4234
  %v4236 = vadd.f32 %v4235, 1.0
  %v4237 = vrcp.pop %v4236
  %v4238 = vmul.f32 1.0, %v4237
  %v4239 = vadd.f32 %v4019, %v4160
  %v4240 = vxor.u32 %v4239, 2147483648
  %v4241 = vmul.f32 %v4240, 1.442695
  %v4242 = vpow.pop %v4241
  %v4243 = vadd.f32 %v4242, 1.0
  %v4244 = vrcp.pop %v4243
  %v4245 = vmul.f32 1.0, %v4244
  %v4246 = vadd.f32 %v4229, %v237
  %v4247 = vmul.f32 %v4238, %v4246
  %v4248 = vadd.f32 %v4088, %v4247
  %v4249 = vtanh.pop %v4248
  %v4250 = vsub.f32 1.0, %v4245
  %v4251 = vmul.f32 %v4250, %v4249
  %v4252 = vmul.f32 %v4245, %v3758
  %v4253 = vadd.f32 %v4251, %v4252
  %s4254 = scalar_lea.vmem %s0, 40
  %v4255 = vld [vmem:[%s4254] sm:$0xff]
  %4256 = vmatprep.subr.mxu0 0.0
  %4257 = vmatpush1.msra.mxu0 %v208
  %4258 = vmatprep.subr.mxu0 0.0
  %4259 = vmatpush1.msra.mxu0 %v207
  %4260 = vmatprep.subr.mxu0 0.0
  %4261 = vmatpush1.msra.mxu0 %v206
  %4262 = vmatprep.subr.mxu0 0.0
  %4263 = vmatpush1.msra.mxu0 %v205
  %4264 = vmatprep.subr.mxu0 0.0
  %4265 = vmatpush1.msra.mxu0 %v204
  %4266 = vmatprep.subr.mxu0 0.0
  %4267 = vmatpush1.msra.mxu0 %v203
  %4268 = vmatprep.subr.mxu0 0.0
  %4269 = vmatpush1.msra.mxu0 %v202
  %4270 = vmatprep.subr.mxu0 0.0
  %4271 = vmatpush1.msra.mxu0 %v201
  %4272 = vmatprep.subr.mxu0 0.0
  %4273 = vmatpush1.msra.mxu0 %v200
  %4274 = vmatprep.subr.mxu0 0.0
  %4275 = vmatpush1.msra.mxu0 %v199
  %4276 = vmatprep.subr.mxu0 0.0
  %4277 = vmatpush1.msra.mxu0 %v198
  %4278 = vmatprep.subr.mxu0 0.0
  %4279 = vmatpush1.msra.mxu0 %v197
  %4280 = vmatprep.subr.mxu0 0.0
  %4281 = vmatpush1.msra.mxu0 %v196
  %4282 = vmatprep.subr.mxu0 0.0
  %4283 = vmatpush1.msra.mxu0 %v195
  %4284 = vmatprep.subr.mxu0 0.0
  %4285 = vmatpush1.msra.mxu0 %v194
  %4286 = vmatprep.subr.mxu0 0.0
  %4287 = vmatpush1.msra.mxu0 %v193
  %4288 = vmatprep.subr.mxu0 0.0
  %4289 = vmatpush2.msra.mxu0 0.0
  %4290 = vmatprep.subr.mxu0 0.0
  %4291 = vmatpush2.msra.mxu0 0.0
  %4292 = vmatprep.subr.mxu0 0.0
  %4293 = vmatpush2.msra.mxu0 0.0
  %4294 = vmatprep.subr.mxu0 0.0
  %4295 = vmatpush2.msra.mxu0 0.0
  %4296 = vmatprep.subr.mxu0 0.0
  %4297 = vmatpush2.msra.mxu0 0.0
  %4298 = vmatprep.subr.mxu0 0.0
  %4299 = vmatpush2.msra.mxu0 0.0
  %4300 = vmatprep.subr.mxu0 0.0
  %4301 = vmatpush2.msra.mxu0 0.0
  %4302 = vmatprep.subr.mxu0 0.0
  %4303 = vmatpush2.msra.mxu0 0.0
  %4304 = vmatprep.subr.mxu0 0.0
  %4305 = vmatpush2.msra.mxu0 0.0
  %4306 = vmatprep.subr.mxu0 0.0
  %4307 = vmatpush2.msra.mxu0 0.0
  %4308 = vmatprep.subr.mxu0 0.0
  %4309 = vmatpush2.msra.mxu0 0.0
  %4310 = vmatprep.subr.mxu0 0.0
  %4311 = vmatpush2.msra.mxu0 0.0
  %4312 = vmatprep.subr.mxu0 0.0
  %4313 = vmatpush2.msra.mxu0 0.0
  %4314 = vmatprep.subr.mxu0 0.0
  %4315 = vmatpush2.msra.mxu0 0.0
  %4316 = vmatprep.subr.mxu0 0.0
  %4317 = vmatpush2.msra.mxu0 0.0
  %4318 = vmatprep.subr.mxu0 0.0
  %4319 = vmatpush2.msra.mxu0 0.0
  %4320 = vmatprep.mubr.f32.mxu0 0.0
  %4321 = vmatmul.mubr.f32.gmra.mxu0 %v4253
  %v4322 = vpop.f32.mrf.mxu0
  %v4323 = vadd.f32 0.0, %v4322
  %v4324 = vpop.f32.mrf.mxu0
  %4325 = vdwg.mxu0
  %v4326 = vadd.f32 %v4255, %v4323
  %4327 = vmax.xlane.f32.xlu0 %v4326
  %v4328 = vpop.xlane.xlu0 %4327
  %v4329 = vsub.f32 %v4326, %v4328
  %v4330 = vmul.f32 %v4329, 1.442695
  %v4331 = vpow.pop %v4330
  %4332 = vadd.xlane.f32.xlu0 %v4331
  %v4333 = vpop.xlane.xlu0 %4332
  %v4334 = vrcp.pop %v4333
  %v4335 = vmul.f32 %v4331, %v4334
  %s4336 = scalar_lea.vmem %s15, 40
  %4337 = vst [vmem:[%s4336] sm:$0xff] %v4335
  %4338 = vxpose.xlu0.b32.start [1/16] %v4335, 128
  %4339 = vxpose.xlu0.b32.cont [2/16] 0.0, 128
  %4340 = vxpose.xlu0.b32.cont [3/16] 0.0, 128
  %4341 = vxpose.xlu0.b32.cont [4/16] 0.0, 128
  %4342 = vxpose.xlu0.b32.cont [5/16] 0.0, 128
  %4343 = vxpose.xlu0.b32.cont [6/16] 0.0, 128
  %4344 = vxpose.xlu0.b32.cont [7/16] 0.0, 128
  %4345 = vxpose.xlu0.b32.cont [8/16] 0.0, 128
  %4346 = vxpose.xlu0.b32.cont [9/16] 0.0, 128
  %4347 = vxpose.xlu0.b32.cont [10/16] 0.0, 128
  %4348 = vxpose.xlu0.b32.cont [11/16] 0.0, 128
  %4349 = vxpose.xlu0.b32.cont [12/16] 0.0, 128
  %4350 = vxpose.xlu0.b32.cont [13/16] 0.0, 128
  %4351 = vxpose.xlu0.b32.cont [14/16] 0.0, 128
  %4352 = vxpose.xlu0.b32.cont [15/16] 0.0, 128
  %4353 = vxpose.xlu0.b32.end [16/16] 0.0, 128
  %v4354 = vpop.trf.xlu0
  %v4355 = vpop.trf.xlu0
  %v4356 = vpop.trf.xlu0
  %v4357 = vpop.trf.xlu0
  %v4358 = vpop.trf.xlu0
  %v4359 = vpop.trf.xlu0
  %v4360 = vpop.trf.xlu0
  %v4361 = vpop.trf.xlu0
  %v4362 = vpop.trf.xlu0
  %v4363 = vpop.trf.xlu0
  %v4364 = vpop.trf.xlu0
  %v4365 = vpop.trf.xlu0
  %v4366 = vpop.trf.xlu0
  %v4367 = vpop.trf.xlu0
  %v4368 = vpop.trf.xlu0
  %v4369 = vpop.trf.xlu0
  %v4370 = vlaneseq
  %v4371 = vshrl.u32 %v4370, 7
  %v4372 = vsub.s32 0, %v4371
  %v4373 = vrot.slane %v4354, %v4372
  %4375 = vbcast.lane.b32.xlu0 %v4373, 256
  %v4376 = vpop.permute.xlu0 %4375
  %v4377 = vlaneseq
  %v4378 = vshrl.u32 %v4377, 7
  %v4379 = vsub.s32 1, %v4378
  %v4380 = vrot.slane %v4354, %v4379
  %4382 = vbcast.lane.b32.xlu0 %v4380, 256
  %v4383 = vpop.permute.xlu0 %4382
  %v4384 = vlaneseq
  %v4385 = vshrl.u32 %v4384, 7
  %v4386 = vsub.s32 2, %v4385
  %v4387 = vrot.slane %v4354, %v4386
  %4389 = vbcast.lane.b32.xlu0 %v4387, 256
  %v4390 = vpop.permute.xlu0 %4389
  %v4391 = vlaneseq
  %v4392 = vshrl.u32 %v4391, 7
  %v4393 = vsub.s32 3, %v4392
  %v4394 = vrot.slane %v4354, %v4393
  %4396 = vbcast.lane.b32.xlu0 %v4394, 256
  %v4397 = vpop.permute.xlu0 %4396
  %v4398 = vlaneseq
  %v4399 = vshrl.u32 %v4398, 7
  %v4400 = vsub.s32 4, %v4399
  %v4401 = vrot.slane %v4354, %v4400
  %4403 = vbcast.lane.b32.xlu0 %v4401, 256
  %v4404 = vpop.permute.xlu0 %4403
  %v4405 = vlaneseq
  %v4406 = vshrl.u32 %v4405, 7
  %v4407 = vsub.s32 5, %v4406
  %v4408 = vrot.slane %v4354, %v4407
  %4410 = vbcast.lane.b32.xlu0 %v4408, 256
  %v4411 = vpop.permute.xlu0 %4410
  %v4412 = vlaneseq
  %v4413 = vshrl.u32 %v4412, 7
  %v4414 = vsub.s32 6, %v4413
  %v4415 = vrot.slane %v4354, %v4414
  %4417 = vbcast.lane.b32.xlu0 %v4415, 256
  %v4418 = vpop.permute.xlu0 %4417
  %v4419 = vlaneseq
  %v4420 = vshrl.u32 %v4419, 7
  %v4421 = vsub.s32 7, %v4420
  %v4422 = vrot.slane %v4354, %v4421
  %4424 = vbcast.lane.b32.xlu0 %v4422, 256
  %v4425 = vpop.permute.xlu0 %4424
  %v4426 = vmul.f32 %v4376, %v1744
  %v4427 = vmul.f32 %v4383, %v1749
  %v4428 = vmul.f32 %v4390, %v1754
  %v4429 = vmul.f32 %v4397, %v1759
  %v4430 = vmul.f32 %v4404, %v1764
  %v4431 = vmul.f32 %v4411, %v1769
  %v4432 = vmul.f32 %v4418, %v1774
  %v4433 = vmul.f32 %v4425, %v1779
  %v4434 = vadd.f32 %v4426, %v4427
  %v4435 = vadd.f32 %v4434, %v4428
  %v4436 = vadd.f32 %v4435, %v4429
  %v4437 = vadd.f32 %v4436, %v4430
  %v4438 = vadd.f32 %v4437, %v4431
  %v4439 = vadd.f32 %v4438, %v4432
  %v4440 = vadd.f32 %v4439, %v4433
  %s4441 = scalar_lea.vmem %s1, 40
  %v4442 = vld [vmem:[%s4441] sm:$0xff]
  %v4443 = vadd.f32 %v4442, %v4440
  %v4444 = vmax.f32 %v4443, 0.0
  %4445 = vmatprep.subr.mxu0 %v143
  %4446 = vmatpush1.msra.mxu0 %v142
  %4447 = vmatprep.subr.mxu0 %v140
  %4448 = vmatpush1.msra.mxu0 %v139
  %4449 = vmatprep.subr.mxu0 %v137
  %4450 = vmatpush1.msra.mxu0 %v136
  %4451 = vmatprep.subr.mxu0 %v134
  %4452 = vmatpush1.msra.mxu0 %v133
  %4453 = vmatprep.subr.mxu0 %v131
  %4454 = vmatpush1.msra.mxu0 %v130
  %4455 = vmatprep.subr.mxu0 %v128
  %4456 = vmatpush1.msra.mxu0 %v127
  %4457 = vmatprep.subr.mxu0 %v125
  %4458 = vmatpush1.msra.mxu0 %v124
  %4459 = vmatprep.subr.mxu0 %v122
  %4460 = vmatpush1.msra.mxu0 %v121
  %4461 = vmatprep.subr.mxu0 %v119
  %4462 = vmatpush1.msra.mxu0 %v118
  %4463 = vmatprep.subr.mxu0 %v116
  %4464 = vmatpush1.msra.mxu0 %v115
  %4465 = vmatprep.subr.mxu0 %v113
  %4466 = vmatpush1.msra.mxu0 %v112
  %4467 = vmatprep.subr.mxu0 %v110
  %4468 = vmatpush1.msra.mxu0 %v109
  %4469 = vmatprep.subr.mxu0 %v107
  %4470 = vmatpush1.msra.mxu0 %v106
  %4471 = vmatprep.subr.mxu0 %v104
  %4472 = vmatpush1.msra.mxu0 %v103
  %4473 = vmatprep.subr.mxu0 %v101
  %4474 = vmatpush1.msra.mxu0 %v100
  %4475 = vmatprep.subr.mxu0 %v98
  %4476 = vmatpush1.msra.mxu0 %v97
  %4477 = vmatprep.subr.mxu0 0.0
  %4478 = vmatpush2.msra.mxu0 0.0
  %4479 = vmatprep.subr.mxu0 0.0
  %4480 = vmatpush2.msra.mxu0 0.0
  %4481 = vmatprep.subr.mxu0 0.0
  %4482 = vmatpush2.msra.mxu0 0.0
  %4483 = vmatprep.subr.mxu0 0.0
  %4484 = vmatpush2.msra.mxu0 0.0
  %4485 = vmatprep.subr.mxu0 0.0
  %4486 = vmatpush2.msra.mxu0 0.0
  %4487 = vmatprep.subr.mxu0 0.0
  %4488 = vmatpush2.msra.mxu0 0.0
  %4489 = vmatprep.subr.mxu0 0.0
  %4490 = vmatpush2.msra.mxu0 0.0
  %4491 = vmatprep.subr.mxu0 0.0
  %4492 = vmatpush2.msra.mxu0 0.0
  %4493 = vmatprep.subr.mxu0 0.0
  %4494 = vmatpush2.msra.mxu0 0.0
  %4495 = vmatprep.subr.mxu0 0.0
  %4496 = vmatpush2.msra.mxu0 0.0
  %4497 = vmatprep.subr.mxu0 0.0
  %4498 = vmatpush2.msra.mxu0 0.0
  %4499 = vmatprep.subr.mxu0 0.0
  %4500 = vmatpush2.msra.mxu0 0.0
  %4501 = vmatprep.subr.mxu0 0.0
  %4502 = vmatpush2.msra.mxu0 0.0
  %4503 = vmatprep.subr.mxu0 0.0
  %4504 = vmatpush2.msra.mxu0 0.0
  %4505 = vmatprep.subr.mxu0 0.0
  %4506 = vmatpush2.msra.mxu0 0.0
  %4507 = vmatprep.subr.mxu0 0.0
  %4508 = vmatpush2.msra.mxu0 0.0
  %4509 = vmatprep.mubr.f32.mxu0 0.0
  %4510 = vmatmul.mubr.f32.gmra.mxu0 %v4444
  %v4511 = vpop.f32.mrf.mxu0
  %v4512 = vadd.f32 %v244, %v4511
  %v4513 = vpop.f32.mrf.mxu0
  %v4514 = vadd.f32 %v248, %v4513
  %4515 = vdwg.mxu0
  %4516 = vmatprep.subr.mxu0 0.0
  %4517 = vmatpush1.msra.mxu0 %v144
  %4518 = vmatprep.subr.mxu0 0.0
  %4519 = vmatpush1.msra.mxu0 %v141
  %4520 = vmatprep.subr.mxu0 0.0
  %4521 = vmatpush1.msra.mxu0 %v138
  %4522 = vmatprep.subr.mxu0 0.0
  %4523 = vmatpush1.msra.mxu0 %v135
  %4524 = vmatprep.subr.mxu0 0.0
  %4525 = vmatpush1.msra.mxu0 %v132
  %4526 = vmatprep.subr.mxu0 0.0
  %4527 = vmatpush1.msra.mxu0 %v129
  %4528 = vmatprep.subr.mxu0 0.0
  %4529 = vmatpush1.msra.mxu0 %v126
  %4530 = vmatprep.subr.mxu0 0.0
  %4531 = vmatpush1.msra.mxu0 %v123
  %4532 = vmatprep.subr.mxu0 0.0
  %4533 = vmatpush1.msra.mxu0 %v120
  %4534 = vmatprep.subr.mxu0 0.0
  %4535 = vmatpush1.msra.mxu0 %v117
  %4536 = vmatprep.subr.mxu0 0.0
  %4537 = vmatpush1.msra.mxu0 %v114
  %4538 = vmatprep.subr.mxu0 0.0
  %4539 = vmatpush1.msra.mxu0 %v111
  %4540 = vmatprep.subr.mxu0 0.0
  %4541 = vmatpush1.msra.mxu0 %v108
  %4542 = vmatprep.subr.mxu0 0.0
  %4543 = vmatpush1.msra.mxu0 %v105
  %4544 = vmatprep.subr.mxu0 0.0
  %4545 = vmatpush1.msra.mxu0 %v102
  %4546 = vmatprep.subr.mxu0 0.0
  %4547 = vmatpush1.msra.mxu0 %v99
  %4548 = vmatprep.subr.mxu0 0.0
  %4549 = vmatpush2.msra.mxu0 0.0
  %4550 = vmatprep.subr.mxu0 0.0
  %4551 = vmatpush2.msra.mxu0 0.0
  %4552 = vmatprep.subr.mxu0 0.0
  %4553 = vmatpush2.msra.mxu0 0.0
  %4554 = vmatprep.subr.mxu0 0.0
  %4555 = vmatpush2.msra.mxu0 0.0
  %4556 = vmatprep.subr.mxu0 0.0
  %4557 = vmatpush2.msra.mxu0 0.0
  %4558 = vmatprep.subr.mxu0 0.0
  %4559 = vmatpush2.msra.mxu0 0.0
  %4560 = vmatprep.subr.mxu0 0.0
  %4561 = vmatpush2.msra.mxu0 0.0
  %4562 = vmatprep.subr.mxu0 0.0
  %4563 = vmatpush2.msra.mxu0 0.0
  %4564 = vmatprep.subr.mxu0 0.0
  %4565 = vmatpush2.msra.mxu0 0.0
  %4566 = vmatprep.subr.mxu0 0.0
  %4567 = vmatpush2.msra.mxu0 0.0
  %4568 = vmatprep.subr.mxu0 0.0
  %4569 = vmatpush2.msra.mxu0 0.0
  %4570 = vmatprep.subr.mxu0 0.0
  %4571 = vmatpush2.msra.mxu0 0.0
  %4572 = vmatprep.subr.mxu0 0.0
  %4573 = vmatpush2.msra.mxu0 0.0
  %4574 = vmatprep.subr.mxu0 0.0
  %4575 = vmatpush2.msra.mxu0 0.0
  %4576 = vmatprep.subr.mxu0 0.0
  %4577 = vmatpush2.msra.mxu0 0.0
  %4578 = vmatprep.subr.mxu0 0.0
  %4579 = vmatpush2.msra.mxu0 0.0
  %4580 = vmatprep.mubr.f32.mxu0 0.0
  %4581 = vmatmul.mubr.f32.gmra.mxu0 %v4444
  %v4582 = vpop.f32.mrf.mxu0
  %v4583 = vadd.f32 %v252, %v4582
  %v4584 = vpop.f32.mrf.mxu0
  %4585 = vdwg.mxu0
  %4586 = vmatprep.subr.mxu0 %v191
  %4587 = vmatpush1.msra.mxu0 %v190
  %4588 = vmatprep.subr.mxu0 %v188
  %4589 = vmatpush1.msra.mxu0 %v187
  %4590 = vmatprep.subr.mxu0 %v185
  %4591 = vmatpush1.msra.mxu0 %v184
  %4592 = vmatprep.subr.mxu0 %v182
  %4593 = vmatpush1.msra.mxu0 %v181
  %4594 = vmatprep.subr.mxu0 %v179
  %4595 = vmatpush1.msra.mxu0 %v178
  %4596 = vmatprep.subr.mxu0 %v176
  %4597 = vmatpush1.msra.mxu0 %v175
  %4598 = vmatprep.subr.mxu0 %v173
  %4599 = vmatpush1.msra.mxu0 %v172
  %4600 = vmatprep.subr.mxu0 %v170
  %4601 = vmatpush1.msra.mxu0 %v169
  %4602 = vmatprep.subr.mxu0 %v167
  %4603 = vmatpush1.msra.mxu0 %v166
  %4604 = vmatprep.subr.mxu0 %v164
  %4605 = vmatpush1.msra.mxu0 %v163
  %4606 = vmatprep.subr.mxu0 %v161
  %4607 = vmatpush1.msra.mxu0 %v160
  %4608 = vmatprep.subr.mxu0 %v158
  %4609 = vmatpush1.msra.mxu0 %v157
  %4610 = vmatprep.subr.mxu0 %v155
  %4611 = vmatpush1.msra.mxu0 %v154
  %4612 = vmatprep.subr.mxu0 %v152
  %4613 = vmatpush1.msra.mxu0 %v151
  %4614 = vmatprep.subr.mxu0 %v149
  %4615 = vmatpush1.msra.mxu0 %v148
  %4616 = vmatprep.subr.mxu0 %v146
  %4617 = vmatpush1.msra.mxu0 %v145
  %4618 = vmatprep.subr.mxu0 0.0
  %4619 = vmatpush2.msra.mxu0 0.0
  %4620 = vmatprep.subr.mxu0 0.0
  %4621 = vmatpush2.msra.mxu0 0.0
  %4622 = vmatprep.subr.mxu0 0.0
  %4623 = vmatpush2.msra.mxu0 0.0
  %4624 = vmatprep.subr.mxu0 0.0
  %4625 = vmatpush2.msra.mxu0 0.0
  %4626 = vmatprep.subr.mxu0 0.0
  %4627 = vmatpush2.msra.mxu0 0.0
  %4628 = vmatprep.subr.mxu0 0.0
  %4629 = vmatpush2.msra.mxu0 0.0
  %4630 = vmatprep.subr.mxu0 0.0
  %4631 = vmatpush2.msra.mxu0 0.0
  %4632 = vmatprep.subr.mxu0 0.0
  %4633 = vmatpush2.msra.mxu0 0.0
  %4634 = vmatprep.subr.mxu0 0.0
  %4635 = vmatpush2.msra.mxu0 0.0
  %4636 = vmatprep.subr.mxu0 0.0
  %4637 = vmatpush2.msra.mxu0 0.0
  %4638 = vmatprep.subr.mxu0 0.0
  %4639 = vmatpush2.msra.mxu0 0.0
  %4640 = vmatprep.subr.mxu0 0.0
  %4641 = vmatpush2.msra.mxu0 0.0
  %4642 = vmatprep.subr.mxu0 0.0
  %4643 = vmatpush2.msra.mxu0 0.0
  %4644 = vmatprep.subr.mxu0 0.0
  %4645 = vmatpush2.msra.mxu0 0.0
  %4646 = vmatprep.subr.mxu0 0.0
  %4647 = vmatpush2.msra.mxu0 0.0
  %4648 = vmatprep.subr.mxu0 0.0
  %4649 = vmatpush2.msra.mxu0 0.0
  %4650 = vmatprep.mubr.f32.mxu0 0.0
  %4651 = vmatmul.mubr.f32.gmra.mxu0 %v4253
  %v4652 = vpop.f32.mrf.mxu0
  %v4653 = vadd.f32 0.0, %v4652
  %v4654 = vpop.f32.mrf.mxu0
  %v4655 = vadd.f32 0.0, %v4654
  %4656 = vdwg.mxu0
  %4657 = vmatprep.subr.mxu0 0.0
  %4658 = vmatpush1.msra.mxu0 %v192
  %4659 = vmatprep.subr.mxu0 0.0
  %4660 = vmatpush1.msra.mxu0 %v189
  %4661 = vmatprep.subr.mxu0 0.0
  %4662 = vmatpush1.msra.mxu0 %v186
  %4663 = vmatprep.subr.mxu0 0.0
  %4664 = vmatpush1.msra.mxu0 %v183
  %4665 = vmatprep.subr.mxu0 0.0
  %4666 = vmatpush1.msra.mxu0 %v180
  %4667 = vmatprep.subr.mxu0 0.0
  %4668 = vmatpush1.msra.mxu0 %v177
  %4669 = vmatprep.subr.mxu0 0.0
  %4670 = vmatpush1.msra.mxu0 %v174
  %4671 = vmatprep.subr.mxu0 0.0
  %4672 = vmatpush1.msra.mxu0 %v171
  %4673 = vmatprep.subr.mxu0 0.0
  %4674 = vmatpush1.msra.mxu0 %v168
  %4675 = vmatprep.subr.mxu0 0.0
  %4676 = vmatpush1.msra.mxu0 %v165
  %4677 = vmatprep.subr.mxu0 0.0
  %4678 = vmatpush1.msra.mxu0 %v162
  %4679 = vmatprep.subr.mxu0 0.0
  %4680 = vmatpush1.msra.mxu0 %v159
  %4681 = vmatprep.subr.mxu0 0.0
  %4682 = vmatpush1.msra.mxu0 %v156
  %4683 = vmatprep.subr.mxu0 0.0
  %4684 = vmatpush1.msra.mxu0 %v153
  %4685 = vmatprep.subr.mxu0 0.0
  %4686 = vmatpush1.msra.mxu0 %v150
  %4687 = vmatprep.subr.mxu0 0.0
  %4688 = vmatpush1.msra.mxu0 %v147
  %4689 = vmatprep.subr.mxu0 0.0
  %4690 = vmatpush2.msra.mxu0 0.0
  %4691 = vmatprep.subr.mxu0 0.0
  %4692 = vmatpush2.msra.mxu0 0.0
  %4693 = vmatprep.subr.mxu0 0.0
  %4694 = vmatpush2.msra.mxu0 0.0
  %4695 = vmatprep.subr.mxu0 0.0
  %4696 = vmatpush2.msra.mxu0 0.0
  %4697 = vmatprep.subr.mxu0 0.0
  %4698 = vmatpush2.msra.mxu0 0.0
  %4699 = vmatprep.subr.mxu0 0.0
  %4700 = vmatpush2.msra.mxu0 0.0
  %4701 = vmatprep.subr.mxu0 0.0
  %4702 = vmatpush2.msra.mxu0 0.0
  %4703 = vmatprep.subr.mxu0 0.0
  %4704 = vmatpush2.msra.mxu0 0.0
  %4705 = vmatprep.subr.mxu0 0.0
  %4706 = vmatpush2.msra.mxu0 0.0
  %4707 = vmatprep.subr.mxu0 0.0
  %4708 = vmatpush2.msra.mxu0 0.0
  %4709 = vmatprep.subr.mxu0 0.0
  %4710 = vmatpush2.msra.mxu0 0.0
  %4711 = vmatprep.subr.mxu0 0.0
  %4712 = vmatpush2.msra.mxu0 0.0
  %4713 = vmatprep.subr.mxu0 0.0
  %4714 = vmatpush2.msra.mxu0 0.0
  %4715 = vmatprep.subr.mxu0 0.0
  %4716 = vmatpush2.msra.mxu0 0.0
  %4717 = vmatprep.subr.mxu0 0.0
  %4718 = vmatpush2.msra.mxu0 0.0
  %4719 = vmatprep.subr.mxu0 0.0
  %4720 = vmatpush2.msra.mxu0 0.0
  %4721 = vmatprep.mubr.f32.mxu0 0.0
  %4722 = vmatmul.mubr.f32.gmra.mxu0 %v4253
  %v4723 = vpop.f32.mrf.mxu0
  %v4724 = vadd.f32 0.0, %v4723
  %v4725 = vpop.f32.mrf.mxu0
  %4726 = vdwg.mxu0
  %v4727 = vadd.f32 %v4512, %v4653
  %v4728 = vxor.u32 %v4727, 2147483648
  %v4729 = vmul.f32 %v4728, 1.442695
  %v4730 = vpow.pop %v4729
  %v4731 = vadd.f32 %v4730, 1.0
  %v4732 = vrcp.pop %v4731
  %v4733 = vmul.f32 1.0, %v4732
  %v4734 = vadd.f32 %v4514, %v4655
  %v4735 = vxor.u32 %v4734, 2147483648
  %v4736 = vmul.f32 %v4735, 1.442695
  %v4737 = vpow.pop %v4736
  %v4738 = vadd.f32 %v4737, 1.0
  %v4739 = vrcp.pop %v4738
  %v4740 = vmul.f32 1.0, %v4739
  %v4741 = vadd.f32 %v4724, %v237
  %v4742 = vmul.f32 %v4733, %v4741
  %v4743 = vadd.f32 %v4583, %v4742
  %v4744 = vtanh.pop %v4743
  %v4745 = vsub.f32 1.0, %v4740
  %v4746 = vmul.f32 %v4745, %v4744
  %v4747 = vmul.f32 %v4740, %v4253
  %v4748 = vadd.f32 %v4746, %v4747
  %v4749 = vld [vmem:[%s12] sm:$0xff]
  %v4750 = vld [vmem:[%s12 + $0x8] sm:$0xff]
  %v4751 = vld [vmem:[%s12 + $0x10] sm:$0xff]
  %v4752 = vld [vmem:[%s12 + $0x18] sm:$0xff]
  %v4753 = vld [vmem:[%s12 + $0x20] sm:$0xff]
  %v4754 = vld [vmem:[%s12 + $0x28] sm:$0xff]
  %v4755 = vld [vmem:[%s12 + $0x30] sm:$0xff]
  %v4756 = vld [vmem:[%s12 + $0x38] sm:$0xff]
  %v4757 = vld [vmem:[%s12 + $0x40] sm:$0xff]
  %v4758 = vld [vmem:[%s12 + $0x48] sm:$0xff]
  %v4759 = vld [vmem:[%s12 + $0x50] sm:$0xff]
  %v4760 = vld [vmem:[%s12 + $0x58] sm:$0xff]
  %v4761 = vld [vmem:[%s12 + $0x60] sm:$0xff]
  %v4762 = vld [vmem:[%s12 + $0x68] sm:$0xff]
  %v4763 = vld [vmem:[%s12 + $0x70] sm:$0xff]
  %v4764 = vld [vmem:[%s12 + $0x78] sm:$0xff]
  %v4765 = vld [vmem:[%s13] sm:$0x1]
  %v4767 = vlaneseq
  %v4768 = vshrl.u32 %v4767, 7
  %v4769 = vsub.s32 0, %v4768
  %v4770 = vrot.slane %v4765, %v4769
  %4772 = vmatprep.subr.mxu0 0.0
  %4773 = vmatpush1.msra.mxu0 %v4764
  %4774 = vmatprep.subr.mxu0 0.0
  %4775 = vmatpush1.msra.mxu0 %v4763
  %4776 = vmatprep.subr.mxu0 0.0
  %4777 = vmatpush1.msra.mxu0 %v4762
  %4778 = vmatprep.subr.mxu0 0.0
  %4779 = vmatpush1.msra.mxu0 %v4761
  %4780 = vmatprep.subr.mxu0 0.0
  %4781 = vmatpush1.msra.mxu0 %v4760
  %4782 = vmatprep.subr.mxu0 0.0
  %4783 = vmatpush1.msra.mxu0 %v4759
  %4784 = vmatprep.subr.mxu0 0.0
  %4785 = vmatpush1.msra.mxu0 %v4758
  %4786 = vmatprep.subr.mxu0 0.0
  %4787 = vmatpush1.msra.mxu0 %v4757
  %4788 = vmatprep.subr.mxu0 0.0
  %4789 = vmatpush1.msra.mxu0 %v4756
  %4790 = vmatprep.subr.mxu0 0.0
  %4791 = vmatpush1.msra.mxu0 %v4755
  %4792 = vmatprep.subr.mxu0 0.0
  %4793 = vmatpush1.msra.mxu0 %v4754
  %4794 = vmatprep.subr.mxu0 0.0
  %4795 = vmatpush1.msra.mxu0 %v4753
  %4796 = vmatprep.subr.mxu0 0.0
  %4797 = vmatpush1.msra.mxu0 %v4752
  %4798 = vmatprep.subr.mxu0 0.0
  %4799 = vmatpush1.msra.mxu0 %v4751
  %4800 = vmatprep.subr.mxu0 0.0
  %4801 = vmatpush1.msra.mxu0 %v4750
  %4802 = vmatprep.subr.mxu0 0.0
  %4803 = vmatpush1.msra.mxu0 %v4749
  %4804 = vmatprep.subr.mxu0 0.0
  %4805 = vmatpush2.msra.mxu0 0.0
  %4806 = vmatprep.subr.mxu0 0.0
  %4807 = vmatpush2.msra.mxu0 0.0
  %4808 = vmatprep.subr.mxu0 0.0
  %4809 = vmatpush2.msra.mxu0 0.0
  %4810 = vmatprep.subr.mxu0 0.0
  %4811 = vmatpush2.msra.mxu0 0.0
  %4812 = vmatprep.subr.mxu0 0.0
  %4813 = vmatpush2.msra.mxu0 0.0
  %4814 = vmatprep.subr.mxu0 0.0
  %4815 = vmatpush2.msra.mxu0 0.0
  %4816 = vmatprep.subr.mxu0 0.0
  %4817 = vmatpush2.msra.mxu0 0.0
  %4818 = vmatprep.subr.mxu0 0.0
  %4819 = vmatpush2.msra.mxu0 0.0
  %4820 = vmatprep.subr.mxu0 0.0
  %4821 = vmatpush2.msra.mxu0 0.0
  %4822 = vmatprep.subr.mxu0 0.0
  %4823 = vmatpush2.msra.mxu0 0.0
  %4824 = vmatprep.subr.mxu0 0.0
  %4825 = vmatpush2.msra.mxu0 0.0
  %4826 = vmatprep.subr.mxu0 0.0
  %4827 = vmatpush2.msra.mxu0 0.0
  %4828 = vmatprep.subr.mxu0 0.0
  %4829 = vmatpush2.msra.mxu0 0.0
  %4830 = vmatprep.subr.mxu0 0.0
  %4831 = vmatpush2.msra.mxu0 0.0
  %4832 = vmatprep.subr.mxu0 0.0
  %4833 = vmatpush2.msra.mxu0 0.0
  %4834 = vmatprep.subr.mxu0 0.0
  %4835 = vmatpush2.msra.mxu0 0.0
  %4836 = vmatprep.mubr.f32.mxu0 0.0
  %4837 = vmatmul.mubr.f32.gmra.mxu0 %v4748
  %v4838 = vpop.f32.mrf.mxu0
  %v4839 = vadd.f32 %v4770, %v4838
  %v4840 = vpop.f32.mrf.mxu0
  %4841 = vdwg.mxu0
  %4842 = vmax.xlane.f32.xlu0 %v4839
  %v4843 = vpop.xlane.xlu0 %4842
  %v4844 = vsub.f32 %v4839, %v4843
  %v4845 = vmul.f32 %v4844, 1.442695
  %v4846 = vpow.pop %v4845
  %4847 = vadd.xlane.f32.xlu0 %v4846
  %v4848 = vpop.xlane.xlu0 %4847
  %v4849 = vlog2.pop %v4848
  %v4850 = vmul.f32 %v4849, 0.6931472
  %v4851 = vadd.f32 %v4850, %v4843
  %v4852 = vsub.f32 %v4839, %v4851
  %4853 = vst [vmem:[%s14] sm:$0xff] %v4852
  // Predicated region
  $region58: #{toy_embed_rnn_sequence.1} parent=0 // pred_check
    _
  $region59: #{toy_embed_rnn_sequence.1} parent=0 // pred_check_branch
    %4855 = sbr.rel (0) target = $region61
  $region60: #{toy_embed_rnn_sequence.1} parent=0 // pred_region
    _
  $region61: #{toy_embed_rnn_sequence.1} parent=0 // pred_fallthru
    _
  // Predicated region
  $region62: #{toy_embed_rnn_sequence.1} parent=0 // pred_check
    _
  $region63: #{toy_embed_rnn_sequence.1} parent=0 // pred_check_branch
    %4857 = sbr.rel (0) target = $region65
  $region64: #{toy_embed_rnn_sequence.1} parent=0 // pred_region
    _
  $region65: #{toy_embed_rnn_sequence.1} parent=0 // pred_fallthru
    _
  // Predicated region
  $region66: #{toy_embed_rnn_sequence.1} parent=0 // pred_check
    _
  $region67: #{toy_embed_rnn_sequence.1} parent=0 // pred_check_branch
    %4859 = sbr.rel (0) target = $region69
  $region68: #{toy_embed_rnn_sequence.1} parent=0 // pred_region
    _
  $region69: #{toy_embed_rnn_sequence.1} parent=0 // pred_fallthru
    _
  // Predicated region
  $region70: #{toy_embed_rnn_sequence.1} parent=0 // pred_check
    _
  $region71: #{toy_embed_rnn_sequence.1} parent=0 // pred_check_branch
    %4861 = sbr.rel (0) target = $region73
  $region72: #{toy_embed_rnn_sequence.1} parent=0 // pred_region
    _
  $region73: #{toy_embed_rnn_sequence.1} parent=0 // pred_fallthru
    _

</llo_original>
